<compile_context>
chip_gen: v5e
topology: v5e:2x2
jax: 0.10.0
libtpu: 0.0.40
codegen_flags: <defaults>
</compile_context>

<pallas_src>
import math
from functools import partial

import jax
import jax.numpy as jnp
from jax import lax
from jax.experimental import pallas as pl
from jax.experimental.pallas import tpu as pltpu

HIDDEN = 128
NUM_HEADS = 4
HEAD_DIM = HIDDEN // NUM_HEADS
FF = 4 * HIDDEN
EPS = 1e-5          # torch.nn.LayerNorm default eps
NEG_INF = -1e30     # finite stand-in for the additive -inf attention mask


def _layernorm(v, gamma, beta):
    mean = jnp.mean(v, axis=-1, keepdims=True)
    c = v - mean
    var = jnp.mean(c * c, axis=-1, keepdims=True)
    return c * lax.rsqrt(var + EPS) * gamma + beta


def _block_kernel(len_ref,                       # scalar-prefetch: (B,) int32 valid lengths (SMEM)
                  x_ref,                         # (Bt*L, H) f32 row tile
                  g1_ref, be1_ref,               # LN1
                  wqkv_ref, bqkv_ref,            # fused QKV: (H,3H) bf16 / (1,3H) f32
                  wo_ref, bo_ref,                # out-proj:  (H,H) bf16 / (1,H) f32
                  g2_ref, be2_ref,               # LN2
                  w1_ref, bm1_ref,               # MLP up:   (H,FF) bf16 / (1,FF) f32
                  w2_ref, bm2_ref,               # MLP down: (FF,H) bf16 / (1,H) f32
                  out_ref,                       # (Bt*L, H) f32
                  heads_ref,                     # VMEM scratch (Bt*L, H) f32
                  *, batch_tile: int, seq_len: int, num_heads: int,
                  head_dim: int, hidden: int):
    b = pl.program_id(0)
    x = x_ref[...]                                                  # (M, H) f32, M = Bt*L

    # ---- LayerNorm 1 (per-row, so batch/seq flattening is exact) ------------
    nx = _layernorm(x, g1_ref[...], be1_ref[...])

    # ---- fused QKV projection: ONE (M,128)@(128,384) bf16 MXU matmul --------
    qkv = jnp.dot(nx.astype(jnp.bfloat16), wqkv_ref[...],
                  preferred_element_type=jnp.float32) + bqkv_ref[...]
    q = qkv[:, 0 * hidden:1 * hidden]            # 1/sqrt(dh) already folded into Wq
    k = qkv[:, 1 * hidden:2 * hidden]
    v = qkv[:, 2 * hidden:3 * hidden]

    # ---- causal mask template, shared by every row ---------------------------
    row = lax.broadcasted_iota(jnp.int32, (seq_len, seq_len), 0)    # query index
    col = lax.broadcasted_iota(jnp.int32, (seq_len, seq_len), 1)    # key index
    causal = col <= row

    # ---- attention: per-row, per-head (tiny L); head outputs land in scratch --
    # (static unroll is fine at these sizes; switch to lax.fori_loop if L grows)
    for r in range(batch_tile):
        length = len_ref[b * batch_tile + r]                        # scalar from SMEM
        valid = causal & (col < length)                             # causal + key padding
        r0 = r * seq_len
        q_r = q[r0:r0 + seq_len, :].astype(jnp.bfloat16)            # (L, H)
        k_r = k[r0:r0 + seq_len, :].astype(jnp.bfloat16)
        v_r = v[r0:r0 + seq_len, :].astype(jnp.bfloat16)
        for h in range(num_heads):
            c0 = h * head_dim
            qh = q_r[:, c0:c0 + head_dim]                           # (L, dh) bf16
            kh = k_r[:, c0:c0 + head_dim]
            vh = v_r[:, c0:c0 + head_dim]
            s = lax.dot_general(qh, kh, (((1,), (1,)), ((), ())),
                                preferred_element_type=jnp.float32)  # (L, L) = q @ k^T
            s = jnp.where(valid, s, NEG_INF)
            s = s - jnp.max(s, axis=-1, keepdims=True)
            p = jnp.exp(s)
            p = p * pl.reciprocal(jnp.sum(p, axis=-1, keepdims=True), approx=True)
            oh = jnp.dot(p.astype(jnp.bfloat16), vh,
                         preferred_element_type=jnp.float32)         # (L, dh)
            heads_ref[r0:r0 + seq_len, c0:c0 + head_dim] = oh        # static lane offset

    # ---- out-projection: ONE K=128 matmul over the concatenated heads -------
    attn = jnp.dot(heads_ref[...].astype(jnp.bfloat16), wo_ref[...],
                   preferred_element_type=jnp.float32) + bo_ref[...]
    x1 = x + attn                                                    # residual 1

    # ---- LayerNorm 2 + MLP (Linear -> ELU -> Linear) -------------------------
    nx2 = _layernorm(x1, g2_ref[...], be2_ref[...])
    hmid = jnp.dot(nx2.astype(jnp.bfloat16), w1_ref[...],
                   preferred_element_type=jnp.float32) + bm1_ref[...]
    act = jnp.where(hmid > 0, hmid, jnp.exp(jnp.minimum(hmid, 0.0)) - 1.0)  # ELU(alpha=1)
    mlp = jnp.dot(act.astype(jnp.bfloat16), w2_ref[...],
                  preferred_element_type=jnp.float32) + bm2_ref[...]
    out_ref[...] = x1 + mlp                                          # residual 2


def _pick_batch_tile(B, L, max_rows=512):
    """Largest batch tile that keeps >=2 parallel grid steps (v7x megacore),
    a sublane-aligned row tile, and a VMEM-friendly (<=512 rows) block."""
    best = 1
    for d in range(1, B + 1):
        if B % d:
            continue
        rows = d * L
        if rows > max_rows:
            continue
        if (rows % 8) and rows != B * L:
            continue
        if B >= 2 and B // d < 2:
            continue
        best = d
    return best


def transformer_block(x, padding_mask, params, *, batch_tile=None):
    """x: (B, L, H) f32; padding_mask: (B, L) bool (True = padded key, trailing)."""
    (g1, be1, wq, bq, wk, bk, wv, bv, wo, bo, g2, be2, w1, bm1, w2, bm2) = params
    B, L, H = x.shape
    assert H == HIDDEN and L % 8 == 0

    if batch_tile is None:
        batch_tile = _pick_batch_tile(B, L)
    assert B % batch_tile == 0
    n_steps = B // batch_tile
    M = batch_tile * L

    # Fold the 1/sqrt(head_dim) softmax scale into Wq/bq; fuse QKV; bf16 weights.
    scale = 1.0 / math.sqrt(HEAD_DIM)
    wqkv = jnp.concatenate([wq * scale, wk, wv], axis=1).astype(jnp.bfloat16)  # (H, 3H)
    bqkv = jnp.concatenate([bq * scale, bk, bv], axis=1).astype(jnp.float32)   # (1, 3H)
    wo_b = wo.astype(jnp.bfloat16)
    w1_b = w1.astype(jnp.bfloat16)
    w2_b = w2.astype(jnp.bfloat16)

    # Per-row valid-key counts (assumes trailing padding, matching recsys usage).
    lengths = (L - jnp.sum(padding_mask.astype(jnp.int32), axis=-1)).astype(jnp.int32)

    x_flat = x.reshape(B * L, H)

    kernel = partial(_block_kernel, batch_tile=batch_tile, seq_len=L,
                     num_heads=NUM_HEADS, head_dim=HEAD_DIM, hidden=H)

    def resident(shape):    # weight stays in VMEM across the whole grid
        return pl.BlockSpec(shape, lambda b, lens: (0, 0))

    grid_spec = pltpu.PrefetchScalarGridSpec(
        num_scalar_prefetch=1,
        grid=(n_steps,),
        in_specs=[
            pl.BlockSpec((M, H), lambda b, lens: (b, 0)),   # x: Bt*L rows per step
            resident((1, H)), resident((1, H)),             # LN1 gamma / beta
            resident((H, 3 * H)), resident((1, 3 * H)),     # fused Wqkv, bqkv
            resident((H, H)), resident((1, H)),             # Wo, bo
            resident((1, H)), resident((1, H)),             # LN2 gamma / beta
            resident((H, FF)), resident((1, FF)),           # W1, b1
            resident((FF, H)), resident((1, H)),            # W2, b2
        ],
        out_specs=pl.BlockSpec((M, H), lambda b, lens: (b, 0)),
        scratch_shapes=[pltpu.VMEM((M, H), jnp.float32)],   # concatenated head outputs
    )

    out_flat = pl.pallas_call(
        kernel,
        out_shape=jax.ShapeDtypeStruct((B * L, H), jnp.float32),
        grid_spec=grid_spec,
        compiler_params=pltpu.CompilerParams(
            dimension_semantics=("parallel",)),
    )(lengths, x_flat, g1, be1, wqkv, bqkv, wo_b, bo, g2, be2, w1_b, bm1, w2_b, bm2)

    return out_flat.reshape(B, L, H)


def _reference(x, padding_mask, params):
    """Pure-JAX (f32) mirror of the PyTorch TransformerBlock forward (eval mode)."""
    (g1, be1, wq, bq, wk, bk, wv, bv, wo, bo, g2, be2, w1, bm1, w2, bm2) = params
    B, L, H = x.shape

    def ln(v, g, b):
        m = v.mean(-1, keepdims=True)
        var = ((v - m) ** 2).mean(-1, keepdims=True)
        return (v - m) / jnp.sqrt(var + EPS) * g + b

    nx = ln(x, g1, be1)
    q = nx @ wq + bq
    k = nx @ wk + bk
    v = nx @ wv + bv

    def split(t):
        return t.reshape(B, L, NUM_HEADS, HEAD_DIM).transpose(0, 2, 1, 3)

    qh, kh, vh = split(q), split(k), split(v)
    s = jnp.einsum('bhqd,bhkd->bhqk', qh, kh) / math.sqrt(HEAD_DIM)
    causal = jnp.triu(jnp.ones((L, L), dtype=bool), 1)
    s = jnp.where(causal[None, None], -jnp.inf, s)
    s = jnp.where(padding_mask[:, None, None, :], -jnp.inf, s)
    p = jax.nn.softmax(s, axis=-1)
    o = jnp.einsum('bhqk,bhkd->bhqd', p, vh).transpose(0, 2, 1, 3).reshape(B, L, H)
    x1 = x + o @ wo + bo
    nx2 = ln(x1, g2, be2)
    mlp = jax.nn.elu(nx2 @ w1 + bm1) @ w2 + bm2
    return x1 + mlp


if __name__ == "__main__":
    key = jax.random.PRNGKey(0)
    B, L = 8, 16
    ks = jax.random.split(key, 17)

    def w(k, shape, scale=0.05):
        return scale * jax.random.normal(k, shape, dtype=jnp.float32)

    x = jax.random.normal(ks[0], (B, L, HIDDEN), dtype=jnp.float32)
    params = (
        1.0 + w(ks[1], (1, HIDDEN), 0.1), w(ks[2], (1, HIDDEN), 0.1),    # LN1
        w(ks[3], (HIDDEN, HIDDEN)), w(ks[4], (1, HIDDEN)),               # Wq, bq
        w(ks[5], (HIDDEN, HIDDEN)), w(ks[6], (1, HIDDEN)),               # Wk, bk
        w(ks[7], (HIDDEN, HIDDEN)), w(ks[8], (1, HIDDEN)),               # Wv, bv
        w(ks[9], (HIDDEN, HIDDEN)), w(ks[10], (1, HIDDEN)),              # Wo, bo
        1.0 + w(ks[11], (1, HIDDEN), 0.1), w(ks[12], (1, HIDDEN), 0.1),  # LN2
        w(ks[13], (HIDDEN, FF)), w(ks[14], (1, FF)),                     # W1, b1
        w(ks[15], (FF, HIDDEN)), w(ks[16], (1, HIDDEN)),                 # W2, b2
    )

    # key-padding mask: True = padded key (trailing pads; every row keeps key 0,
    # so there are no fully-masked softmax rows -> matches PyTorch -inf semantics)
    valid_lens = jnp.array([16, 12, 16, 9, 14, 16, 8, 11], dtype=jnp.int32)
    padding_mask = jnp.arange(L)[None, :] >= valid_lens[:, None]

    out = jax.block_until_ready(transformer_block(x, padding_mask, params))
    ref = _reference(x, padding_mask, params)

    assert out.shape == (B, L, HIDDEN)
    assert out.dtype == jnp.float32
    err = float(jnp.max(jnp.abs(out - ref)))
    # bf16 MXU operands with f32 accumulation -> relaxed tolerance vs. f32 reference
    assert jnp.allclose(out, ref, atol=5e-2, rtol=5e-2), err
    print("KERNEL_OK")
</pallas_src>

<mosaic_0001>
module attributes {stable_mosaic.version = 11 : i64} {
  func.func @_block_kernel(%arg0: i32, %arg1: memref<8xi32, #tpu.memory_space<smem>>, %arg2: memref<64x128xf32, #tpu.memory_space<vmem>>, %arg3: memref<1x128xf32, #tpu.memory_space<vmem>>, %arg4: memref<1x128xf32, #tpu.memory_space<vmem>>, %arg5: memref<128x384xbf16, #tpu.memory_space<vmem>>, %arg6: memref<1x384xf32, #tpu.memory_space<vmem>>, %arg7: memref<128x128xbf16, #tpu.memory_space<vmem>>, %arg8: memref<1x128xf32, #tpu.memory_space<vmem>>, %arg9: memref<1x128xf32, #tpu.memory_space<vmem>>, %arg10: memref<1x128xf32, #tpu.memory_space<vmem>>, %arg11: memref<128x512xbf16, #tpu.memory_space<vmem>>, %arg12: memref<1x512xf32, #tpu.memory_space<vmem>>, %arg13: memref<512x128xbf16, #tpu.memory_space<vmem>>, %arg14: memref<1x128xf32, #tpu.memory_space<vmem>>, %arg15: memref<64x128xf32, #tpu.memory_space<vmem>>, %arg16: memref<64x128xf32, #tpu.memory_space<vmem>>) attributes {dimension_semantics = [#tpu.dimension_semantics<parallel>], iteration_bounds = array<i64: 2>, scalar_prefetch = 1 : i64, scratch_operands = 1 : i64, tpu.core_type = #tpu.core_type<tc>, window_params = [{transform_indices = @transform_0, window_bounds = array<i64: 64, 128>}, {pipeline_mode = #tpu.pipeline_mode<synchronous>, transform_indices = @transform_1, window_bounds = array<i64: 1, 128>}, {pipeline_mode = #tpu.pipeline_mode<synchronous>, transform_indices = @transform_2, window_bounds = array<i64: 1, 128>}, {pipeline_mode = #tpu.pipeline_mode<synchronous>, transform_indices = @transform_3, window_bounds = array<i64: 128, 384>}, {pipeline_mode = #tpu.pipeline_mode<synchronous>, transform_indices = @transform_4, window_bounds = array<i64: 1, 384>}, {pipeline_mode = #tpu.pipeline_mode<synchronous>, transform_indices = @transform_5, window_bounds = array<i64: 128, 128>}, {pipeline_mode = #tpu.pipeline_mode<synchronous>, transform_indices = @transform_6, window_bounds = array<i64: 1, 128>}, {pipeline_mode = #tpu.pipeline_mode<synchronous>, transform_indices = @transform_7, window_bounds = array<i64: 1, 128>}, {pipeline_mode = #tpu.pipeline_mode<synchronous>, transform_indices = @transform_8, window_bounds = array<i64: 1, 128>}, {pipeline_mode = #tpu.pipeline_mode<synchronous>, transform_indices = @transform_9, window_bounds = array<i64: 128, 512>}, {pipeline_mode = #tpu.pipeline_mode<synchronous>, transform_indices = @transform_10, window_bounds = array<i64: 1, 512>}, {pipeline_mode = #tpu.pipeline_mode<synchronous>, transform_indices = @transform_11, window_bounds = array<i64: 512, 128>}, {pipeline_mode = #tpu.pipeline_mode<synchronous>, transform_indices = @transform_12, window_bounds = array<i64: 1, 128>}, {transform_indices = @transform_13, window_bounds = array<i64: 64, 128>}]} {
    %c0 = arith.constant 0 : index
    %c0_0 = arith.constant 0 : index
    %0 = vector.load %arg2[%c0, %c0_0] : memref<64x128xf32, #tpu.memory_space<vmem>>, vector<64x128xf32>
    %c0_1 = arith.constant 0 : index
    %c0_2 = arith.constant 0 : index
    %1 = vector.load %arg3[%c0_1, %c0_2] : memref<1x128xf32, #tpu.memory_space<vmem>>, vector<1x128xf32>
    %c0_3 = arith.constant 0 : index
    %c0_4 = arith.constant 0 : index
    %2 = vector.load %arg4[%c0_3, %c0_4] : memref<1x128xf32, #tpu.memory_space<vmem>>, vector<1x128xf32>
    %cst = arith.constant dense<0.000000e+00> : vector<64xf32>
    %3 = vector.multi_reduction <add>, %0, %cst [1] : vector<64x128xf32> to vector<64xf32>
    %4 = vector.shape_cast %3 : vector<64xf32> to vector<64x1xf32>
    %cst_5 = arith.constant 1.280000e+02 : f32
    %5 = vector.broadcast %cst_5 : f32 to vector<64x1xf32>
    %6 = arith.divf %4, %5 : vector<64x1xf32>
    %7 = vector.broadcast %6 : vector<64x1xf32> to vector<64x128xf32>
    %8 = arith.subf %0, %7 : vector<64x128xf32>
    %9 = arith.mulf %8, %8 : vector<64x128xf32>
    %cst_6 = arith.constant dense<0.000000e+00> : vector<64xf32>
    %10 = vector.multi_reduction <add>, %9, %cst_6 [1] : vector<64x128xf32> to vector<64xf32>
    %11 = vector.shape_cast %10 : vector<64xf32> to vector<64x1xf32>
    %cst_7 = arith.constant 1.280000e+02 : f32
    %12 = vector.broadcast %cst_7 : f32 to vector<64x1xf32>
    %13 = arith.divf %11, %12 : vector<64x1xf32>
    %cst_8 = arith.constant 9.99999974E-6 : f32
    %14 = vector.broadcast %cst_8 : f32 to vector<64x1xf32>
    %15 = arith.addf %13, %14 : vector<64x1xf32>
    %16 = math.rsqrt %15 : vector<64x1xf32>
    %17 = vector.broadcast %16 : vector<64x1xf32> to vector<64x128xf32>
    %18 = arith.mulf %8, %17 : vector<64x128xf32>
    %19 = vector.broadcast %1 : vector<1x128xf32> to vector<64x128xf32>
    %20 = arith.mulf %18, %19 : vector<64x128xf32>
    %21 = vector.broadcast %2 : vector<1x128xf32> to vector<64x128xf32>
    %22 = arith.addf %20, %21 : vector<64x128xf32>
    %23 = arith.truncf %22 : vector<64x128xf32> to vector<64x128xbf16>
    %c0_9 = arith.constant 0 : index
    %c0_10 = arith.constant 0 : index
    %24 = vector.load %arg5[%c0_9, %c0_10] : memref<128x384xbf16, #tpu.memory_space<vmem>>, vector<128x384xbf16>
    %cst_11 = arith.constant dense<0.000000e+00> : vector<64x384xf32>
    %25 = tpu.matmul %23, %24, %cst_11 {dimension_numbers = #tpu.dot_dimension_numbers<[1], [0], [0], [1], [0, 0, 1, 1], [], []>} : vector<64x128xbf16>, vector<128x384xbf16>, vector<64x384xf32> -> vector<64x384xf32>
    %c0_12 = arith.constant 0 : index
    %c0_13 = arith.constant 0 : index
    %26 = vector.load %arg6[%c0_12, %c0_13] : memref<1x384xf32, #tpu.memory_space<vmem>>, vector<1x384xf32>
    %27 = vector.broadcast %26 : vector<1x384xf32> to vector<64x384xf32>
    %28 = arith.addf %25, %27 : vector<64x384xf32>
    %29 = vector.extract_strided_slice %28 {offsets = [0, 0], sizes = [64, 128], strides = [1, 1]} : vector<64x384xf32> to vector<64x128xf32>
    %30 = vector.extract_strided_slice %28 {offsets = [0, 128], sizes = [64, 128], strides = [1, 1]} : vector<64x384xf32> to vector<64x128xf32>
    %31 = vector.extract_strided_slice %28 {offsets = [0, 256], sizes = [64, 128], strides = [1, 1]} : vector<64x384xf32> to vector<64x128xf32>
    %32 = tpu.iota {dimensions = array<i32: 0>} : vector<16x16xi32>
    %33 = tpu.iota {dimensions = array<i32: 1>} : vector<16x16xi32>
    %34 = arith.cmpi sle, %33, %32 : vector<16x16xi32>
    %c4_i32 = arith.constant 4 : i32
    %35 = arith.muli %arg0, %c4_i32 : i32
    %c0_i32 = arith.constant 0 : i32
    %36 = arith.addi %35, %c0_i32 : i32
    %37 = arith.index_cast %36 : i32 to index
    %38 = memref.load %arg1[%37] : memref<8xi32, #tpu.memory_space<smem>>
    %39 = vector.broadcast %38 : i32 to vector<16x16xi32>
    %40 = arith.cmpi slt, %33, %39 : vector<16x16xi32>
    %41 = arith.andi %34, %40 : vector<16x16xi1>
    %42 = vector.extract_strided_slice %29 {offsets = [0, 0], sizes = [16, 128], strides = [1, 1]} : vector<64x128xf32> to vector<16x128xf32>
    %43 = arith.truncf %42 : vector<16x128xf32> to vector<16x128xbf16>
    %44 = vector.extract_strided_slice %30 {offsets = [0, 0], sizes = [16, 128], strides = [1, 1]} : vector<64x128xf32> to vector<16x128xf32>
    %45 = arith.truncf %44 : vector<16x128xf32> to vector<16x128xbf16>
    %46 = vector.extract_strided_slice %31 {offsets = [0, 0], sizes = [16, 128], strides = [1, 1]} : vector<64x128xf32> to vector<16x128xf32>
    %47 = arith.truncf %46 : vector<16x128xf32> to vector<16x128xbf16>
    %48 = vector.extract_strided_slice %43 {offsets = [0, 0], sizes = [16, 32], strides = [1, 1]} : vector<16x128xbf16> to vector<16x32xbf16>
    %49 = vector.extract_strided_slice %45 {offsets = [0, 0], sizes = [16, 32], strides = [1, 1]} : vector<16x128xbf16> to vector<16x32xbf16>
    %50 = vector.extract_strided_slice %47 {offsets = [0, 0], sizes = [16, 32], strides = [1, 1]} : vector<16x128xbf16> to vector<16x32xbf16>
    %cst_14 = arith.constant dense<0.000000e+00> : vector<16x16xf32>
    %51 = tpu.matmul %48, %49, %cst_14 {dimension_numbers = #tpu.dot_dimension_numbers<[1], [1], [0], [0], [0, 0, 1, 0], [], []>} : vector<16x32xbf16>, vector<16x32xbf16>, vector<16x16xf32> -> vector<16x16xf32>
    %cst_15 = arith.constant -1.000000e+30 : f32
    %52 = vector.broadcast %cst_15 : f32 to vector<16x16xf32>
    %53 = arith.select %41, %51, %52 : vector<16x16xi1>, vector<16x16xf32>
    %cst_16 = arith.constant dense<0xFF800000> : vector<16xf32>
    %54 = vector.multi_reduction <maximumf>, %53, %cst_16 [1] : vector<16x16xf32> to vector<16xf32>
    %55 = vector.shape_cast %54 : vector<16xf32> to vector<16x1xf32>
    %56 = vector.broadcast %55 : vector<16x1xf32> to vector<16x16xf32>
    %57 = arith.subf %53, %56 : vector<16x16xf32>
    %58 = math.exp %57 : vector<16x16xf32>
    %cst_17 = arith.constant dense<0.000000e+00> : vector<16xf32>
    %59 = vector.multi_reduction <add>, %58, %cst_17 [1] : vector<16x16xf32> to vector<16xf32>
    %60 = vector.shape_cast %59 : vector<16xf32> to vector<16x1xf32>
    %61 = tpu.reciprocal %60 {approx = true} : vector<16x1xf32> -> vector<16x1xf32>
    %62 = vector.broadcast %61 : vector<16x1xf32> to vector<16x16xf32>
    %63 = arith.mulf %58, %62 : vector<16x16xf32>
    %64 = arith.truncf %63 : vector<16x16xf32> to vector<16x16xbf16>
    %cst_18 = arith.constant dense<0.000000e+00> : vector<16x32xf32>
    %65 = tpu.matmul %64, %50, %cst_18 {dimension_numbers = #tpu.dot_dimension_numbers<[1], [0], [0], [1], [0, 0, 1, 1], [], []>} : vector<16x16xbf16>, vector<16x32xbf16>, vector<16x32xf32> -> vector<16x32xf32>
    %c0_19 = arith.constant 0 : index
    %c0_20 = arith.constant 0 : index
    %66 = vector.load %arg16[%c0_19, %c0_20] : memref<64x128xf32, #tpu.memory_space<vmem>>, vector<16x32xf32>
    tpu.vector_store %arg16[%c0_19, %c0_20], %65 {strides = array<i32>} : memref<64x128xf32, #tpu.memory_space<vmem>>, vector<16x32xf32>,
    %67 = vector.extract_strided_slice %43 {offsets = [0, 32], sizes = [16, 32], strides = [1, 1]} : vector<16x128xbf16> to vector<16x32xbf16>
    %68 = vector.extract_strided_slice %45 {offsets = [0, 32], sizes = [16, 32], strides = [1, 1]} : vector<16x128xbf16> to vector<16x32xbf16>
    %69 = vector.extract_strided_slice %47 {offsets = [0, 32], sizes = [16, 32], strides = [1, 1]} : vector<16x128xbf16> to vector<16x32xbf16>
    %cst_21 = arith.constant dense<0.000000e+00> : vector<16x16xf32>
    %70 = tpu.matmul %67, %68, %cst_21 {dimension_numbers = #tpu.dot_dimension_numbers<[1], [1], [0], [0], [0, 0, 1, 0], [], []>} : vector<16x32xbf16>, vector<16x32xbf16>, vector<16x16xf32> -> vector<16x16xf32>
    %cst_22 = arith.constant -1.000000e+30 : f32
    %71 = vector.broadcast %cst_22 : f32 to vector<16x16xf32>
    %72 = arith.select %41, %70, %71 : vector<16x16xi1>, vector<16x16xf32>
    %cst_23 = arith.constant dense<0xFF800000> : vector<16xf32>
    %73 = vector.multi_reduction <maximumf>, %72, %cst_23 [1] : vector<16x16xf32> to vector<16xf32>
    %74 = vector.shape_cast %73 : vector<16xf32> to vector<16x1xf32>
    %75 = vector.broadcast %74 : vector<16x1xf32> to vector<16x16xf32>
    %76 = arith.subf %72, %75 : vector<16x16xf32>
    %77 = math.exp %76 : vector<16x16xf32>
    %cst_24 = arith.constant dense<0.000000e+00> : vector<16xf32>
    %78 = vector.multi_reduction <add>, %77, %cst_24 [1] : vector<16x16xf32> to vector<16xf32>
    %79 = vector.shape_cast %78 : vector<16xf32> to vector<16x1xf32>
    %80 = tpu.reciprocal %79 {approx = true} : vector<16x1xf32> -> vector<16x1xf32>
    %81 = vector.broadcast %80 : vector<16x1xf32> to vector<16x16xf32>
    %82 = arith.mulf %77, %81 : vector<16x16xf32>
    %83 = arith.truncf %82 : vector<16x16xf32> to vector<16x16xbf16>
    %cst_25 = arith.constant dense<0.000000e+00> : vector<16x32xf32>
    %84 = tpu.matmul %83, %69, %cst_25 {dimension_numbers = #tpu.dot_dimension_numbers<[1], [0], [0], [1], [0, 0, 1, 1], [], []>} : vector<16x16xbf16>, vector<16x32xbf16>, vector<16x32xf32> -> vector<16x32xf32>
    %c0_26 = arith.constant 0 : index
    %c32 = arith.constant 32 : index
    %85 = vector.load %arg16[%c0_26, %c32] : memref<64x128xf32, #tpu.memory_space<vmem>>, vector<16x32xf32>
    tpu.vector_store %arg16[%c0_26, %c32], %84 {strides = array<i32>} : memref<64x128xf32, #tpu.memory_space<vmem>>, vector<16x32xf32>,
    %86 = vector.extract_strided_slice %43 {offsets = [0, 64], sizes = [16, 32], strides = [1, 1]} : vector<16x128xbf16> to vector<16x32xbf16>
    %87 = vector.extract_strided_slice %45 {offsets = [0, 64], sizes = [16, 32], strides = [1, 1]} : vector<16x128xbf16> to vector<16x32xbf16>
    %88 = vector.extract_strided_slice %47 {offsets = [0, 64], sizes = [16, 32], strides = [1, 1]} : vector<16x128xbf16> to vector<16x32xbf16>
    %cst_27 = arith.constant dense<0.000000e+00> : vector<16x16xf32>
    %89 = tpu.matmul %86, %87, %cst_27 {dimension_numbers = #tpu.dot_dimension_numbers<[1], [1], [0], [0], [0, 0, 1, 0], [], []>} : vector<16x32xbf16>, vector<16x32xbf16>, vector<16x16xf32> -> vector<16x16xf32>
    %cst_28 = arith.constant -1.000000e+30 : f32
    %90 = vector.broadcast %cst_28 : f32 to vector<16x16xf32>
    %91 = arith.select %41, %89, %90 : vector<16x16xi1>, vector<16x16xf32>
    %cst_29 = arith.constant dense<0xFF800000> : vector<16xf32>
    %92 = vector.multi_reduction <maximumf>, %91, %cst_29 [1] : vector<16x16xf32> to vector<16xf32>
    %93 = vector.shape_cast %92 : vector<16xf32> to vector<16x1xf32>
    %94 = vector.broadcast %93 : vector<16x1xf32> to vector<16x16xf32>
    %95 = arith.subf %91, %94 : vector<16x16xf32>
    %96 = math.exp %95 : vector<16x16xf32>
    %cst_30 = arith.constant dense<0.000000e+00> : vector<16xf32>
    %97 = vector.multi_reduction <add>, %96, %cst_30 [1] : vector<16x16xf32> to vector<16xf32>
    %98 = vector.shape_cast %97 : vector<16xf32> to vector<16x1xf32>
    %99 = tpu.reciprocal %98 {approx = true} : vector<16x1xf32> -> vector<16x1xf32>
    %100 = vector.broadcast %99 : vector<16x1xf32> to vector<16x16xf32>
    %101 = arith.mulf %96, %100 : vector<16x16xf32>
    %102 = arith.truncf %101 : vector<16x16xf32> to vector<16x16xbf16>
    %cst_31 = arith.constant dense<0.000000e+00> : vector<16x32xf32>
    %103 = tpu.matmul %102, %88, %cst_31 {dimension_numbers = #tpu.dot_dimension_numbers<[1], [0], [0], [1], [0, 0, 1, 1], [], []>} : vector<16x16xbf16>, vector<16x32xbf16>, vector<16x32xf32> -> vector<16x32xf32>
    %c0_32 = arith.constant 0 : index
    %c64 = arith.constant 64 : index
    %104 = vector.load %arg16[%c0_32, %c64] : memref<64x128xf32, #tpu.memory_space<vmem>>, vector<16x32xf32>
    tpu.vector_store %arg16[%c0_32, %c64], %103 {strides = array<i32>} : memref<64x128xf32, #tpu.memory_space<vmem>>, vector<16x32xf32>,
    %105 = vector.extract_strided_slice %43 {offsets = [0, 96], sizes = [16, 32], strides = [1, 1]} : vector<16x128xbf16> to vector<16x32xbf16>
    %106 = vector.extract_strided_slice %45 {offsets = [0, 96], sizes = [16, 32], strides = [1, 1]} : vector<16x128xbf16> to vector<16x32xbf16>
    %107 = vector.extract_strided_slice %47 {offsets = [0, 96], sizes = [16, 32], strides = [1, 1]} : vector<16x128xbf16> to vector<16x32xbf16>
    %cst_33 = arith.constant dense<0.000000e+00> : vector<16x16xf32>
    %108 = tpu.matmul %105, %106, %cst_33 {dimension_numbers = #tpu.dot_dimension_numbers<[1], [1], [0], [0], [0, 0, 1, 0], [], []>} : vector<16x32xbf16>, vector<16x32xbf16>, vector<16x16xf32> -> vector<16x16xf32>
    %cst_34 = arith.constant -1.000000e+30 : f32
    %109 = vector.broadcast %cst_34 : f32 to vector<16x16xf32>
    %110 = arith.select %41, %108, %109 : vector<16x16xi1>, vector<16x16xf32>
    %cst_35 = arith.constant dense<0xFF800000> : vector<16xf32>
    %111 = vector.multi_reduction <maximumf>, %110, %cst_35 [1] : vector<16x16xf32> to vector<16xf32>
    %112 = vector.shape_cast %111 : vector<16xf32> to vector<16x1xf32>
    %113 = vector.broadcast %112 : vector<16x1xf32> to vector<16x16xf32>
    %114 = arith.subf %110, %113 : vector<16x16xf32>
    %115 = math.exp %114 : vector<16x16xf32>
    %cst_36 = arith.constant dense<0.000000e+00> : vector<16xf32>
    %116 = vector.multi_reduction <add>, %115, %cst_36 [1] : vector<16x16xf32> to vector<16xf32>
    %117 = vector.shape_cast %116 : vector<16xf32> to vector<16x1xf32>
    %118 = tpu.reciprocal %117 {approx = true} : vector<16x1xf32> -> vector<16x1xf32>
    %119 = vector.broadcast %118 : vector<16x1xf32> to vector<16x16xf32>
    %120 = arith.mulf %115, %119 : vector<16x16xf32>
    %121 = arith.truncf %120 : vector<16x16xf32> to vector<16x16xbf16>
    %cst_37 = arith.constant dense<0.000000e+00> : vector<16x32xf32>
    %122 = tpu.matmul %121, %107, %cst_37 {dimension_numbers = #tpu.dot_dimension_numbers<[1], [0], [0], [1], [0, 0, 1, 1], [], []>} : vector<16x16xbf16>, vector<16x32xbf16>, vector<16x32xf32> -> vector<16x32xf32>
    %c0_38 = arith.constant 0 : index
    %c96 = arith.constant 96 : index
    %123 = vector.load %arg16[%c0_38, %c96] : memref<64x128xf32, #tpu.memory_space<vmem>>, vector<16x32xf32>
    tpu.vector_store %arg16[%c0_38, %c96], %122 {strides = array<i32>} : memref<64x128xf32, #tpu.memory_space<vmem>>, vector<16x32xf32>,
    %c4_i32_39 = arith.constant 4 : i32
    %124 = arith.muli %arg0, %c4_i32_39 : i32
    %c1_i32 = arith.constant 1 : i32
    %125 = arith.addi %124, %c1_i32 : i32
    %126 = arith.index_cast %125 : i32 to index
    %127 = memref.load %arg1[%126] : memref<8xi32, #tpu.memory_space<smem>>
    %128 = vector.broadcast %127 : i32 to vector<16x16xi32>
    %129 = arith.cmpi slt, %33, %128 : vector<16x16xi32>
    %130 = arith.andi %34, %129 : vector<16x16xi1>
    %131 = vector.extract_strided_slice %29 {offsets = [16, 0], sizes = [16, 128], strides = [1, 1]} : vector<64x128xf32> to vector<16x128xf32>
    %132 = arith.truncf %131 : vector<16x128xf32> to vector<16x128xbf16>
    %133 = vector.extract_strided_slice %30 {offsets = [16, 0], sizes = [16, 128], strides = [1, 1]} : vector<64x128xf32> to vector<16x128xf32>
    %134 = arith.truncf %133 : vector<16x128xf32> to vector<16x128xbf16>
    %135 = vector.extract_strided_slice %31 {offsets = [16, 0], sizes = [16, 128], strides = [1, 1]} : vector<64x128xf32> to vector<16x128xf32>
    %136 = arith.truncf %135 : vector<16x128xf32> to vector<16x128xbf16>
    %137 = vector.extract_strided_slice %132 {offsets = [0, 0], sizes = [16, 32], strides = [1, 1]} : vector<16x128xbf16> to vector<16x32xbf16>
    %138 = vector.extract_strided_slice %134 {offsets = [0, 0], sizes = [16, 32], strides = [1, 1]} : vector<16x128xbf16> to vector<16x32xbf16>
    %139 = vector.extract_strided_slice %136 {offsets = [0, 0], sizes = [16, 32], strides = [1, 1]} : vector<16x128xbf16> to vector<16x32xbf16>
    %cst_40 = arith.constant dense<0.000000e+00> : vector<16x16xf32>
    %140 = tpu.matmul %137, %138, %cst_40 {dimension_numbers = #tpu.dot_dimension_numbers<[1], [1], [0], [0], [0, 0, 1, 0], [], []>} : vector<16x32xbf16>, vector<16x32xbf16>, vector<16x16xf32> -> vector<16x16xf32>
    %cst_41 = arith.constant -1.000000e+30 : f32
    %141 = vector.broadcast %cst_41 : f32 to vector<16x16xf32>
    %142 = arith.select %130, %140, %141 : vector<16x16xi1>, vector<16x16xf32>
    %cst_42 = arith.constant dense<0xFF800000> : vector<16xf32>
    %143 = vector.multi_reduction <maximumf>, %142, %cst_42 [1] : vector<16x16xf32> to vector<16xf32>
    %144 = vector.shape_cast %143 : vector<16xf32> to vector<16x1xf32>
    %145 = vector.broadcast %144 : vector<16x1xf32> to vector<16x16xf32>
    %146 = arith.subf %142, %145 : vector<16x16xf32>
    %147 = math.exp %146 : vector<16x16xf32>
    %cst_43 = arith.constant dense<0.000000e+00> : vector<16xf32>
    %148 = vector.multi_reduction <add>, %147, %cst_43 [1] : vector<16x16xf32> to vector<16xf32>
    %149 = vector.shape_cast %148 : vector<16xf32> to vector<16x1xf32>
    %150 = tpu.reciprocal %149 {approx = true} : vector<16x1xf32> -> vector<16x1xf32>
    %151 = vector.broadcast %150 : vector<16x1xf32> to vector<16x16xf32>
    %152 = arith.mulf %147, %151 : vector<16x16xf32>
    %153 = arith.truncf %152 : vector<16x16xf32> to vector<16x16xbf16>
    %cst_44 = arith.constant dense<0.000000e+00> : vector<16x32xf32>
    %154 = tpu.matmul %153, %139, %cst_44 {dimension_numbers = #tpu.dot_dimension_numbers<[1], [0], [0], [1], [0, 0, 1, 1], [], []>} : vector<16x16xbf16>, vector<16x32xbf16>, vector<16x32xf32> -> vector<16x32xf32>
    %c16 = arith.constant 16 : index
    %c0_45 = arith.constant 0 : index
    %155 = vector.load %arg16[%c16, %c0_45] : memref<64x128xf32, #tpu.memory_space<vmem>>, vector<16x32xf32>
    tpu.vector_store %arg16[%c16, %c0_45], %154 {strides = array<i32>} : memref<64x128xf32, #tpu.memory_space<vmem>>, vector<16x32xf32>,
    %156 = vector.extract_strided_slice %132 {offsets = [0, 32], sizes = [16, 32], strides = [1, 1]} : vector<16x128xbf16> to vector<16x32xbf16>
    %157 = vector.extract_strided_slice %134 {offsets = [0, 32], sizes = [16, 32], strides = [1, 1]} : vector<16x128xbf16> to vector<16x32xbf16>
    %158 = vector.extract_strided_slice %136 {offsets = [0, 32], sizes = [16, 32], strides = [1, 1]} : vector<16x128xbf16> to vector<16x32xbf16>
    %cst_46 = arith.constant dense<0.000000e+00> : vector<16x16xf32>
    %159 = tpu.matmul %156, %157, %cst_46 {dimension_numbers = #tpu.dot_dimension_numbers<[1], [1], [0], [0], [0, 0, 1, 0], [], []>} : vector<16x32xbf16>, vector<16x32xbf16>, vector<16x16xf32> -> vector<16x16xf32>
    %cst_47 = arith.constant -1.000000e+30 : f32
    %160 = vector.broadcast %cst_47 : f32 to vector<16x16xf32>
    %161 = arith.select %130, %159, %160 : vector<16x16xi1>, vector<16x16xf32>
    %cst_48 = arith.constant dense<0xFF800000> : vector<16xf32>
    %162 = vector.multi_reduction <maximumf>, %161, %cst_48 [1] : vector<16x16xf32> to vector<16xf32>
    %163 = vector.shape_cast %162 : vector<16xf32> to vector<16x1xf32>
    %164 = vector.broadcast %163 : vector<16x1xf32> to vector<16x16xf32>
    %165 = arith.subf %161, %164 : vector<16x16xf32>
    %166 = math.exp %165 : vector<16x16xf32>
    %cst_49 = arith.constant dense<0.000000e+00> : vector<16xf32>
    %167 = vector.multi_reduction <add>, %166, %cst_49 [1] : vector<16x16xf32> to vector<16xf32>
    %168 = vector.shape_cast %167 : vector<16xf32> to vector<16x1xf32>
    %169 = tpu.reciprocal %168 {approx = true} : vector<16x1xf32> -> vector<16x1xf32>
    %170 = vector.broadcast %169 : vector<16x1xf32> to vector<16x16xf32>
    %171 = arith.mulf %166, %170 : vector<16x16xf32>
    %172 = arith.truncf %171 : vector<16x16xf32> to vector<16x16xbf16>
    %cst_50 = arith.constant dense<0.000000e+00> : vector<16x32xf32>
    %173 = tpu.matmul %172, %158, %cst_50 {dimension_numbers = #tpu.dot_dimension_numbers<[1], [0], [0], [1], [0, 0, 1, 1], [], []>} : vector<16x16xbf16>, vector<16x32xbf16>, vector<16x32xf32> -> vector<16x32xf32>
    %c16_51 = arith.constant 16 : index
    %c32_52 = arith.constant 32 : index
    %174 = vector.load %arg16[%c16_51, %c32_52] : memref<64x128xf32, #tpu.memory_space<vmem>>, vector<16x32xf32>
    tpu.vector_store %arg16[%c16_51, %c32_52], %173 {strides = array<i32>} : memref<64x128xf32, #tpu.memory_space<vmem>>, vector<16x32xf32>,
    %175 = vector.extract_strided_slice %132 {offsets = [0, 64], sizes = [16, 32], strides = [1, 1]} : vector<16x128xbf16> to vector<16x32xbf16>
    %176 = vector.extract_strided_slice %134 {offsets = [0, 64], sizes = [16, 32], strides = [1, 1]} : vector<16x128xbf16> to vector<16x32xbf16>
    %177 = vector.extract_strided_slice %136 {offsets = [0, 64], sizes = [16, 32], strides = [1, 1]} : vector<16x128xbf16> to vector<16x32xbf16>
    %cst_53 = arith.constant dense<0.000000e+00> : vector<16x16xf32>
    %178 = tpu.matmul %175, %176, %cst_53 {dimension_numbers = #tpu.dot_dimension_numbers<[1], [1], [0], [0], [0, 0, 1, 0], [], []>} : vector<16x32xbf16>, vector<16x32xbf16>, vector<16x16xf32> -> vector<16x16xf32>
    %cst_54 = arith.constant -1.000000e+30 : f32
    %179 = vector.broadcast %cst_54 : f32 to vector<16x16xf32>
    %180 = arith.select %130, %178, %179 : vector<16x16xi1>, vector<16x16xf32>
    %cst_55 = arith.constant dense<0xFF800000> : vector<16xf32>
    %181 = vector.multi_reduction <maximumf>, %180, %cst_55 [1] : vector<16x16xf32> to vector<16xf32>
    %182 = vector.shape_cast %181 : vector<16xf32> to vector<16x1xf32>
    %183 = vector.broadcast %182 : vector<16x1xf32> to vector<16x16xf32>
    %184 = arith.subf %180, %183 : vector<16x16xf32>
    %185 = math.exp %184 : vector<16x16xf32>
    %cst_56 = arith.constant dense<0.000000e+00> : vector<16xf32>
    %186 = vector.multi_reduction <add>, %185, %cst_56 [1] : vector<16x16xf32> to vector<16xf32>
    %187 = vector.shape_cast %186 : vector<16xf32> to vector<16x1xf32>
    %188 = tpu.reciprocal %187 {approx = true} : vector<16x1xf32> -> vector<16x1xf32>
    %189 = vector.broadcast %188 : vector<16x1xf32> to vector<16x16xf32>
    %190 = arith.mulf %185, %189 : vector<16x16xf32>
    %191 = arith.truncf %190 : vector<16x16xf32> to vector<16x16xbf16>
    %cst_57 = arith.constant dense<0.000000e+00> : vector<16x32xf32>
    %192 = tpu.matmul %191, %177, %cst_57 {dimension_numbers = #tpu.dot_dimension_numbers<[1], [0], [0], [1], [0, 0, 1, 1], [], []>} : vector<16x16xbf16>, vector<16x32xbf16>, vector<16x32xf32> -> vector<16x32xf32>
    %c16_58 = arith.constant 16 : index
    %c64_59 = arith.constant 64 : index
    %193 = vector.load %arg16[%c16_58, %c64_59] : memref<64x128xf32, #tpu.memory_space<vmem>>, vector<16x32xf32>
    tpu.vector_store %arg16[%c16_58, %c64_59], %192 {strides = array<i32>} : memref<64x128xf32, #tpu.memory_space<vmem>>, vector<16x32xf32>,
    %194 = vector.extract_strided_slice %132 {offsets = [0, 96], sizes = [16, 32], strides = [1, 1]} : vector<16x128xbf16> to vector<16x32xbf16>
    %195 = vector.extract_strided_slice %134 {offsets = [0, 96], sizes = [16, 32], strides = [1, 1]} : vector<16x128xbf16> to vector<16x32xbf16>
    %196 = vector.extract_strided_slice %136 {offsets = [0, 96], sizes = [16, 32], strides = [1, 1]} : vector<16x128xbf16> to vector<16x32xbf16>
    %cst_60 = arith.constant dense<0.000000e+00> : vector<16x16xf32>
    %197 = tpu.matmul %194, %195, %cst_60 {dimension_numbers = #tpu.dot_dimension_numbers<[1], [1], [0], [0], [0, 0, 1, 0], [], []>} : vector<16x32xbf16>, vector<16x32xbf16>, vector<16x16xf32> -> vector<16x16xf32>
    %cst_61 = arith.constant -1.000000e+30 : f32
    %198 = vector.broadcast %cst_61 : f32 to vector<16x16xf32>
    %199 = arith.select %130, %197, %198 : vector<16x16xi1>, vector<16x16xf32>
    %cst_62 = arith.constant dense<0xFF800000> : vector<16xf32>
    %200 = vector.multi_reduction <maximumf>, %199, %cst_62 [1] : vector<16x16xf32> to vector<16xf32>
    %201 = vector.shape_cast %200 : vector<16xf32> to vector<16x1xf32>
    %202 = vector.broadcast %201 : vector<16x1xf32> to vector<16x16xf32>
    %203 = arith.subf %199, %202 : vector<16x16xf32>
    %204 = math.exp %203 : vector<16x16xf32>
    %cst_63 = arith.constant dense<0.000000e+00> : vector<16xf32>
    %205 = vector.multi_reduction <add>, %204, %cst_63 [1] : vector<16x16xf32> to vector<16xf32>
    %206 = vector.shape_cast %205 : vector<16xf32> to vector<16x1xf32>
    %207 = tpu.reciprocal %206 {approx = true} : vector<16x1xf32> -> vector<16x1xf32>
    %208 = vector.broadcast %207 : vector<16x1xf32> to vector<16x16xf32>
    %209 = arith.mulf %204, %208 : vector<16x16xf32>
    %210 = arith.truncf %209 : vector<16x16xf32> to vector<16x16xbf16>
    %cst_64 = arith.constant dense<0.000000e+00> : vector<16x32xf32>
    %211 = tpu.matmul %210, %196, %cst_64 {dimension_numbers = #tpu.dot_dimension_numbers<[1], [0], [0], [1], [0, 0, 1, 1], [], []>} : vector<16x16xbf16>, vector<16x32xbf16>, vector<16x32xf32> -> vector<16x32xf32>
    %c16_65 = arith.constant 16 : index
    %c96_66 = arith.constant 96 : index
    %212 = vector.load %arg16[%c16_65, %c96_66] : memref<64x128xf32, #tpu.memory_space<vmem>>, vector<16x32xf32>
    tpu.vector_store %arg16[%c16_65, %c96_66], %211 {strides = array<i32>} : memref<64x128xf32, #tpu.memory_space<vmem>>, vector<16x32xf32>,
    %c4_i32_67 = arith.constant 4 : i32
    %213 = arith.muli %arg0, %c4_i32_67 : i32
    %c2_i32 = arith.constant 2 : i32
    %214 = arith.addi %213, %c2_i32 : i32
    %215 = arith.index_cast %214 : i32 to index
    %216 = memref.load %arg1[%215] : memref<8xi32, #tpu.memory_space<smem>>
    %217 = vector.broadcast %216 : i32 to vector<16x16xi32>
    %218 = arith.cmpi slt, %33, %217 : vector<16x16xi32>
    %219 = arith.andi %34, %218 : vector<16x16xi1>
    %220 = vector.extract_strided_slice %29 {offsets = [32, 0], sizes = [16, 128], strides = [1, 1]} : vector<64x128xf32> to vector<16x128xf32>
    %221 = arith.truncf %220 : vector<16x128xf32> to vector<16x128xbf16>
    %222 = vector.extract_strided_slice %30 {offsets = [32, 0], sizes = [16, 128], strides = [1, 1]} : vector<64x128xf32> to vector<16x128xf32>
    %223 = arith.truncf %222 : vector<16x128xf32> to vector<16x128xbf16>
    %224 = vector.extract_strided_slice %31 {offsets = [32, 0], sizes = [16, 128], strides = [1, 1]} : vector<64x128xf32> to vector<16x128xf32>
    %225 = arith.truncf %224 : vector<16x128xf32> to vector<16x128xbf16>
    %226 = vector.extract_strided_slice %221 {offsets = [0, 0], sizes = [16, 32], strides = [1, 1]} : vector<16x128xbf16> to vector<16x32xbf16>
    %227 = vector.extract_strided_slice %223 {offsets = [0, 0], sizes = [16, 32], strides = [1, 1]} : vector<16x128xbf16> to vector<16x32xbf16>
    %228 = vector.extract_strided_slice %225 {offsets = [0, 0], sizes = [16, 32], strides = [1, 1]} : vector<16x128xbf16> to vector<16x32xbf16>
    %cst_68 = arith.constant dense<0.000000e+00> : vector<16x16xf32>
    %229 = tpu.matmul %226, %227, %cst_68 {dimension_numbers = #tpu.dot_dimension_numbers<[1], [1], [0], [0], [0, 0, 1, 0], [], []>} : vector<16x32xbf16>, vector<16x32xbf16>, vector<16x16xf32> -> vector<16x16xf32>
    %cst_69 = arith.constant -1.000000e+30 : f32
    %230 = vector.broadcast %cst_69 : f32 to vector<16x16xf32>
    %231 = arith.select %219, %229, %230 : vector<16x16xi1>, vector<16x16xf32>
    %cst_70 = arith.constant dense<0xFF800000> : vector<16xf32>
    %232 = vector.multi_reduction <maximumf>, %231, %cst_70 [1] : vector<16x16xf32> to vector<16xf32>
    %233 = vector.shape_cast %232 : vector<16xf32> to vector<16x1xf32>
    %234 = vector.broadcast %233 : vector<16x1xf32> to vector<16x16xf32>
    %235 = arith.subf %231, %234 : vector<16x16xf32>
    %236 = math.exp %235 : vector<16x16xf32>
    %cst_71 = arith.constant dense<0.000000e+00> : vector<16xf32>
    %237 = vector.multi_reduction <add>, %236, %cst_71 [1] : vector<16x16xf32> to vector<16xf32>
    %238 = vector.shape_cast %237 : vector<16xf32> to vector<16x1xf32>
    %239 = tpu.reciprocal %238 {approx = true} : vector<16x1xf32> -> vector<16x1xf32>
    %240 = vector.broadcast %239 : vector<16x1xf32> to vector<16x16xf32>
    %241 = arith.mulf %236, %240 : vector<16x16xf32>
    %242 = arith.truncf %241 : vector<16x16xf32> to vector<16x16xbf16>
    %cst_72 = arith.constant dense<0.000000e+00> : vector<16x32xf32>
    %243 = tpu.matmul %242, %228, %cst_72 {dimension_numbers = #tpu.dot_dimension_numbers<[1], [0], [0], [1], [0, 0, 1, 1], [], []>} : vector<16x16xbf16>, vector<16x32xbf16>, vector<16x32xf32> -> vector<16x32xf32>
    %c32_73 = arith.constant 32 : index
    %c0_74 = arith.constant 0 : index
    %244 = vector.load %arg16[%c32_73, %c0_74] : memref<64x128xf32, #tpu.memory_space<vmem>>, vector<16x32xf32>
    tpu.vector_store %arg16[%c32_73, %c0_74], %243 {strides = array<i32>} : memref<64x128xf32, #tpu.memory_space<vmem>>, vector<16x32xf32>,
    %245 = vector.extract_strided_slice %221 {offsets = [0, 32], sizes = [16, 32], strides = [1, 1]} : vector<16x128xbf16> to vector<16x32xbf16>
    %246 = vector.extract_strided_slice %223 {offsets = [0, 32], sizes = [16, 32], strides = [1, 1]} : vector<16x128xbf16> to vector<16x32xbf16>
    %247 = vector.extract_strided_slice %225 {offsets = [0, 32], sizes = [16, 32], strides = [1, 1]} : vector<16x128xbf16> to vector<16x32xbf16>
    %cst_75 = arith.constant dense<0.000000e+00> : vector<16x16xf32>
    %248 = tpu.matmul %245, %246, %cst_75 {dimension_numbers = #tpu.dot_dimension_numbers<[1], [1], [0], [0], [0, 0, 1, 0], [], []>} : vector<16x32xbf16>, vector<16x32xbf16>, vector<16x16xf32> -> vector<16x16xf32>
    %cst_76 = arith.constant -1.000000e+30 : f32
    %249 = vector.broadcast %cst_76 : f32 to vector<16x16xf32>
    %250 = arith.select %219, %248, %249 : vector<16x16xi1>, vector<16x16xf32>
    %cst_77 = arith.constant dense<0xFF800000> : vector<16xf32>
    %251 = vector.multi_reduction <maximumf>, %250, %cst_77 [1] : vector<16x16xf32> to vector<16xf32>
    %252 = vector.shape_cast %251 : vector<16xf32> to vector<16x1xf32>
    %253 = vector.broadcast %252 : vector<16x1xf32> to vector<16x16xf32>
    %254 = arith.subf %250, %253 : vector<16x16xf32>
    %255 = math.exp %254 : vector<16x16xf32>
    %cst_78 = arith.constant dense<0.000000e+00> : vector<16xf32>
    %256 = vector.multi_reduction <add>, %255, %cst_78 [1] : vector<16x16xf32> to vector<16xf32>
    %257 = vector.shape_cast %256 : vector<16xf32> to vector<16x1xf32>
    %258 = tpu.reciprocal %257 {approx = true} : vector<16x1xf32> -> vector<16x1xf32>
    %259 = vector.broadcast %258 : vector<16x1xf32> to vector<16x16xf32>
    %260 = arith.mulf %255, %259 : vector<16x16xf32>
    %261 = arith.truncf %260 : vector<16x16xf32> to vector<16x16xbf16>
    %cst_79 = arith.constant dense<0.000000e+00> : vector<16x32xf32>
    %262 = tpu.matmul %261, %247, %cst_79 {dimension_numbers = #tpu.dot_dimension_numbers<[1], [0], [0], [1], [0, 0, 1, 1], [], []>} : vector<16x16xbf16>, vector<16x32xbf16>, vector<16x32xf32> -> vector<16x32xf32>
    %c32_80 = arith.constant 32 : index
    %c32_81 = arith.constant 32 : index
    %263 = vector.load %arg16[%c32_80, %c32_81] : memref<64x128xf32, #tpu.memory_space<vmem>>, vector<16x32xf32>
    tpu.vector_store %arg16[%c32_80, %c32_81], %262 {strides = array<i32>} : memref<64x128xf32, #tpu.memory_space<vmem>>, vector<16x32xf32>,
    %264 = vector.extract_strided_slice %221 {offsets = [0, 64], sizes = [16, 32], strides = [1, 1]} : vector<16x128xbf16> to vector<16x32xbf16>
    %265 = vector.extract_strided_slice %223 {offsets = [0, 64], sizes = [16, 32], strides = [1, 1]} : vector<16x128xbf16> to vector<16x32xbf16>
    %266 = vector.extract_strided_slice %225 {offsets = [0, 64], sizes = [16, 32], strides = [1, 1]} : vector<16x128xbf16> to vector<16x32xbf16>
    %cst_82 = arith.constant dense<0.000000e+00> : vector<16x16xf32>
    %267 = tpu.matmul %264, %265, %cst_82 {dimension_numbers = #tpu.dot_dimension_numbers<[1], [1], [0], [0], [0, 0, 1, 0], [], []>} : vector<16x32xbf16>, vector<16x32xbf16>, vector<16x16xf32> -> vector<16x16xf32>
    %cst_83 = arith.constant -1.000000e+30 : f32
    %268 = vector.broadcast %cst_83 : f32 to vector<16x16xf32>
    %269 = arith.select %219, %267, %268 : vector<16x16xi1>, vector<16x16xf32>
    %cst_84 = arith.constant dense<0xFF800000> : vector<16xf32>
    %270 = vector.multi_reduction <maximumf>, %269, %cst_84 [1] : vector<16x16xf32> to vector<16xf32>
    %271 = vector.shape_cast %270 : vector<16xf32> to vector<16x1xf32>
    %272 = vector.broadcast %271 : vector<16x1xf32> to vector<16x16xf32>
    %273 = arith.subf %269, %272 : vector<16x16xf32>
    %274 = math.exp %273 : vector<16x16xf32>
    %cst_85 = arith.constant dense<0.000000e+00> : vector<16xf32>
    %275 = vector.multi_reduction <add>, %274, %cst_85 [1] : vector<16x16xf32> to vector<16xf32>
    %276 = vector.shape_cast %275 : vector<16xf32> to vector<16x1xf32>
    %277 = tpu.reciprocal %276 {approx = true} : vector<16x1xf32> -> vector<16x1xf32>
    %278 = vector.broadcast %277 : vector<16x1xf32> to vector<16x16xf32>
    %279 = arith.mulf %274, %278 : vector<16x16xf32>
    %280 = arith.truncf %279 : vector<16x16xf32> to vector<16x16xbf16>
    %cst_86 = arith.constant dense<0.000000e+00> : vector<16x32xf32>
    %281 = tpu.matmul %280, %266, %cst_86 {dimension_numbers = #tpu.dot_dimension_numbers<[1], [0], [0], [1], [0, 0, 1, 1], [], []>} : vector<16x16xbf16>, vector<16x32xbf16>, vector<16x32xf32> -> vector<16x32xf32>
    %c32_87 = arith.constant 32 : index
    %c64_88 = arith.constant 64 : index
    %282 = vector.load %arg16[%c32_87, %c64_88] : memref<64x128xf32, #tpu.memory_space<vmem>>, vector<16x32xf32>
    tpu.vector_store %arg16[%c32_87, %c64_88], %281 {strides = array<i32>} : memref<64x128xf32, #tpu.memory_space<vmem>>, vector<16x32xf32>,
    %283 = vector.extract_strided_slice %221 {offsets = [0, 96], sizes = [16, 32], strides = [1, 1]} : vector<16x128xbf16> to vector<16x32xbf16>
    %284 = vector.extract_strided_slice %223 {offsets = [0, 96], sizes = [16, 32], strides = [1, 1]} : vector<16x128xbf16> to vector<16x32xbf16>
    %285 = vector.extract_strided_slice %225 {offsets = [0, 96], sizes = [16, 32], strides = [1, 1]} : vector<16x128xbf16> to vector<16x32xbf16>
    %cst_89 = arith.constant dense<0.000000e+00> : vector<16x16xf32>
    %286 = tpu.matmul %283, %284, %cst_89 {dimension_numbers = #tpu.dot_dimension_numbers<[1], [1], [0], [0], [0, 0, 1, 0], [], []>} : vector<16x32xbf16>, vector<16x32xbf16>, vector<16x16xf32> -> vector<16x16xf32>
    %cst_90 = arith.constant -1.000000e+30 : f32
    %287 = vector.broadcast %cst_90 : f32 to vector<16x16xf32>
    %288 = arith.select %219, %286, %287 : vector<16x16xi1>, vector<16x16xf32>
    %cst_91 = arith.constant dense<0xFF800000> : vector<16xf32>
    %289 = vector.multi_reduction <maximumf>, %288, %cst_91 [1] : vector<16x16xf32> to vector<16xf32>
    %290 = vector.shape_cast %289 : vector<16xf32> to vector<16x1xf32>
    %291 = vector.broadcast %290 : vector<16x1xf32> to vector<16x16xf32>
    %292 = arith.subf %288, %291 : vector<16x16xf32>
    %293 = math.exp %292 : vector<16x16xf32>
    %cst_92 = arith.constant dense<0.000000e+00> : vector<16xf32>
    %294 = vector.multi_reduction <add>, %293, %cst_92 [1] : vector<16x16xf32> to vector<16xf32>
    %295 = vector.shape_cast %294 : vector<16xf32> to vector<16x1xf32>
    %296 = tpu.reciprocal %295 {approx = true} : vector<16x1xf32> -> vector<16x1xf32>
    %297 = vector.broadcast %296 : vector<16x1xf32> to vector<16x16xf32>
    %298 = arith.mulf %293, %297 : vector<16x16xf32>
    %299 = arith.truncf %298 : vector<16x16xf32> to vector<16x16xbf16>
    %cst_93 = arith.constant dense<0.000000e+00> : vector<16x32xf32>
    %300 = tpu.matmul %299, %285, %cst_93 {dimension_numbers = #tpu.dot_dimension_numbers<[1], [0], [0], [1], [0, 0, 1, 1], [], []>} : vector<16x16xbf16>, vector<16x32xbf16>, vector<16x32xf32> -> vector<16x32xf32>
    %c32_94 = arith.constant 32 : index
    %c96_95 = arith.constant 96 : index
    %301 = vector.load %arg16[%c32_94, %c96_95] : memref<64x128xf32, #tpu.memory_space<vmem>>, vector<16x32xf32>
    tpu.vector_store %arg16[%c32_94, %c96_95], %300 {strides = array<i32>} : memref<64x128xf32, #tpu.memory_space<vmem>>, vector<16x32xf32>,
    %c4_i32_96 = arith.constant 4 : i32
    %302 = arith.muli %arg0, %c4_i32_96 : i32
    %c3_i32 = arith.constant 3 : i32
    %303 = arith.addi %302, %c3_i32 : i32
    %304 = arith.index_cast %303 : i32 to index
    %305 = memref.load %arg1[%304] : memref<8xi32, #tpu.memory_space<smem>>
    %306 = vector.broadcast %305 : i32 to vector<16x16xi32>
    %307 = arith.cmpi slt, %33, %306 : vector<16x16xi32>
    %308 = arith.andi %34, %307 : vector<16x16xi1>
    %309 = vector.extract_strided_slice %29 {offsets = [48, 0], sizes = [16, 128], strides = [1, 1]} : vector<64x128xf32> to vector<16x128xf32>
    %310 = arith.truncf %309 : vector<16x128xf32> to vector<16x128xbf16>
    %311 = vector.extract_strided_slice %30 {offsets = [48, 0], sizes = [16, 128], strides = [1, 1]} : vector<64x128xf32> to vector<16x128xf32>
    %312 = arith.truncf %311 : vector<16x128xf32> to vector<16x128xbf16>
    %313 = vector.extract_strided_slice %31 {offsets = [48, 0], sizes = [16, 128], strides = [1, 1]} : vector<64x128xf32> to vector<16x128xf32>
    %314 = arith.truncf %313 : vector<16x128xf32> to vector<16x128xbf16>
    %315 = vector.extract_strided_slice %310 {offsets = [0, 0], sizes = [16, 32], strides = [1, 1]} : vector<16x128xbf16> to vector<16x32xbf16>
    %316 = vector.extract_strided_slice %312 {offsets = [0, 0], sizes = [16, 32], strides = [1, 1]} : vector<16x128xbf16> to vector<16x32xbf16>
    %317 = vector.extract_strided_slice %314 {offsets = [0, 0], sizes = [16, 32], strides = [1, 1]} : vector<16x128xbf16> to vector<16x32xbf16>
    %cst_97 = arith.constant dense<0.000000e+00> : vector<16x16xf32>
    %318 = tpu.matmul %315, %316, %cst_97 {dimension_numbers = #tpu.dot_dimension_numbers<[1], [1], [0], [0], [0, 0, 1, 0], [], []>} : vector<16x32xbf16>, vector<16x32xbf16>, vector<16x16xf32> -> vector<16x16xf32>
    %cst_98 = arith.constant -1.000000e+30 : f32
    %319 = vector.broadcast %cst_98 : f32 to vector<16x16xf32>
    %320 = arith.select %308, %318, %319 : vector<16x16xi1>, vector<16x16xf32>
    %cst_99 = arith.constant dense<0xFF800000> : vector<16xf32>
    %321 = vector.multi_reduction <maximumf>, %320, %cst_99 [1] : vector<16x16xf32> to vector<16xf32>
    %322 = vector.shape_cast %321 : vector<16xf32> to vector<16x1xf32>
    %323 = vector.broadcast %322 : vector<16x1xf32> to vector<16x16xf32>
    %324 = arith.subf %320, %323 : vector<16x16xf32>
    %325 = math.exp %324 : vector<16x16xf32>
    %cst_100 = arith.constant dense<0.000000e+00> : vector<16xf32>
    %326 = vector.multi_reduction <add>, %325, %cst_100 [1] : vector<16x16xf32> to vector<16xf32>
    %327 = vector.shape_cast %326 : vector<16xf32> to vector<16x1xf32>
    %328 = tpu.reciprocal %327 {approx = true} : vector<16x1xf32> -> vector<16x1xf32>
    %329 = vector.broadcast %328 : vector<16x1xf32> to vector<16x16xf32>
    %330 = arith.mulf %325, %329 : vector<16x16xf32>
    %331 = arith.truncf %330 : vector<16x16xf32> to vector<16x16xbf16>
    %cst_101 = arith.constant dense<0.000000e+00> : vector<16x32xf32>
    %332 = tpu.matmul %331, %317, %cst_101 {dimension_numbers = #tpu.dot_dimension_numbers<[1], [0], [0], [1], [0, 0, 1, 1], [], []>} : vector<16x16xbf16>, vector<16x32xbf16>, vector<16x32xf32> -> vector<16x32xf32>
    %c48 = arith.constant 48 : index
    %c0_102 = arith.constant 0 : index
    %333 = vector.load %arg16[%c48, %c0_102] : memref<64x128xf32, #tpu.memory_space<vmem>>, vector<16x32xf32>
    tpu.vector_store %arg16[%c48, %c0_102], %332 {strides = array<i32>} : memref<64x128xf32, #tpu.memory_space<vmem>>, vector<16x32xf32>,
    %334 = vector.extract_strided_slice %310 {offsets = [0, 32], sizes = [16, 32], strides = [1, 1]} : vector<16x128xbf16> to vector<16x32xbf16>
    %335 = vector.extract_strided_slice %312 {offsets = [0, 32], sizes = [16, 32], strides = [1, 1]} : vector<16x128xbf16> to vector<16x32xbf16>
    %336 = vector.extract_strided_slice %314 {offsets = [0, 32], sizes = [16, 32], strides = [1, 1]} : vector<16x128xbf16> to vector<16x32xbf16>
    %cst_103 = arith.constant dense<0.000000e+00> : vector<16x16xf32>
    %337 = tpu.matmul %334, %335, %cst_103 {dimension_numbers = #tpu.dot_dimension_numbers<[1], [1], [0], [0], [0, 0, 1, 0], [], []>} : vector<16x32xbf16>, vector<16x32xbf16>, vector<16x16xf32> -> vector<16x16xf32>
    %cst_104 = arith.constant -1.000000e+30 : f32
    %338 = vector.broadcast %cst_104 : f32 to vector<16x16xf32>
    %339 = arith.select %308, %337, %338 : vector<16x16xi1>, vector<16x16xf32>
    %cst_105 = arith.constant dense<0xFF800000> : vector<16xf32>
    %340 = vector.multi_reduction <maximumf>, %339, %cst_105 [1] : vector<16x16xf32> to vector<16xf32>
    %341 = vector.shape_cast %340 : vector<16xf32> to vector<16x1xf32>
    %342 = vector.broadcast %341 : vector<16x1xf32> to vector<16x16xf32>
    %343 = arith.subf %339, %342 : vector<16x16xf32>
    %344 = math.exp %343 : vector<16x16xf32>
    %cst_106 = arith.constant dense<0.000000e+00> : vector<16xf32>
    %345 = vector.multi_reduction <add>, %344, %cst_106 [1] : vector<16x16xf32> to vector<16xf32>
    %346 = vector.shape_cast %345 : vector<16xf32> to vector<16x1xf32>
    %347 = tpu.reciprocal %346 {approx = true} : vector<16x1xf32> -> vector<16x1xf32>
    %348 = vector.broadcast %347 : vector<16x1xf32> to vector<16x16xf32>
    %349 = arith.mulf %344, %348 : vector<16x16xf32>
    %350 = arith.truncf %349 : vector<16x16xf32> to vector<16x16xbf16>
    %cst_107 = arith.constant dense<0.000000e+00> : vector<16x32xf32>
    %351 = tpu.matmul %350, %336, %cst_107 {dimension_numbers = #tpu.dot_dimension_numbers<[1], [0], [0], [1], [0, 0, 1, 1], [], []>} : vector<16x16xbf16>, vector<16x32xbf16>, vector<16x32xf32> -> vector<16x32xf32>
    %c48_108 = arith.constant 48 : index
    %c32_109 = arith.constant 32 : index
    %352 = vector.load %arg16[%c48_108, %c32_109] : memref<64x128xf32, #tpu.memory_space<vmem>>, vector<16x32xf32>
    tpu.vector_store %arg16[%c48_108, %c32_109], %351 {strides = array<i32>} : memref<64x128xf32, #tpu.memory_space<vmem>>, vector<16x32xf32>,
    %353 = vector.extract_strided_slice %310 {offsets = [0, 64], sizes = [16, 32], strides = [1, 1]} : vector<16x128xbf16> to vector<16x32xbf16>
    %354 = vector.extract_strided_slice %312 {offsets = [0, 64], sizes = [16, 32], strides = [1, 1]} : vector<16x128xbf16> to vector<16x32xbf16>
    %355 = vector.extract_strided_slice %314 {offsets = [0, 64], sizes = [16, 32], strides = [1, 1]} : vector<16x128xbf16> to vector<16x32xbf16>
    %cst_110 = arith.constant dense<0.000000e+00> : vector<16x16xf32>
    %356 = tpu.matmul %353, %354, %cst_110 {dimension_numbers = #tpu.dot_dimension_numbers<[1], [1], [0], [0], [0, 0, 1, 0], [], []>} : vector<16x32xbf16>, vector<16x32xbf16>, vector<16x16xf32> -> vector<16x16xf32>
    %cst_111 = arith.constant -1.000000e+30 : f32
    %357 = vector.broadcast %cst_111 : f32 to vector<16x16xf32>
    %358 = arith.select %308, %356, %357 : vector<16x16xi1>, vector<16x16xf32>
    %cst_112 = arith.constant dense<0xFF800000> : vector<16xf32>
    %359 = vector.multi_reduction <maximumf>, %358, %cst_112 [1] : vector<16x16xf32> to vector<16xf32>
    %360 = vector.shape_cast %359 : vector<16xf32> to vector<16x1xf32>
    %361 = vector.broadcast %360 : vector<16x1xf32> to vector<16x16xf32>
    %362 = arith.subf %358, %361 : vector<16x16xf32>
    %363 = math.exp %362 : vector<16x16xf32>
    %cst_113 = arith.constant dense<0.000000e+00> : vector<16xf32>
    %364 = vector.multi_reduction <add>, %363, %cst_113 [1] : vector<16x16xf32> to vector<16xf32>
    %365 = vector.shape_cast %364 : vector<16xf32> to vector<16x1xf32>
    %366 = tpu.reciprocal %365 {approx = true} : vector<16x1xf32> -> vector<16x1xf32>
    %367 = vector.broadcast %366 : vector<16x1xf32> to vector<16x16xf32>
    %368 = arith.mulf %363, %367 : vector<16x16xf32>
    %369 = arith.truncf %368 : vector<16x16xf32> to vector<16x16xbf16>
    %cst_114 = arith.constant dense<0.000000e+00> : vector<16x32xf32>
    %370 = tpu.matmul %369, %355, %cst_114 {dimension_numbers = #tpu.dot_dimension_numbers<[1], [0], [0], [1], [0, 0, 1, 1], [], []>} : vector<16x16xbf16>, vector<16x32xbf16>, vector<16x32xf32> -> vector<16x32xf32>
    %c48_115 = arith.constant 48 : index
    %c64_116 = arith.constant 64 : index
    %371 = vector.load %arg16[%c48_115, %c64_116] : memref<64x128xf32, #tpu.memory_space<vmem>>, vector<16x32xf32>
    tpu.vector_store %arg16[%c48_115, %c64_116], %370 {strides = array<i32>} : memref<64x128xf32, #tpu.memory_space<vmem>>, vector<16x32xf32>,
    %372 = vector.extract_strided_slice %310 {offsets = [0, 96], sizes = [16, 32], strides = [1, 1]} : vector<16x128xbf16> to vector<16x32xbf16>
    %373 = vector.extract_strided_slice %312 {offsets = [0, 96], sizes = [16, 32], strides = [1, 1]} : vector<16x128xbf16> to vector<16x32xbf16>
    %374 = vector.extract_strided_slice %314 {offsets = [0, 96], sizes = [16, 32], strides = [1, 1]} : vector<16x128xbf16> to vector<16x32xbf16>
    %cst_117 = arith.constant dense<0.000000e+00> : vector<16x16xf32>
    %375 = tpu.matmul %372, %373, %cst_117 {dimension_numbers = #tpu.dot_dimension_numbers<[1], [1], [0], [0], [0, 0, 1, 0], [], []>} : vector<16x32xbf16>, vector<16x32xbf16>, vector<16x16xf32> -> vector<16x16xf32>
    %cst_118 = arith.constant -1.000000e+30 : f32
    %376 = vector.broadcast %cst_118 : f32 to vector<16x16xf32>
    %377 = arith.select %308, %375, %376 : vector<16x16xi1>, vector<16x16xf32>
    %cst_119 = arith.constant dense<0xFF800000> : vector<16xf32>
    %378 = vector.multi_reduction <maximumf>, %377, %cst_119 [1] : vector<16x16xf32> to vector<16xf32>
    %379 = vector.shape_cast %378 : vector<16xf32> to vector<16x1xf32>
    %380 = vector.broadcast %379 : vector<16x1xf32> to vector<16x16xf32>
    %381 = arith.subf %377, %380 : vector<16x16xf32>
    %382 = math.exp %381 : vector<16x16xf32>
    %cst_120 = arith.constant dense<0.000000e+00> : vector<16xf32>
    %383 = vector.multi_reduction <add>, %382, %cst_120 [1] : vector<16x16xf32> to vector<16xf32>
    %384 = vector.shape_cast %383 : vector<16xf32> to vector<16x1xf32>
    %385 = tpu.reciprocal %384 {approx = true} : vector<16x1xf32> -> vector<16x1xf32>
    %386 = vector.broadcast %385 : vector<16x1xf32> to vector<16x16xf32>
    %387 = arith.mulf %382, %386 : vector<16x16xf32>
    %388 = arith.truncf %387 : vector<16x16xf32> to vector<16x16xbf16>
    %cst_121 = arith.constant dense<0.000000e+00> : vector<16x32xf32>
    %389 = tpu.matmul %388, %374, %cst_121 {dimension_numbers = #tpu.dot_dimension_numbers<[1], [0], [0], [1], [0, 0, 1, 1], [], []>} : vector<16x16xbf16>, vector<16x32xbf16>, vector<16x32xf32> -> vector<16x32xf32>
    %c48_122 = arith.constant 48 : index
    %c96_123 = arith.constant 96 : index
    %390 = vector.load %arg16[%c48_122, %c96_123] : memref<64x128xf32, #tpu.memory_space<vmem>>, vector<16x32xf32>
    tpu.vector_store %arg16[%c48_122, %c96_123], %389 {strides = array<i32>} : memref<64x128xf32, #tpu.memory_space<vmem>>, vector<16x32xf32>,
    %c0_124 = arith.constant 0 : index
    %c0_125 = arith.constant 0 : index
    %391 = vector.load %arg16[%c0_124, %c0_125] : memref<64x128xf32, #tpu.memory_space<vmem>>, vector<64x128xf32>
    %392 = arith.truncf %391 : vector<64x128xf32> to vector<64x128xbf16>
    %c0_126 = arith.constant 0 : index
    %c0_127 = arith.constant 0 : index
    %393 = vector.load %arg7[%c0_126, %c0_127] : memref<128x128xbf16, #tpu.memory_space<vmem>>, vector<128x128xbf16>
    %cst_128 = arith.constant dense<0.000000e+00> : vector<64x128xf32>
    %394 = tpu.matmul %392, %393, %cst_128 {dimension_numbers = #tpu.dot_dimension_numbers<[1], [0], [0], [1], [0, 0, 1, 1], [], []>} : vector<64x128xbf16>, vector<128x128xbf16>, vector<64x128xf32> -> vector<64x128xf32>
    %c0_129 = arith.constant 0 : index
    %c0_130 = arith.constant 0 : index
    %395 = vector.load %arg8[%c0_129, %c0_130] : memref<1x128xf32, #tpu.memory_space<vmem>>, vector<1x128xf32>
    %396 = vector.broadcast %395 : vector<1x128xf32> to vector<64x128xf32>
    %397 = arith.addf %394, %396 : vector<64x128xf32>
    %398 = arith.addf %0, %397 : vector<64x128xf32>
    %c0_131 = arith.constant 0 : index
    %c0_132 = arith.constant 0 : index
    %399 = vector.load %arg9[%c0_131, %c0_132] : memref<1x128xf32, #tpu.memory_space<vmem>>, vector<1x128xf32>
    %c0_133 = arith.constant 0 : index
    %c0_134 = arith.constant 0 : index
    %400 = vector.load %arg10[%c0_133, %c0_134] : memref<1x128xf32, #tpu.memory_space<vmem>>, vector<1x128xf32>
    %cst_135 = arith.constant dense<0.000000e+00> : vector<64xf32>
    %401 = vector.multi_reduction <add>, %398, %cst_135 [1] : vector<64x128xf32> to vector<64xf32>
    %402 = vector.shape_cast %401 : vector<64xf32> to vector<64x1xf32>
    %cst_136 = arith.constant 1.280000e+02 : f32
    %403 = vector.broadcast %cst_136 : f32 to vector<64x1xf32>
    %404 = arith.divf %402, %403 : vector<64x1xf32>
    %405 = vector.broadcast %404 : vector<64x1xf32> to vector<64x128xf32>
    %406 = arith.subf %398, %405 : vector<64x128xf32>
    %407 = arith.mulf %406, %406 : vector<64x128xf32>
    %cst_137 = arith.constant dense<0.000000e+00> : vector<64xf32>
    %408 = vector.multi_reduction <add>, %407, %cst_137 [1] : vector<64x128xf32> to vector<64xf32>
    %409 = vector.shape_cast %408 : vector<64xf32> to vector<64x1xf32>
    %cst_138 = arith.constant 1.280000e+02 : f32
    %410 = vector.broadcast %cst_138 : f32 to vector<64x1xf32>
    %411 = arith.divf %409, %410 : vector<64x1xf32>
    %cst_139 = arith.constant 9.99999974E-6 : f32
    %412 = vector.broadcast %cst_139 : f32 to vector<64x1xf32>
    %413 = arith.addf %411, %412 : vector<64x1xf32>
    %414 = math.rsqrt %413 : vector<64x1xf32>
    %415 = vector.broadcast %414 : vector<64x1xf32> to vector<64x128xf32>
    %416 = arith.mulf %406, %415 : vector<64x128xf32>
    %417 = vector.broadcast %399 : vector<1x128xf32> to vector<64x128xf32>
    %418 = arith.mulf %416, %417 : vector<64x128xf32>
    %419 = vector.broadcast %400 : vector<1x128xf32> to vector<64x128xf32>
    %420 = arith.addf %418, %419 : vector<64x128xf32>
    %421 = arith.truncf %420 : vector<64x128xf32> to vector<64x128xbf16>
    %c0_140 = arith.constant 0 : index
    %c0_141 = arith.constant 0 : index
    %422 = vector.load %arg11[%c0_140, %c0_141] : memref<128x512xbf16, #tpu.memory_space<vmem>>, vector<128x512xbf16>
    %cst_142 = arith.constant dense<0.000000e+00> : vector<64x512xf32>
    %423 = tpu.matmul %421, %422, %cst_142 {dimension_numbers = #tpu.dot_dimension_numbers<[1], [0], [0], [1], [0, 0, 1, 1], [], []>} : vector<64x128xbf16>, vector<128x512xbf16>, vector<64x512xf32> -> vector<64x512xf32>
    %c0_143 = arith.constant 0 : index
    %c0_144 = arith.constant 0 : index
    %424 = vector.load %arg12[%c0_143, %c0_144] : memref<1x512xf32, #tpu.memory_space<vmem>>, vector<1x512xf32>
    %425 = vector.broadcast %424 : vector<1x512xf32> to vector<64x512xf32>
    %426 = arith.addf %423, %425 : vector<64x512xf32>
    %cst_145 = arith.constant 0.000000e+00 : f32
    %427 = vector.broadcast %cst_145 : f32 to vector<64x512xf32>
    %428 = arith.cmpf ogt, %426, %427 : vector<64x512xf32>
    %cst_146 = arith.constant 0.000000e+00 : f32
    %429 = vector.broadcast %cst_146 : f32 to vector<64x512xf32>
    %430 = arith.minimumf %426, %429 : vector<64x512xf32>
    %431 = math.exp %430 : vector<64x512xf32>
    %cst_147 = arith.constant 1.000000e+00 : f32
    %432 = vector.broadcast %cst_147 : f32 to vector<64x512xf32>
    %433 = arith.subf %431, %432 : vector<64x512xf32>
    %434 = arith.select %428, %426, %433 : vector<64x512xi1>, vector<64x512xf32>
    %435 = arith.truncf %434 : vector<64x512xf32> to vector<64x512xbf16>
    %c0_148 = arith.constant 0 : index
    %c0_149 = arith.constant 0 : index
    %436 = vector.load %arg13[%c0_148, %c0_149] : memref<512x128xbf16, #tpu.memory_space<vmem>>, vector<512x128xbf16>
    %cst_150 = arith.constant dense<0.000000e+00> : vector<64x128xf32>
    %437 = tpu.matmul %435, %436, %cst_150 {dimension_numbers = #tpu.dot_dimension_numbers<[1], [0], [0], [1], [0, 0, 1, 1], [], []>} : vector<64x512xbf16>, vector<512x128xbf16>, vector<64x128xf32> -> vector<64x128xf32>
    %c0_151 = arith.constant 0 : index
    %c0_152 = arith.constant 0 : index
    %438 = vector.load %arg14[%c0_151, %c0_152] : memref<1x128xf32, #tpu.memory_space<vmem>>, vector<1x128xf32>
    %439 = vector.broadcast %438 : vector<1x128xf32> to vector<64x128xf32>
    %440 = arith.addf %437, %439 : vector<64x128xf32>
    %441 = arith.addf %398, %440 : vector<64x128xf32>
    %c0_153 = arith.constant 0 : index
    %c0_154 = arith.constant 0 : index
    %442 = vector.load %arg15[%c0_153, %c0_154] : memref<64x128xf32, #tpu.memory_space<vmem>>, vector<64x128xf32>
    tpu.vector_store %arg15[%c0_153, %c0_154], %441 {strides = array<i32>} : memref<64x128xf32, #tpu.memory_space<vmem>>, vector<64x128xf32>,
    return
  }
  func.func @transform_0(%arg0: i32, %arg1: memref<8xi32, #tpu.memory_space<smem>>) -> (i32, i32) {
    %c0_i32 = arith.constant 0 : i32
    %c0_i32_0 = arith.constant 0 : i32
    return %arg0, %c0_i32 : i32, i32
  }
  func.func @transform_1(%arg0: i32, %arg1: memref<8xi32, #tpu.memory_space<smem>>) -> (i32, i32) {
    %c0_i32 = arith.constant 0 : i32
    %c0_i32_0 = arith.constant 0 : i32
    %c0_i32_1 = arith.constant 0 : i32
    return %c0_i32, %c0_i32_0 : i32, i32
  }
  func.func @transform_2(%arg0: i32, %arg1: memref<8xi32, #tpu.memory_space<smem>>) -> (i32, i32) {
    %c0_i32 = arith.constant 0 : i32
    %c0_i32_0 = arith.constant 0 : i32
    %c0_i32_1 = arith.constant 0 : i32
    return %c0_i32, %c0_i32_0 : i32, i32
  }
  func.func @transform_3(%arg0: i32, %arg1: memref<8xi32, #tpu.memory_space<smem>>) -> (i32, i32) {
    %c0_i32 = arith.constant 0 : i32
    %c0_i32_0 = arith.constant 0 : i32
    %c0_i32_1 = arith.constant 0 : i32
    return %c0_i32, %c0_i32_0 : i32, i32
  }
  func.func @transform_4(%arg0: i32, %arg1: memref<8xi32, #tpu.memory_space<smem>>) -> (i32, i32) {
    %c0_i32 = arith.constant 0 : i32
    %c0_i32_0 = arith.constant 0 : i32
    %c0_i32_1 = arith.constant 0 : i32
    return %c0_i32, %c0_i32_0 : i32, i32
  }
  func.func @transform_5(%arg0: i32, %arg1: memref<8xi32, #tpu.memory_space<smem>>) -> (i32, i32) {
    %c0_i32 = arith.constant 0 : i32
    %c0_i32_0 = arith.constant 0 : i32
    %c0_i32_1 = arith.constant 0 : i32
    return %c0_i32, %c0_i32_0 : i32, i32
  }
  func.func @transform_6(%arg0: i32, %arg1: memref<8xi32, #tpu.memory_space<smem>>) -> (i32, i32) {
    %c0_i32 = arith.constant 0 : i32
    %c0_i32_0 = arith.constant 0 : i32
    %c0_i32_1 = arith.constant 0 : i32
    return %c0_i32, %c0_i32_0 : i32, i32
  }
  func.func @transform_7(%arg0: i32, %arg1: memref<8xi32, #tpu.memory_space<smem>>) -> (i32, i32) {
    %c0_i32 = arith.constant 0 : i32
    %c0_i32_0 = arith.constant 0 : i32
    %c0_i32_1 = arith.constant 0 : i32
    return %c0_i32, %c0_i32_0 : i32, i32
  }
  func.func @transform_8(%arg0: i32, %arg1: memref<8xi32, #tpu.memory_space<smem>>) -> (i32, i32) {
    %c0_i32 = arith.constant 0 : i32
    %c0_i32_0 = arith.constant 0 : i32
    %c0_i32_1 = arith.constant 0 : i32
    return %c0_i32, %c0_i32_0 : i32, i32
  }
  func.func @transform_9(%arg0: i32, %arg1: memref<8xi32, #tpu.memory_space<smem>>) -> (i32, i32) {
    %c0_i32 = arith.constant 0 : i32
    %c0_i32_0 = arith.constant 0 : i32
    %c0_i32_1 = arith.constant 0 : i32
    return %c0_i32, %c0_i32_0 : i32, i32
  }
  func.func @transform_10(%arg0: i32, %arg1: memref<8xi32, #tpu.memory_space<smem>>) -> (i32, i32) {
    %c0_i32 = arith.constant 0 : i32
    %c0_i32_0 = arith.constant 0 : i32
    %c0_i32_1 = arith.constant 0 : i32
    return %c0_i32, %c0_i32_0 : i32, i32
  }
  func.func @transform_11(%arg0: i32, %arg1: memref<8xi32, #tpu.memory_space<smem>>) -> (i32, i32) {
    %c0_i32 = arith.constant 0 : i32
    %c0_i32_0 = arith.constant 0 : i32
    %c0_i32_1 = arith.constant 0 : i32
    return %c0_i32, %c0_i32_0 : i32, i32
  }
  func.func @transform_12(%arg0: i32, %arg1: memref<8xi32, #tpu.memory_space<smem>>) -> (i32, i32) {
    %c0_i32 = arith.constant 0 : i32
    %c0_i32_0 = arith.constant 0 : i32
    %c0_i32_1 = arith.constant 0 : i32
    return %c0_i32, %c0_i32_0 : i32, i32
  }
  func.func @transform_13(%arg0: i32, %arg1: memref<8xi32, #tpu.memory_space<smem>>) -> (i32, i32) {
    %c0_i32 = arith.constant 0 : i32
    %c0_i32_0 = arith.constant 0 : i32
    return %arg0, %c0_i32 : i32, i32
  }
}

</mosaic_0001>

<llo_original>
// kernel: tpu_custom_call.1
$region0: #{tpu_custom_call.1}
  #allocation0 [shape = 'u32[]', space=smem, size = 0x4, offset = 0x4, fixed_abs, tag = 'smem constant byte address 0x4 - core index']
  #allocation1 [shape = 'u32[72,128]{1,0:T(1,128)}', space=vmem, size = 0x9000, scoped, tag = 'internal scratch']
  #allocation2 [shape = 'f32[64,128]{1,0:T(8,128)}', space=vmem, size = 0x8000, scoped, tag = 'scratch operand']
  #allocation3 [shape = 's32[1]{0}', space=sflag, size = 0x4, scoped, tag = 'scoped memory for tpu_custom_call.1']
  #allocation4 [shape = 'u8[512]{0}', space=smem, size = 0x200, scoped, tag = 'prefetched SMEM operand 0']
  %s0 = inlined_call_operand.hbm [shape: s32[8], index: 0, kind: input, shape index: {}]
  %s1 = inlined_call_operand.hbm [shape: f32[128,128], index: 1, kind: input, shape index: {}]
  %s2 = inlined_call_operand.hbm [shape: f32[1,128], index: 2, kind: input, shape index: {}]
  %s3 = inlined_call_operand.hbm [shape: f32[1,128], index: 3, kind: input, shape index: {}]
  %s4 = inlined_call_operand.hbm [shape: bf16[128,384], index: 4, kind: input, shape index: {}]
  %s5 = inlined_call_operand.vmem [shape: f32[1,384], index: 5, kind: input, shape index: {}]
  %s6 = inlined_call_operand.hbm [shape: bf16[128,128], index: 6, kind: input, shape index: {}]
  %s7 = inlined_call_operand.hbm [shape: f32[1,128], index: 7, kind: input, shape index: {}]
  %s8 = inlined_call_operand.hbm [shape: f32[1,128], index: 8, kind: input, shape index: {}]
  %s9 = inlined_call_operand.vmem [shape: f32[1,128], index: 9, kind: input, shape index: {}]
  %s10 = inlined_call_operand.hbm [shape: bf16[128,512], index: 10, kind: input, shape index: {}]
  %s11 = inlined_call_operand.vmem [shape: f32[1,512], index: 11, kind: input, shape index: {}]
  %s12 = inlined_call_operand.hbm [shape: bf16[512,128], index: 12, kind: input, shape index: {}]
  %s13 = inlined_call_operand.vmem [shape: f32[1,128], index: 13, kind: input, shape index: {}]
  %s14 = inlined_call_operand.hbm [shape: f32[128,128], index: 14, kind: output, shape index: {}]
  %s15 = sld [smem:[#allocation0]]
  $region121: #{tpu_custom_call.1} parent=0
    _
  %s17 = ssub.s32 1, %s15
  %s18 = scalar_select 0, %s17, %s15
  %s20 = sshll.u32 %s0, 4
  %s21 = int_to_ptr.hbm [resolvable:$true] %s20
  %23 = dma.hbm_to_smem %s21, 16, [#allocation4], [#allocation3]
  %25 = dma.done [#allocation3], 16
  %26 = sfence
  $region1: #{tpu_custom_call.1} parent=0
    #allocation5 [shape = 'u8[65536]{0}', space=vmem, size = 0x10000, scoped, tag = 'input window, operand 1']
    #allocation6 [shape = 's32[2]{0}', space=sflag, size = 0x8, scoped, tag = 'scoped memory for tpu_custom_call.1']
    #allocation7 [shape = 's32[2]{0}', space=sflag, size = 0x8, scoped, tag = 'scoped memory for tpu_custom_call.1']
    #allocation8 [shape = 'u8[512]{0}', space=vmem, size = 0x400, scoped, tag = 'input window, operand 2, single buffered']
    #allocation9 [shape = 's32[1]{0}', space=sflag, size = 0x4, scoped, tag = 'scoped memory for tpu_custom_call.1']
    #allocation10 [shape = 'u8[512]{0}', space=vmem, size = 0x400, scoped, tag = 'input window, operand 3, single buffered']
    #allocation11 [shape = 'u8[98304]{0}', space=vmem, size = 0x18000, scoped, tag = 'input window, operand 4, single buffered']
    #allocation12 [shape = 's32[1]{0}', space=sflag, size = 0x4, scoped, tag = 'scoped memory for tpu_custom_call.1']
    #allocation13 [shape = 'u8[32768]{0}', space=vmem, size = 0x8000, scoped, tag = 'input window, operand 6, single buffered']
    #allocation14 [shape = 'u8[512]{0}', space=vmem, size = 0x400, scoped, tag = 'input window, operand 7, single buffered']
    #allocation15 [shape = 's32[1]{0}', space=sflag, size = 0x4, scoped, tag = 'scoped memory for tpu_custom_call.1']
    #allocation16 [shape = 'u8[512]{0}', space=vmem, size = 0x400, scoped, tag = 'input window, operand 8, single buffered']
    #allocation17 [shape = 'u8[131072]{0}', space=vmem, size = 0x20000, scoped, tag = 'input window, operand 10, single buffered']
    #allocation18 [shape = 's32[1]{0}', space=sflag, size = 0x4, scoped, tag = 'scoped memory for tpu_custom_call.1']
    #allocation19 [shape = 'u8[131072]{0}', space=vmem, size = 0x20000, scoped, tag = 'input window, operand 12, single buffered']
    #allocation20 [shape = 'u8[65536]{0}', space=vmem, size = 0x10000, scoped, tag = 'output window, operand 0']
    %27 = vsyncpa [#allocation6], 0
    %s28 = scalar_lea.sflag [#allocation6], 1
    %29 = vsyncpa %s28, 0
    %30 = vsyncpa [#allocation9], 0
    %31 = vsyncpa [#allocation12], 0
    %32 = vsyncpa [#allocation15], 0
    %33 = vsyncpa [#allocation18], 0
    %34 = vsyncpa [#allocation7], 0
    %s35 = scalar_lea.sflag [#allocation7], 1
    %36 = vsyncpa %s35, 0
    loop: start=0, step=1, limit=4
    $region2: #{tpu_custom_call.1} parent=1 // loop_pre_header
      _
    $region3: #{tpu_custom_call.1} parent=1 // loop_header
      %s38 = sphi 0, %s42
      %p39 = scmp.ge.s32.totalorder %s38, 4
      %s48 = sphi 0, %s50
      %s51 = sphi 0, %s48
      %s52 = sphi 0, %s51
      %s68 = sphi 0, %s52
      %s72 = sphi 0, %s72
      %s74 = sphi 0, %s72
      %s75 = sphi 0, %s74
      %s89 = sphi 0, %s75
      %s93 = sphi 0, %s93
      %s95 = sphi 0, %s93
      %s96 = sphi 0, %s95
      %s110 = sphi 0, %s96
      %s114 = sphi 0, %s114
      %s116 = sphi 0, %s114
      %s117 = sphi 0, %s116
      %s131 = sphi 0, %s117
      %s135 = sphi 0, %s135
      %s137 = sphi 0, %s135
      %s138 = sphi 0, %s137
      %s152 = sphi 0, %s138
      %s156 = sphi 0, %s156
      %s158 = sphi 0, %s156
      %s159 = sphi 0, %s158
      %s173 = sphi 0, %s159
      %s177 = sphi 0, %s177
      %s179 = sphi 0, %s177
      %s180 = sphi 0, %s179
      %s194 = sphi 0, %s180
      %s198 = sphi 0, %s198
      %s200 = sphi 0, %s198
      %s201 = sphi 0, %s200
      %s215 = sphi 0, %s201
      %s219 = sphi 0, %s219
      %s221 = sphi 0, %s219
      %s222 = sphi 0, %s221
      %s236 = sphi 0, %s222
      %s240 = sphi 0, %s240
      %s242 = sphi 0, %s240
      %s243 = sphi 0, %s242
      %s257 = sphi 0, %s243
      %s261 = sphi 0, %s261
      %s263 = sphi 0, %s261
      %s264 = sphi 0, %s263
      %s278 = sphi 0, %s264
      %s282 = sphi 0, %s282
      %s284 = sphi 0, %s282
      %s285 = sphi 0, %s284
      %s299 = sphi 0, %s285
      %s303 = sphi 0, %s303
      %s305 = sphi 0, %s303
      %s306 = sphi 0, %s305
      %s320 = sphi 0, %s306
      %s326 = sphi 0, %s328
      %s329 = sphi 0, %s326
      %s330 = sphi 0, %s329
      %s346 = sphi 0, %s330
    $region4: #{tpu_custom_call.1} parent=1 // loop_header_branch
      %41 = sbr.rel (%p39) target = $region8
    $region5: #{tpu_custom_call.1} parent=1 // loop_body
      %s43 = ssub.s32 %s38, 1
      %s44 = ssub.s32 %s38, 2
      %s45 = sadd.s32 %s38, 1
      %s46 = ssub.s32 %s38, %s45
      %p47 = scmp.eq.s32.totalorder %s46, 0
      %s49 = sadd.s32 %s48, 1
      %s50 = scalar_select %p47, %s48, %s49
      %p53 = pneg %p47
      %p54 = scmp.eq.s32.totalorder %s38, 1
      %p55 = por %p53, %p54
      %p56 = scmp.ne.s32.totalorder %s48, %s51
      %p57 = scmp.eq.s32.totalorder %s38, 0
      %p58 = por %p56, %p57
      %p59 = scmp.ne.s32.totalorder %s48, %s51
      %p60 = scmp.eq.s32.totalorder %s43, 1
      %p61 = por %p59, %p60
      %p62 = scmp.ne.s32.totalorder %s51, %s52
      %p63 = scmp.eq.s32.totalorder %s43, 0
      %p64 = por %p62, %p63
      %p65 = scmp.ne.s32.totalorder %s51, %s52
      %p66 = scmp.eq.s32.totalorder %s44, 1
      %p67 = por %p65, %p66
      %p69 = scmp.ne.s32.totalorder %s52, %s68
      %p70 = scmp.eq.s32.totalorder %s44, 0
      %p71 = por %p69, %p70
      %s73 = sadd.s32 %s72, 1
      %p76 = scmp.eq.s32.totalorder %s38, 1
      %p77 = scmp.ne.s32.totalorder %s72, %s74
      %p78 = scmp.eq.s32.totalorder %s38, 0
      %p79 = por %p77, %p78
      %p80 = scmp.ne.s32.totalorder %s72, %s74
      %p81 = scmp.eq.s32.totalorder %s43, 1
      %p82 = por %p80, %p81
      %p83 = scmp.ne.s32.totalorder %s74, %s75
      %p84 = scmp.eq.s32.totalorder %s43, 0
      %p85 = por %p83, %p84
      %p86 = scmp.ne.s32.totalorder %s74, %s75
      %p87 = scmp.eq.s32.totalorder %s44, 1
      %p88 = por %p86, %p87
      %p90 = scmp.ne.s32.totalorder %s75, %s89
      %p91 = scmp.eq.s32.totalorder %s44, 0
      %p92 = por %p90, %p91
      %s94 = sadd.s32 %s93, 1
      %p97 = scmp.eq.s32.totalorder %s38, 1
      %p98 = scmp.ne.s32.totalorder %s93, %s95
      %p99 = scmp.eq.s32.totalorder %s38, 0
      %p100 = por %p98, %p99
      %p101 = scmp.ne.s32.totalorder %s93, %s95
      %p102 = scmp.eq.s32.totalorder %s43, 1
      %p103 = por %p101, %p102
      %p104 = scmp.ne.s32.totalorder %s95, %s96
      %p105 = scmp.eq.s32.totalorder %s43, 0
      %p106 = por %p104, %p105
      %p107 = scmp.ne.s32.totalorder %s95, %s96
      %p108 = scmp.eq.s32.totalorder %s44, 1
      %p109 = por %p107, %p108
      %p111 = scmp.ne.s32.totalorder %s96, %s110
      %p112 = scmp.eq.s32.totalorder %s44, 0
      %p113 = por %p111, %p112
      %s115 = sadd.s32 %s114, 1
      %p118 = scmp.eq.s32.totalorder %s38, 1
      %p119 = scmp.ne.s32.totalorder %s114, %s116
      %p120 = scmp.eq.s32.totalorder %s38, 0
      %p121 = por %p119, %p120
      %p122 = scmp.ne.s32.totalorder %s114, %s116
      %p123 = scmp.eq.s32.totalorder %s43, 1
      %p124 = por %p122, %p123
      %p125 = scmp.ne.s32.totalorder %s116, %s117
      %p126 = scmp.eq.s32.totalorder %s43, 0
      %p127 = por %p125, %p126
      %p128 = scmp.ne.s32.totalorder %s116, %s117
      %p129 = scmp.eq.s32.totalorder %s44, 1
      %p130 = por %p128, %p129
      %p132 = scmp.ne.s32.totalorder %s117, %s131
      %p133 = scmp.eq.s32.totalorder %s44, 0
      %p134 = por %p132, %p133
      %s136 = sadd.s32 %s135, 1
      %p139 = scmp.eq.s32.totalorder %s38, 1
      %p140 = scmp.ne.s32.totalorder %s135, %s137
      %p141 = scmp.eq.s32.totalorder %s38, 0
      %p142 = por %p140, %p141
      %p143 = scmp.ne.s32.totalorder %s135, %s137
      %p144 = scmp.eq.s32.totalorder %s43, 1
      %p145 = por %p143, %p144
      %p146 = scmp.ne.s32.totalorder %s137, %s138
      %p147 = scmp.eq.s32.totalorder %s43, 0
      %p148 = por %p146, %p147
      %p149 = scmp.ne.s32.totalorder %s137, %s138
      %p150 = scmp.eq.s32.totalorder %s44, 1
      %p151 = por %p149, %p150
      %p153 = scmp.ne.s32.totalorder %s138, %s152
      %p154 = scmp.eq.s32.totalorder %s44, 0
      %p155 = por %p153, %p154
      %s157 = sadd.s32 %s156, 1
      %p160 = scmp.eq.s32.totalorder %s38, 1
      %p161 = scmp.ne.s32.totalorder %s156, %s158
      %p162 = scmp.eq.s32.totalorder %s38, 0
      %p163 = por %p161, %p162
      %p164 = scmp.ne.s32.totalorder %s156, %s158
      %p165 = scmp.eq.s32.totalorder %s43, 1
      %p166 = por %p164, %p165
      %p167 = scmp.ne.s32.totalorder %s158, %s159
      %p168 = scmp.eq.s32.totalorder %s43, 0
      %p169 = por %p167, %p168
      %p170 = scmp.ne.s32.totalorder %s158, %s159
      %p171 = scmp.eq.s32.totalorder %s44, 1
      %p172 = por %p170, %p171
      %p174 = scmp.ne.s32.totalorder %s159, %s173
      %p175 = scmp.eq.s32.totalorder %s44, 0
      %p176 = por %p174, %p175
      %s178 = sadd.s32 %s177, 1
      %p181 = scmp.eq.s32.totalorder %s38, 1
      %p182 = scmp.ne.s32.totalorder %s177, %s179
      %p183 = scmp.eq.s32.totalorder %s38, 0
      %p184 = por %p182, %p183
      %p185 = scmp.ne.s32.totalorder %s177, %s179
      %p186 = scmp.eq.s32.totalorder %s43, 1
      %p187 = por %p185, %p186
      %p188 = scmp.ne.s32.totalorder %s179, %s180
      %p189 = scmp.eq.s32.totalorder %s43, 0
      %p190 = por %p188, %p189
      %p191 = scmp.ne.s32.totalorder %s179, %s180
      %p192 = scmp.eq.s32.totalorder %s44, 1
      %p193 = por %p191, %p192
      %p195 = scmp.ne.s32.totalorder %s180, %s194
      %p196 = scmp.eq.s32.totalorder %s44, 0
      %p197 = por %p195, %p196
      %s199 = sadd.s32 %s198, 1
      %p202 = scmp.eq.s32.totalorder %s38, 1
      %p203 = scmp.ne.s32.totalorder %s198, %s200
      %p204 = scmp.eq.s32.totalorder %s38, 0
      %p205 = por %p203, %p204
      %p206 = scmp.ne.s32.totalorder %s198, %s200
      %p207 = scmp.eq.s32.totalorder %s43, 1
      %p208 = por %p206, %p207
      %p209 = scmp.ne.s32.totalorder %s200, %s201
      %p210 = scmp.eq.s32.totalorder %s43, 0
      %p211 = por %p209, %p210
      %p212 = scmp.ne.s32.totalorder %s200, %s201
      %p213 = scmp.eq.s32.totalorder %s44, 1
      %p214 = por %p212, %p213
      %p216 = scmp.ne.s32.totalorder %s201, %s215
      %p217 = scmp.eq.s32.totalorder %s44, 0
      %p218 = por %p216, %p217
      %s220 = sadd.s32 %s219, 1
      %p223 = scmp.eq.s32.totalorder %s38, 1
      %p224 = scmp.ne.s32.totalorder %s219, %s221
      %p225 = scmp.eq.s32.totalorder %s38, 0
      %p226 = por %p224, %p225
      %p227 = scmp.ne.s32.totalorder %s219, %s221
      %p228 = scmp.eq.s32.totalorder %s43, 1
      %p229 = por %p227, %p228
      %p230 = scmp.ne.s32.totalorder %s221, %s222
      %p231 = scmp.eq.s32.totalorder %s43, 0
      %p232 = por %p230, %p231
      %p233 = scmp.ne.s32.totalorder %s221, %s222
      %p234 = scmp.eq.s32.totalorder %s44, 1
      %p235 = por %p233, %p234
      %p237 = scmp.ne.s32.totalorder %s222, %s236
      %p238 = scmp.eq.s32.totalorder %s44, 0
      %p239 = por %p237, %p238
      %s241 = sadd.s32 %s240, 1
      %p244 = scmp.eq.s32.totalorder %s38, 1
      %p245 = scmp.ne.s32.totalorder %s240, %s242
      %p246 = scmp.eq.s32.totalorder %s38, 0
      %p247 = por %p245, %p246
      %p248 = scmp.ne.s32.totalorder %s240, %s242
      %p249 = scmp.eq.s32.totalorder %s43, 1
      %p250 = por %p248, %p249
      %p251 = scmp.ne.s32.totalorder %s242, %s243
      %p252 = scmp.eq.s32.totalorder %s43, 0
      %p253 = por %p251, %p252
      %p254 = scmp.ne.s32.totalorder %s242, %s243
      %p255 = scmp.eq.s32.totalorder %s44, 1
      %p256 = por %p254, %p255
      %p258 = scmp.ne.s32.totalorder %s243, %s257
      %p259 = scmp.eq.s32.totalorder %s44, 0
      %p260 = por %p258, %p259
      %s262 = sadd.s32 %s261, 1
      %p265 = scmp.eq.s32.totalorder %s38, 1
      %p266 = scmp.ne.s32.totalorder %s261, %s263
      %p267 = scmp.eq.s32.totalorder %s38, 0
      %p268 = por %p266, %p267
      %p269 = scmp.ne.s32.totalorder %s261, %s263
      %p270 = scmp.eq.s32.totalorder %s43, 1
      %p271 = por %p269, %p270
      %p272 = scmp.ne.s32.totalorder %s263, %s264
      %p273 = scmp.eq.s32.totalorder %s43, 0
      %p274 = por %p272, %p273
      %p275 = scmp.ne.s32.totalorder %s263, %s264
      %p276 = scmp.eq.s32.totalorder %s44, 1
      %p277 = por %p275, %p276
      %p279 = scmp.ne.s32.totalorder %s264, %s278
      %p280 = scmp.eq.s32.totalorder %s44, 0
      %p281 = por %p279, %p280
      %s283 = sadd.s32 %s282, 1
      %p286 = scmp.eq.s32.totalorder %s38, 1
      %p287 = scmp.ne.s32.totalorder %s282, %s284
      %p288 = scmp.eq.s32.totalorder %s38, 0
      %p289 = por %p287, %p288
      %p290 = scmp.ne.s32.totalorder %s282, %s284
      %p291 = scmp.eq.s32.totalorder %s43, 1
      %p292 = por %p290, %p291
      %p293 = scmp.ne.s32.totalorder %s284, %s285
      %p294 = scmp.eq.s32.totalorder %s43, 0
      %p295 = por %p293, %p294
      %p296 = scmp.ne.s32.totalorder %s284, %s285
      %p297 = scmp.eq.s32.totalorder %s44, 1
      %p298 = por %p296, %p297
      %p300 = scmp.ne.s32.totalorder %s285, %s299
      %p301 = scmp.eq.s32.totalorder %s44, 0
      %p302 = por %p300, %p301
      %s304 = sadd.s32 %s303, 1
      %p307 = scmp.eq.s32.totalorder %s38, 1
      %p308 = scmp.ne.s32.totalorder %s303, %s305
      %p309 = scmp.eq.s32.totalorder %s38, 0
      %p310 = por %p308, %p309
      %p311 = scmp.ne.s32.totalorder %s303, %s305
      %p312 = scmp.eq.s32.totalorder %s43, 1
      %p313 = por %p311, %p312
      %p314 = scmp.ne.s32.totalorder %s305, %s306
      %p315 = scmp.eq.s32.totalorder %s43, 0
      %p316 = por %p314, %p315
      %p317 = scmp.ne.s32.totalorder %s305, %s306
      %p318 = scmp.eq.s32.totalorder %s44, 1
      %p319 = por %p317, %p318
      %p321 = scmp.ne.s32.totalorder %s306, %s320
      %p322 = scmp.eq.s32.totalorder %s44, 0
      %p323 = por %p321, %p322
      %s324 = ssub.s32 %s38, %s45
      %p325 = scmp.eq.s32.totalorder %s324, 0
      %s327 = sadd.s32 %s326, 1
      %s328 = scalar_select %p325, %s326, %s327
      %p331 = pneg %p325
      %p332 = scmp.eq.s32.totalorder %s38, 1
      %p333 = por %p331, %p332
      %p334 = scmp.ne.s32.totalorder %s326, %s329
      %p335 = scmp.eq.s32.totalorder %s38, 0
      %p336 = por %p334, %p335
      %p337 = scmp.ne.s32.totalorder %s326, %s329
      %p338 = scmp.eq.s32.totalorder %s43, 1
      %p339 = por %p337, %p338
      %p340 = scmp.ne.s32.totalorder %s329, %s330
      %p341 = scmp.eq.s32.totalorder %s43, 0
      %p342 = por %p340, %p341
      %p343 = scmp.ne.s32.totalorder %s329, %s330
      %p344 = scmp.eq.s32.totalorder %s44, 1
      %p345 = por %p343, %p344
      %p347 = scmp.ne.s32.totalorder %s330, %s346
      %p348 = scmp.eq.s32.totalorder %s44, 0
      %p349 = por %p347, %p348
      %p350 = scmp.le.s32.totalorder 1, %s38
      %p351 = scmp.lt.s32.totalorder %s38, 3
      %p352 = pnand %p350, %p351
      %p353 = pneg %p352
      // Predicated region
      $region9: #{tpu_custom_call.1} parent=5 // pred_check
        _
      $region10: #{tpu_custom_call.1} parent=5 // pred_check_branch
        %355 = sbr.rel (%p352) target = $region12
      $region11: #{tpu_custom_call.1} parent=5 // pred_region
        %s356 = ssub.s32 %s38, 1
        // Predicated region
        $region13: #{tpu_custom_call.1} parent=11 // pred_check
          %p357 = pneg %p85
        $region14: #{tpu_custom_call.1} parent=11 // pred_check_branch
          %359 = sbr.rel (%p357) target = $region16
        $region15: #{tpu_custom_call.1} parent=11 // pred_region
          %361 = vsyncadd [#allocation9], 0
          %s363 = sshll.u32 %s2, 4
          %s364 = int_to_ptr.hbm [resolvable:$true] %s363
          %s365 = sshll.u32 [#allocation8], 4
          %s366 = int_to_ptr.vmem [resolvable:$true] %s365
          %368 = dma.hbm_to_vmem [thread:$0]  %s364, 16, %s366, [#allocation9]
        $region16: #{tpu_custom_call.1} parent=11 // pred_fallthru
          _
        // Predicated region
        $region17: #{tpu_custom_call.1} parent=11 // pred_check
          %p369 = pneg %p106
        $region18: #{tpu_custom_call.1} parent=11 // pred_check_branch
          %371 = sbr.rel (%p369) target = $region20
        $region19: #{tpu_custom_call.1} parent=11 // pred_region
          %373 = vsyncadd [#allocation9], 0
          %s375 = sshll.u32 %s3, 4
          %s376 = int_to_ptr.hbm [resolvable:$true] %s375
          %s377 = sshll.u32 [#allocation10], 4
          %s378 = int_to_ptr.vmem [resolvable:$true] %s377
          %380 = dma.hbm_to_vmem [thread:$0]  %s376, 16, %s378, [#allocation9]
        $region20: #{tpu_custom_call.1} parent=11 // pred_fallthru
          _
        // Predicated region
        $region21: #{tpu_custom_call.1} parent=11 // pred_check
          %p381 = pneg %p127
        $region22: #{tpu_custom_call.1} parent=11 // pred_check_branch
          %383 = sbr.rel (%p381) target = $region24
        $region23: #{tpu_custom_call.1} parent=11 // pred_region
          %385 = vsyncadd [#allocation12], 0
          %s386 = sshll.u32 %s4, 4
          %s387 = int_to_ptr.hbm [resolvable:$true] %s386
          %s388 = sshll.u32 [#allocation11], 4
          %s389 = int_to_ptr.vmem [resolvable:$true] %s388
          %394 = dma.hbm_to_vmem [thread:$0]  %s387, 3072, %s389, [#allocation12], 192, 192, 12
        $region24: #{tpu_custom_call.1} parent=11 // pred_fallthru
          _
        // Predicated region
        $region25: #{tpu_custom_call.1} parent=11 // pred_check
          %p395 = pneg %p148
        $region26: #{tpu_custom_call.1} parent=11 // pred_check_branch
          %397 = sbr.rel (%p395) target = $region28
        $region27: #{tpu_custom_call.1} parent=11 // pred_region
          _
        $region28: #{tpu_custom_call.1} parent=11 // pred_fallthru
          _
        // Predicated region
        $region29: #{tpu_custom_call.1} parent=11 // pred_check
          %p398 = pneg %p169
        $region30: #{tpu_custom_call.1} parent=11 // pred_check_branch
          %400 = sbr.rel (%p398) target = $region32
        $region31: #{tpu_custom_call.1} parent=11 // pred_region
          %402 = vsyncadd [#allocation12], 0
          %s403 = sshll.u32 %s6, 4
          %s404 = int_to_ptr.hbm [resolvable:$true] %s403
          %s405 = sshll.u32 [#allocation13], 4
          %s406 = int_to_ptr.vmem [resolvable:$true] %s405
          %411 = dma.hbm_to_vmem [thread:$0]  %s404, 1024, %s406, [#allocation12], 64, 64, 4
        $region32: #{tpu_custom_call.1} parent=11 // pred_fallthru
          _
        // Predicated region
        $region33: #{tpu_custom_call.1} parent=11 // pred_check
          %p412 = pneg %p190
        $region34: #{tpu_custom_call.1} parent=11 // pred_check_branch
          %414 = sbr.rel (%p412) target = $region36
        $region35: #{tpu_custom_call.1} parent=11 // pred_region
          %416 = vsyncadd [#allocation15], 0
          %s418 = sshll.u32 %s7, 4
          %s419 = int_to_ptr.hbm [resolvable:$true] %s418
          %s420 = sshll.u32 [#allocation14], 4
          %s421 = int_to_ptr.vmem [resolvable:$true] %s420
          %423 = dma.hbm_to_vmem [thread:$0]  %s419, 16, %s421, [#allocation15]
        $region36: #{tpu_custom_call.1} parent=11 // pred_fallthru
          _
        // Predicated region
        $region37: #{tpu_custom_call.1} parent=11 // pred_check
          %p424 = pneg %p211
        $region38: #{tpu_custom_call.1} parent=11 // pred_check_branch
          %426 = sbr.rel (%p424) target = $region40
        $region39: #{tpu_custom_call.1} parent=11 // pred_region
          %428 = vsyncadd [#allocation15], 0
          %s430 = sshll.u32 %s8, 4
          %s431 = int_to_ptr.hbm [resolvable:$true] %s430
          %s432 = sshll.u32 [#allocation16], 4
          %s433 = int_to_ptr.vmem [resolvable:$true] %s432
          %435 = dma.hbm_to_vmem [thread:$0]  %s431, 16, %s433, [#allocation15]
        $region40: #{tpu_custom_call.1} parent=11 // pred_fallthru
          _
        // Predicated region
        $region41: #{tpu_custom_call.1} parent=11 // pred_check
          %p436 = pneg %p232
        $region42: #{tpu_custom_call.1} parent=11 // pred_check_branch
          %438 = sbr.rel (%p436) target = $region44
        $region43: #{tpu_custom_call.1} parent=11 // pred_region
          _
        $region44: #{tpu_custom_call.1} parent=11 // pred_fallthru
          _
        // Predicated region
        $region45: #{tpu_custom_call.1} parent=11 // pred_check
          %p439 = pneg %p253
        $region46: #{tpu_custom_call.1} parent=11 // pred_check_branch
          %441 = sbr.rel (%p439) target = $region48
        $region47: #{tpu_custom_call.1} parent=11 // pred_region
          %443 = vsyncadd [#allocation18], 0
          %s444 = sshll.u32 %s10, 4
          %s445 = int_to_ptr.hbm [resolvable:$true] %s444
          %s446 = sshll.u32 [#allocation17], 4
          %s447 = int_to_ptr.vmem [resolvable:$true] %s446
          %452 = dma.hbm_to_vmem [thread:$0]  %s445, 4096, %s447, [#allocation18], 256, 256, 16
        $region48: #{tpu_custom_call.1} parent=11 // pred_fallthru
          _
        // Predicated region
        $region49: #{tpu_custom_call.1} parent=11 // pred_check
          %p453 = pneg %p274
        $region50: #{tpu_custom_call.1} parent=11 // pred_check_branch
          %455 = sbr.rel (%p453) target = $region52
        $region51: #{tpu_custom_call.1} parent=11 // pred_region
          _
        $region52: #{tpu_custom_call.1} parent=11 // pred_fallthru
          _
        // Predicated region
        $region53: #{tpu_custom_call.1} parent=11 // pred_check
          %p456 = pneg %p295
        $region54: #{tpu_custom_call.1} parent=11 // pred_check_branch
          %458 = sbr.rel (%p456) target = $region56
        $region55: #{tpu_custom_call.1} parent=11 // pred_region
          %460 = vsyncadd [#allocation18], 0
          %s461 = sshll.u32 %s12, 4
          %s462 = int_to_ptr.hbm [resolvable:$true] %s461
          %s463 = sshll.u32 [#allocation19], 4
          %s464 = int_to_ptr.vmem [resolvable:$true] %s463
          %469 = dma.hbm_to_vmem [thread:$0]  %s462, 4096, %s464, [#allocation18], 64, 64, 4
        $region56: #{tpu_custom_call.1} parent=11 // pred_fallthru
          _
        // Predicated region
        $region57: #{tpu_custom_call.1} parent=11 // pred_check
          %p470 = pneg %p316
        $region58: #{tpu_custom_call.1} parent=11 // pred_check_branch
          %472 = sbr.rel (%p470) target = $region60
        $region59: #{tpu_custom_call.1} parent=11 // pred_region
          _
        $region60: #{tpu_custom_call.1} parent=11 // pred_fallthru
          _
      $region12: #{tpu_custom_call.1} parent=5 // pred_fallthru
        _
      %p473 = scmp.lt.s32.totalorder %s38, 2
      // Predicated region
      $region61: #{tpu_custom_call.1} parent=5 // pred_check
        %p474 = pneg %p473
      $region62: #{tpu_custom_call.1} parent=5 // pred_check_branch
        %476 = sbr.rel (%p474) target = $region64
      $region63: #{tpu_custom_call.1} parent=5 // pred_region
        // Predicated region
        $region65: #{tpu_custom_call.1} parent=63 // pred_check
          %p477 = pneg %p58
        $region66: #{tpu_custom_call.1} parent=63 // pred_check_branch
          %479 = sbr.rel (%p477) target = $region68
        $region67: #{tpu_custom_call.1} parent=63 // pred_region
          %s480 = sand.u32 %s48, 1
          %s481 = scalar_lea.sflag [#allocation6], %s480
          %s482 = sand.u32 %s48, 1
          %s483 = smul.addr %s482, 64
          %s484 = scalar_lea.vmem [#allocation5], %s483
          %s485 = smul.u32 8, %s38
          %487 = vsyncadd %s481, 0
          %s488 = smul.addr %s485, 8
          %s489 = scalar_lea.hbm %s1, %s488
          %s490 = sshll.u32 %s489, 4
          %s491 = int_to_ptr.hbm [resolvable:$true] %s490
          %s492 = sshll.u32 %s484, 4
          %s493 = int_to_ptr.vmem [resolvable:$true] %s492
          %498 = dma.hbm_to_vmem [thread:$0]  %s491, 1024, %s493, %s481, 128, 128, 8
        $region68: #{tpu_custom_call.1} parent=63 // pred_fallthru
          _
      $region64: #{tpu_custom_call.1} parent=5 // pred_fallthru
        _
      %p499 = scmp.le.s32.totalorder 1, %s38
      %p500 = scmp.lt.s32.totalorder %s38, 3
      %p501 = pnand %p499, %p500
      %p502 = pneg %p501
      // Predicated region
      $region69: #{tpu_custom_call.1} parent=5 // pred_check
        _
      $region70: #{tpu_custom_call.1} parent=5 // pred_check_branch
        %504 = sbr.rel (%p501) target = $region72
      $region71: #{tpu_custom_call.1} parent=5 // pred_region
        %s505 = ssub.s32 %s38, 1
        %s506 = sand.u32 %s51, 1
        %s507 = scalar_lea.sflag [#allocation6], %s506
        %s508 = sand.u32 %s51, 1
        %s509 = smul.addr %s508, 64
        %s510 = scalar_lea.vmem [#allocation5], %s509
        // Predicated region
        $region73: #{tpu_custom_call.1} parent=71 // pred_check
          %p511 = pneg %p64
        $region74: #{tpu_custom_call.1} parent=71 // pred_check_branch
          %513 = sbr.rel (%p511) target = $region76
        $region75: #{tpu_custom_call.1} parent=71 // pred_region
          %515 = dma.done %s507, 1024
        $region76: #{tpu_custom_call.1} parent=71 // pred_fallthru
          _
        // Predicated region
        $region77: #{tpu_custom_call.1} parent=71 // pred_check
          %p516 = pneg %p85
        $region78: #{tpu_custom_call.1} parent=71 // pred_check_branch
          %518 = sbr.rel (%p516) target = $region80
        $region79: #{tpu_custom_call.1} parent=71 // pred_region
          %520 = dma.done [#allocation9], 16
        $region80: #{tpu_custom_call.1} parent=71 // pred_fallthru
          _
        // Predicated region
        $region81: #{tpu_custom_call.1} parent=71 // pred_check
          %p521 = pneg %p106
        $region82: #{tpu_custom_call.1} parent=71 // pred_check_branch
          %523 = sbr.rel (%p521) target = $region84
        $region83: #{tpu_custom_call.1} parent=71 // pred_region
          %525 = dma.done [#allocation9], 16
        $region84: #{tpu_custom_call.1} parent=71 // pred_fallthru
          _
        // Predicated region
        $region85: #{tpu_custom_call.1} parent=71 // pred_check
          %p526 = pneg %p127
        $region86: #{tpu_custom_call.1} parent=71 // pred_check_branch
          %528 = sbr.rel (%p526) target = $region88
        $region87: #{tpu_custom_call.1} parent=71 // pred_region
          %530 = dma.done [#allocation12], 3072
        $region88: #{tpu_custom_call.1} parent=71 // pred_fallthru
          _
        // Predicated region
        $region89: #{tpu_custom_call.1} parent=71 // pred_check
          %p531 = pneg %p169
        $region90: #{tpu_custom_call.1} parent=71 // pred_check_branch
          %533 = sbr.rel (%p531) target = $region92
        $region91: #{tpu_custom_call.1} parent=71 // pred_region
          %535 = dma.done [#allocation12], 1024
        $region92: #{tpu_custom_call.1} parent=71 // pred_fallthru
          _
        // Predicated region
        $region93: #{tpu_custom_call.1} parent=71 // pred_check
          %p536 = pneg %p190
        $region94: #{tpu_custom_call.1} parent=71 // pred_check_branch
          %538 = sbr.rel (%p536) target = $region96
        $region95: #{tpu_custom_call.1} parent=71 // pred_region
          %540 = dma.done [#allocation15], 16
        $region96: #{tpu_custom_call.1} parent=71 // pred_fallthru
          _
        // Predicated region
        $region97: #{tpu_custom_call.1} parent=71 // pred_check
          %p541 = pneg %p211
        $region98: #{tpu_custom_call.1} parent=71 // pred_check_branch
          %543 = sbr.rel (%p541) target = $region100
        $region99: #{tpu_custom_call.1} parent=71 // pred_region
          %545 = dma.done [#allocation15], 16
        $region100: #{tpu_custom_call.1} parent=71 // pred_fallthru
          _
        // Predicated region
        $region101: #{tpu_custom_call.1} parent=71 // pred_check
          %p546 = pneg %p253
        $region102: #{tpu_custom_call.1} parent=71 // pred_check_branch
          %548 = sbr.rel (%p546) target = $region104
        $region103: #{tpu_custom_call.1} parent=71 // pred_region
          %550 = dma.done [#allocation18], 4096
        $region104: #{tpu_custom_call.1} parent=71 // pred_fallthru
          _
        // Predicated region
        $region105: #{tpu_custom_call.1} parent=71 // pred_check
          %p551 = pneg %p295
        $region106: #{tpu_custom_call.1} parent=71 // pred_check_branch
          %553 = sbr.rel (%p551) target = $region108
        $region107: #{tpu_custom_call.1} parent=71 // pred_region
          %555 = dma.done [#allocation18], 4096
        $region108: #{tpu_custom_call.1} parent=71 // pred_fallthru
          _
        %s556 = sand.u32 %s51, 1
        %s557 = scalar_lea.sflag [#allocation6], %s556
        %s558 = sand.u32 %s51, 1
        %s559 = smul.addr %s558, 64
        %s560 = scalar_lea.vmem [#allocation5], %s559
        %p561 = pneg %p64
        %p562 = pneg %p61
        %p563 = pneg %p85
        %p564 = pneg %p82
        %p565 = pneg %p106
        %p566 = pneg %p103
        %p567 = pneg %p127
        %p568 = pneg %p124
        %p569 = pneg %p148
        %p570 = pneg %p145
        %p571 = pneg %p169
        %p572 = pneg %p166
        %p573 = pneg %p190
        %p574 = pneg %p187
        %p575 = pneg %p211
        %p576 = pneg %p208
        %p577 = pneg %p232
        %p578 = pneg %p229
        %p579 = pneg %p253
        %p580 = pneg %p250
        %p581 = pneg %p274
        %p582 = pneg %p271
        %p583 = pneg %p295
        %p584 = pneg %p292
        %p585 = pneg %p316
        %p586 = pneg %p313
        %p587 = pneg %p342
        %p588 = pneg %p339
        %s589 = sand.u32 %s329, 1
        %s590 = scalar_lea.sflag [#allocation7], %s589
        %s591 = sand.u32 %s329, 1
        %s592 = smul.addr %s591, 64
        %s593 = scalar_lea.vmem [#allocation20], %s592
        %s594 = smul.u32 8, %s43
        %s595 = smul.u32 8, %s43
        %v597 = vld [vmem:[%s510] sm:$0xff]
        %v598 = vld [vmem:[%s510 + $0x8] sm:$0xff]
        %v599 = vld [vmem:[%s510 + $0x10] sm:$0xff]
        %v600 = vld [vmem:[%s510 + $0x18] sm:$0xff]
        %v601 = vld [vmem:[%s510 + $0x20] sm:$0xff]
        %v602 = vld [vmem:[%s510 + $0x28] sm:$0xff]
        %v603 = vld [vmem:[%s510 + $0x30] sm:$0xff]
        %v604 = vld [vmem:[%s510 + $0x38] sm:$0xff]
        %v605 = vld [vmem:[#allocation8] sm:$0x1]
        %v606 = vld [vmem:[#allocation10] sm:$0x1]
        %607 = vadd.xlane.f32.xlu0 %v597
        %v608 = vpop.xlane.xlu0 %607
        %609 = vadd.xlane.f32.xlu0 %v598
        %v610 = vpop.xlane.xlu0 %609
        %611 = vadd.xlane.f32.xlu0 %v599
        %v612 = vpop.xlane.xlu0 %611
        %613 = vadd.xlane.f32.xlu0 %v600
        %v614 = vpop.xlane.xlu0 %613
        %615 = vadd.xlane.f32.xlu0 %v601
        %v616 = vpop.xlane.xlu0 %615
        %617 = vadd.xlane.f32.xlu0 %v602
        %v618 = vpop.xlane.xlu0 %617
        %619 = vadd.xlane.f32.xlu0 %v603
        %v620 = vpop.xlane.xlu0 %619
        %621 = vadd.xlane.f32.xlu0 %v604
        %v622 = vpop.xlane.xlu0 %621
        %v623 = vrcp.pop 128.0
        %v624 = vmul.f32 128.0, %v623
        %v625 = vsub.f32 1.0, %v624
        %v626 = vmul.f32 %v623, %v625
        %v627 = vadd.f32 %v623, %v626
        %vm628 = vweird.f32 %v623
        %v629 = vsel %vm628, %v623, %v627
        %v630 = vmul.f32 %v608, %v629
        %v631 = vmul.f32 %v610, %v629
        %v632 = vmul.f32 %v612, %v629
        %v633 = vmul.f32 %v614, %v629
        %v634 = vmul.f32 %v616, %v629
        %v635 = vmul.f32 %v618, %v629
        %v636 = vmul.f32 %v620, %v629
        %v637 = vmul.f32 %v622, %v629
        %v638 = vsub.f32 %v597, %v630
        %v639 = vsub.f32 %v598, %v631
        %v640 = vsub.f32 %v599, %v632
        %v641 = vsub.f32 %v600, %v633
        %v642 = vsub.f32 %v601, %v634
        %v643 = vsub.f32 %v602, %v635
        %v644 = vsub.f32 %v603, %v636
        %v645 = vsub.f32 %v604, %v637
        %v646 = vmul.f32 %v638, %v638
        %v647 = vmul.f32 %v639, %v639
        %v648 = vmul.f32 %v640, %v640
        %v649 = vmul.f32 %v641, %v641
        %v650 = vmul.f32 %v642, %v642
        %v651 = vmul.f32 %v643, %v643
        %v652 = vmul.f32 %v644, %v644
        %v653 = vmul.f32 %v645, %v645
        %654 = vadd.xlane.f32.xlu0 %v646
        %v655 = vpop.xlane.xlu0 %654
        %656 = vadd.xlane.f32.xlu0 %v647
        %v657 = vpop.xlane.xlu0 %656
        %658 = vadd.xlane.f32.xlu0 %v648
        %v659 = vpop.xlane.xlu0 %658
        %660 = vadd.xlane.f32.xlu0 %v649
        %v661 = vpop.xlane.xlu0 %660
        %662 = vadd.xlane.f32.xlu0 %v650
        %v663 = vpop.xlane.xlu0 %662
        %664 = vadd.xlane.f32.xlu0 %v651
        %v665 = vpop.xlane.xlu0 %664
        %666 = vadd.xlane.f32.xlu0 %v652
        %v667 = vpop.xlane.xlu0 %666
        %668 = vadd.xlane.f32.xlu0 %v653
        %v669 = vpop.xlane.xlu0 %668
        %v670 = vmul.f32 %v655, %v629
        %v671 = vmul.f32 %v657, %v629
        %v672 = vmul.f32 %v659, %v629
        %v673 = vmul.f32 %v661, %v629
        %v674 = vmul.f32 %v663, %v629
        %v675 = vmul.f32 %v665, %v629
        %v676 = vmul.f32 %v667, %v629
        %v677 = vmul.f32 %v669, %v629
        %v678 = vadd.f32 %v670, 1e-05
        %v679 = vadd.f32 %v671, 1e-05
        %v680 = vadd.f32 %v672, 1e-05
        %v681 = vadd.f32 %v673, 1e-05
        %v682 = vadd.f32 %v674, 1e-05
        %v683 = vadd.f32 %v675, 1e-05
        %v684 = vadd.f32 %v676, 1e-05
        %v685 = vadd.f32 %v677, 1e-05
        %v686 = vrsqrt.pop %v678
        %v687 = vmul.f32 %v686, %v678
        %v688 = vmul.f32 %v687, %v686
        %v689 = vmul.f32 0.5, %v688
        %v690 = vsub.f32 1.5, %v689
        %v691 = vmul.f32 %v686, %v690
        %vm692 = vweird.f32 %v678
        %vm693 = vweird.f32 %v686
        %vm694 = vmor %vm692, %vm693
        %v695 = vsel %vm694, %v686, %v691
        %v696 = vrsqrt.pop %v679
        %v697 = vmul.f32 %v696, %v679
        %v698 = vmul.f32 %v697, %v696
        %v699 = vmul.f32 0.5, %v698
        %v700 = vsub.f32 1.5, %v699
        %v701 = vmul.f32 %v696, %v700
        %vm702 = vweird.f32 %v679
        %vm703 = vweird.f32 %v696
        %vm704 = vmor %vm702, %vm703
        %v705 = vsel %vm704, %v696, %v701
        %v706 = vrsqrt.pop %v680
        %v707 = vmul.f32 %v706, %v680
        %v708 = vmul.f32 %v707, %v706
        %v709 = vmul.f32 0.5, %v708
        %v710 = vsub.f32 1.5, %v709
        %v711 = vmul.f32 %v706, %v710
        %vm712 = vweird.f32 %v680
        %vm713 = vweird.f32 %v706
        %vm714 = vmor %vm712, %vm713
        %v715 = vsel %vm714, %v706, %v711
        %v716 = vrsqrt.pop %v681
        %v717 = vmul.f32 %v716, %v681
        %v718 = vmul.f32 %v717, %v716
        %v719 = vmul.f32 0.5, %v718
        %v720 = vsub.f32 1.5, %v719
        %v721 = vmul.f32 %v716, %v720
        %vm722 = vweird.f32 %v681
        %vm723 = vweird.f32 %v716
        %vm724 = vmor %vm722, %vm723
        %v725 = vsel %vm724, %v716, %v721
        %v726 = vrsqrt.pop %v682
        %v727 = vmul.f32 %v726, %v682
        %v728 = vmul.f32 %v727, %v726
        %v729 = vmul.f32 0.5, %v728
        %v730 = vsub.f32 1.5, %v729
        %v731 = vmul.f32 %v726, %v730
        %vm732 = vweird.f32 %v682
        %vm733 = vweird.f32 %v726
        %vm734 = vmor %vm732, %vm733
        %v735 = vsel %vm734, %v726, %v731
        %v736 = vrsqrt.pop %v683
        %v737 = vmul.f32 %v736, %v683
        %v738 = vmul.f32 %v737, %v736
        %v739 = vmul.f32 0.5, %v738
        %v740 = vsub.f32 1.5, %v739
        %v741 = vmul.f32 %v736, %v740
        %vm742 = vweird.f32 %v683
        %vm743 = vweird.f32 %v736
        %vm744 = vmor %vm742, %vm743
        %v745 = vsel %vm744, %v736, %v741
        %v746 = vrsqrt.pop %v684
        %v747 = vmul.f32 %v746, %v684
        %v748 = vmul.f32 %v747, %v746
        %v749 = vmul.f32 0.5, %v748
        %v750 = vsub.f32 1.5, %v749
        %v751 = vmul.f32 %v746, %v750
        %vm752 = vweird.f32 %v684
        %vm753 = vweird.f32 %v746
        %vm754 = vmor %vm752, %vm753
        %v755 = vsel %vm754, %v746, %v751
        %v756 = vrsqrt.pop %v685
        %v757 = vmul.f32 %v756, %v685
        %v758 = vmul.f32 %v757, %v756
        %v759 = vmul.f32 0.5, %v758
        %v760 = vsub.f32 1.5, %v759
        %v761 = vmul.f32 %v756, %v760
        %vm762 = vweird.f32 %v685
        %vm763 = vweird.f32 %v756
        %vm764 = vmor %vm762, %vm763
        %v765 = vsel %vm764, %v756, %v761
        %v766 = vmul.f32 %v638, %v695
        %v767 = vmul.f32 %v639, %v705
        %v768 = vmul.f32 %v640, %v715
        %v769 = vmul.f32 %v641, %v725
        %v770 = vmul.f32 %v642, %v735
        %v771 = vmul.f32 %v643, %v745
        %v772 = vmul.f32 %v644, %v755
        %v773 = vmul.f32 %v645, %v765
        %v775 = vperm.slane %v605, 0
        %v777 = vmul.f32 %v766, %v775
        %v778 = vmul.f32 %v767, %v775
        %v779 = vmul.f32 %v768, %v775
        %v780 = vmul.f32 %v769, %v775
        %v781 = vmul.f32 %v770, %v775
        %v782 = vmul.f32 %v771, %v775
        %v783 = vmul.f32 %v772, %v775
        %v784 = vmul.f32 %v773, %v775
        %v786 = vperm.slane %v606, 0
        %v788 = vadd.f32 %v777, %v786
        %v789 = vadd.f32 %v778, %v786
        %v790 = vadd.f32 %v779, %v786
        %v791 = vadd.f32 %v780, %v786
        %v792 = vadd.f32 %v781, %v786
        %v793 = vadd.f32 %v782, %v786
        %v794 = vadd.f32 %v783, %v786
        %v795 = vadd.f32 %v784, %v786
        %v796 = vpack.c.bf16 %v789, %v788
        %v797 = vpack.c.bf16 %v791, %v790
        %v798 = vpack.c.bf16 %v793, %v792
        %v799 = vpack.c.bf16 %v795, %v794
        %v800 = vld [vmem:[#allocation11] sm:$0xff]
        %v801 = vld [vmem:[#allocation11 + $0x8] sm:$0xf]
        %v802 = vld [vmem:[#allocation11 + $0xc] sm:$0xff]
        %v803 = vld [vmem:[#allocation11 + $0x14] sm:$0xf]
        %v804 = vld [vmem:[#allocation11 + $0x18] sm:$0xff]
        %v805 = vld [vmem:[#allocation11 + $0x20] sm:$0xf]
        %v806 = vld [vmem:[#allocation11 + $0x24] sm:$0xff]
        %v807 = vld [vmem:[#allocation11 + $0x2c] sm:$0xf]
        %v808 = vld [vmem:[#allocation11 + $0x30] sm:$0xff]
        %v809 = vld [vmem:[#allocation11 + $0x38] sm:$0xf]
        %v810 = vld [vmem:[#allocation11 + $0x3c] sm:$0xff]
        %v811 = vld [vmem:[#allocation11 + $0x44] sm:$0xf]
        %v812 = vld [vmem:[#allocation11 + $0x48] sm:$0xff]
        %v813 = vld [vmem:[#allocation11 + $0x50] sm:$0xf]
        %v814 = vld [vmem:[#allocation11 + $0x54] sm:$0xff]
        %v815 = vld [vmem:[#allocation11 + $0x5c] sm:$0xf]
        %v816 = vld [vmem:[#allocation11 + $0x60] sm:$0xff]
        %v817 = vld [vmem:[#allocation11 + $0x68] sm:$0xf]
        %v818 = vld [vmem:[#allocation11 + $0x6c] sm:$0xff]
        %v819 = vld [vmem:[#allocation11 + $0x74] sm:$0xf]
        %v820 = vld [vmem:[#allocation11 + $0x78] sm:$0xff]
        %v821 = vld [vmem:[#allocation11 + $0x80] sm:$0xf]
        %v822 = vld [vmem:[#allocation11 + $0x84] sm:$0xff]
        %v823 = vld [vmem:[#allocation11 + $0x8c] sm:$0xf]
        %v824 = vld [vmem:[#allocation11 + $0x90] sm:$0xff]
        %v825 = vld [vmem:[#allocation11 + $0x98] sm:$0xf]
        %v826 = vld [vmem:[#allocation11 + $0x9c] sm:$0xff]
        %v827 = vld [vmem:[#allocation11 + $0xa4] sm:$0xf]
        %v828 = vld [vmem:[#allocation11 + $0xa8] sm:$0xff]
        %v829 = vld [vmem:[#allocation11 + $0xb0] sm:$0xf]
        %v830 = vld [vmem:[#allocation11 + $0xb4] sm:$0xff]
        %v831 = vld [vmem:[#allocation11 + $0xbc] sm:$0xf]
        %v832 = vld [vmem:[%s5] sm:$0x7]
        %v834 = vperm.slane %v832, 0
        %v835 = vperm.slane %v832, 1
        %v836 = vperm.slane %v832, 2
        %v872 = vunpack.c.l.b16 %v800
        %v873 = vunpack.c.h.b16 %v800
        %v874 = vunpack.c.l.b16 %v801
        %v875 = vunpack.c.l.b16 %v802
        %v876 = vunpack.c.h.b16 %v802
        %v877 = vunpack.c.l.b16 %v803
        %v878 = vunpack.c.l.b16 %v804
        %v879 = vunpack.c.h.b16 %v804
        %v880 = vunpack.c.l.b16 %v805
        %v881 = vunpack.c.l.b16 %v806
        %v882 = vunpack.c.h.b16 %v806
        %v883 = vunpack.c.l.b16 %v807
        %v884 = vunpack.c.l.b16 %v808
        %v885 = vunpack.c.h.b16 %v808
        %v886 = vunpack.c.l.b16 %v809
        %v887 = vunpack.c.l.b16 %v810
        %v888 = vunpack.c.h.b16 %v810
        %v889 = vunpack.c.l.b16 %v811
        %v890 = vunpack.c.l.b16 %v812
        %v891 = vunpack.c.h.b16 %v812
        %v892 = vunpack.c.l.b16 %v813
        %v893 = vunpack.c.l.b16 %v814
        %v894 = vunpack.c.h.b16 %v814
        %v895 = vunpack.c.l.b16 %v815
        %v896 = vunpack.c.l.b16 %v816
        %v897 = vunpack.c.h.b16 %v816
        %v898 = vunpack.c.l.b16 %v817
        %v899 = vunpack.c.l.b16 %v818
        %v900 = vunpack.c.h.b16 %v818
        %v901 = vunpack.c.l.b16 %v819
        %v902 = vunpack.c.l.b16 %v820
        %v903 = vunpack.c.h.b16 %v820
        %v904 = vunpack.c.l.b16 %v821
        %v905 = vunpack.c.l.b16 %v822
        %v906 = vunpack.c.h.b16 %v822
        %v907 = vunpack.c.l.b16 %v823
        %v908 = vunpack.c.l.b16 %v824
        %v909 = vunpack.c.h.b16 %v824
        %v910 = vunpack.c.l.b16 %v825
        %v911 = vunpack.c.l.b16 %v826
        %v912 = vunpack.c.h.b16 %v826
        %v913 = vunpack.c.l.b16 %v827
        %v914 = vunpack.c.l.b16 %v828
        %v915 = vunpack.c.h.b16 %v828
        %v916 = vunpack.c.l.b16 %v829
        %v917 = vunpack.c.l.b16 %v830
        %v918 = vunpack.c.h.b16 %v830
        %v919 = vunpack.c.l.b16 %v831
        %v920 = vpack.c.b16 %v875, %v872
        %v921 = vpack.c.b16 %v876, %v873
        %v922 = vpack.c.b16 %v877, %v874
        %v923 = vpack.c.b16 %v881, %v878
        %v924 = vpack.c.b16 %v882, %v879
        %v925 = vpack.c.b16 %v883, %v880
        %v926 = vpack.c.b16 %v887, %v884
        %v927 = vpack.c.b16 %v888, %v885
        %v928 = vpack.c.b16 %v889, %v886
        %v929 = vpack.c.b16 %v893, %v890
        %v930 = vpack.c.b16 %v894, %v891
        %v931 = vpack.c.b16 %v895, %v892
        %v932 = vpack.c.b16 %v899, %v896
        %v933 = vpack.c.b16 %v900, %v897
        %v934 = vpack.c.b16 %v901, %v898
        %v935 = vpack.c.b16 %v905, %v902
        %v936 = vpack.c.b16 %v906, %v903
        %v937 = vpack.c.b16 %v907, %v904
        %v938 = vpack.c.b16 %v911, %v908
        %v939 = vpack.c.b16 %v912, %v909
        %v940 = vpack.c.b16 %v913, %v910
        %v941 = vpack.c.b16 %v917, %v914
        %v942 = vpack.c.b16 %v918, %v915
        %v943 = vpack.c.b16 %v919, %v916
        %968 = vmatpush.bf16.msra.mxu0 %v941
        %969 = vmatpush.bf16.msra.mxu0 %v938
        %970 = vmatpush.bf16.msra.mxu0 %v935
        %971 = vmatpush.bf16.msra.mxu0 %v932
        %972 = vmatpush.bf16.msra.mxu0 %v929
        %973 = vmatpush.bf16.msra.mxu0 %v926
        %974 = vmatpush.bf16.msra.mxu0 %v923
        %975 = vmatpush.bf16.msra.mxu0 %v920
        %976 = vmatmul.bf16.gmra.mxu0 %v796
        %v977 = vpop.f32.mrf.mxu0
        %v978 = vadd.f32 %v834, %v977
        %v979 = vpop.f32.mrf.mxu0
        %v980 = vadd.f32 %v834, %v979
        %981 = vmatmul.bf16.gmra.mxu0 %v797
        %v982 = vpop.f32.mrf.mxu0
        %v983 = vadd.f32 %v834, %v982
        %v984 = vpop.f32.mrf.mxu0
        %v985 = vadd.f32 %v834, %v984
        %986 = vmatmul.bf16.gmra.mxu0 %v798
        %v987 = vpop.f32.mrf.mxu0
        %v988 = vadd.f32 %v834, %v987
        %v989 = vpop.f32.mrf.mxu0
        %v990 = vadd.f32 %v834, %v989
        %991 = vmatmul.bf16.gmra.mxu0 %v799
        %v992 = vpop.f32.mrf.mxu0
        %v993 = vadd.f32 %v834, %v992
        %v994 = vpop.f32.mrf.mxu0
        %v995 = vadd.f32 %v834, %v994
        %996 = vdwg.mxu0
        %997 = vmatpush.bf16.msra.mxu0 %v942
        %998 = vmatpush.bf16.msra.mxu0 %v939
        %999 = vmatpush.bf16.msra.mxu0 %v936
        %1000 = vmatpush.bf16.msra.mxu0 %v933
        %1001 = vmatpush.bf16.msra.mxu0 %v930
        %1002 = vmatpush.bf16.msra.mxu0 %v927
        %1003 = vmatpush.bf16.msra.mxu0 %v924
        %1004 = vmatpush.bf16.msra.mxu0 %v921
        %1005 = vmatmul.bf16.gmra.mxu0 %v796
        %v1006 = vpop.f32.mrf.mxu0
        %v1007 = vadd.f32 %v835, %v1006
        %v1008 = vpop.f32.mrf.mxu0
        %v1009 = vadd.f32 %v835, %v1008
        %1010 = vmatmul.bf16.gmra.mxu0 %v797
        %v1011 = vpop.f32.mrf.mxu0
        %v1012 = vadd.f32 %v835, %v1011
        %v1013 = vpop.f32.mrf.mxu0
        %v1014 = vadd.f32 %v835, %v1013
        %1015 = vmatmul.bf16.gmra.mxu0 %v798
        %v1016 = vpop.f32.mrf.mxu0
        %v1017 = vadd.f32 %v835, %v1016
        %v1018 = vpop.f32.mrf.mxu0
        %v1019 = vadd.f32 %v835, %v1018
        %1020 = vmatmul.bf16.gmra.mxu0 %v799
        %v1021 = vpop.f32.mrf.mxu0
        %v1022 = vadd.f32 %v835, %v1021
        %v1023 = vpop.f32.mrf.mxu0
        %v1024 = vadd.f32 %v835, %v1023
        %1025 = vdwg.mxu0
        %1026 = vmatpush.bf16.msra.mxu0 %v943
        %1027 = vmatpush.bf16.msra.mxu0 %v940
        %1028 = vmatpush.bf16.msra.mxu0 %v937
        %1029 = vmatpush.bf16.msra.mxu0 %v934
        %1030 = vmatpush.bf16.msra.mxu0 %v931
        %1031 = vmatpush.bf16.msra.mxu0 %v928
        %1032 = vmatpush.bf16.msra.mxu0 %v925
        %1033 = vmatpush.bf16.msra.mxu0 %v922
        %1034 = vmatmul.bf16.gmra.mxu0 %v796
        %v1035 = vpop.f32.mrf.mxu0
        %v1036 = vadd.f32 %v836, %v1035
        %v1037 = vpop.f32.mrf.mxu0
        %v1038 = vadd.f32 %v836, %v1037
        %1039 = vmatmul.bf16.gmra.mxu0 %v797
        %v1040 = vpop.f32.mrf.mxu0
        %v1041 = vadd.f32 %v836, %v1040
        %v1042 = vpop.f32.mrf.mxu0
        %v1043 = vadd.f32 %v836, %v1042
        %1044 = vmatmul.bf16.gmra.mxu0 %v798
        %v1045 = vpop.f32.mrf.mxu0
        %v1046 = vadd.f32 %v836, %v1045
        %v1047 = vpop.f32.mrf.mxu0
        %v1048 = vadd.f32 %v836, %v1047
        %1049 = vmatmul.bf16.gmra.mxu0 %v799
        %v1050 = vpop.f32.mrf.mxu0
        %v1051 = vadd.f32 %v836, %v1050
        %v1052 = vpop.f32.mrf.mxu0
        %v1053 = vadd.f32 %v836, %v1052
        %1054 = vdwg.mxu0
        %v1055 = vlaneseq
        %v1056 = vshrl.u32 %v1055, 7
        %v1057 = vadd.s32 %v1056, 8
        %v1058 = vlaneseq
        %v1059 = vand.u32 %v1058, 127
        %vm1060 = vcmp.le.s32.totalorder %v1059, %v1056
        %vm1061 = vcmp.le.s32.totalorder %v1059, %v1057
        %s1062 = smul.u32 %s43, 4
        %s1063 = sld [smem:[#allocation4 + %s1062]]
        %v1064 = vstv %s1063
        %vm1065 = vcmp.lt.s32.totalorder %v1059, %v1064
        %vm1066 = vmand %vm1060, %vm1065
        %vm1067 = vmand %vm1061, %vm1065
        %v1068 = vpack.c.bf16 %v978, %v978
        %v1069 = vpack.c.bf16 %v980, %v980
        %v1070 = vpack.c.bf16 %v1007, %v1007
        %v1071 = vpack.c.bf16 %v1009, %v1009
        %v1072 = vpack.c.bf16 %v1036, %v1036
        %v1073 = vpack.c.bf16 %v1038, %v1038
        %v1076 = vunpack.c.l.b16 %v1068
        %v1077 = vunpack.c.l.b16 %v1069
        %v1078 = vpack.c.b16 %v1077, %v1076
        %v1081 = vunpack.c.l.b16 %v1070
        %v1082 = vunpack.c.l.b16 %v1071
        %v1083 = vpack.c.b16 %v1082, %v1081
        %vm1084 = vcmask 261120
        %v1086 = vsel %vm1084, %v1078, 0
        %v1089 = vsel %vm1084, %v1083, 0
        %1091 = vmatpush.bf16.xpose.msra.mxu0 0
        %1092 = vmatpush.bf16.xpose.msra.mxu0 0
        %1093 = vmatpush.bf16.xpose.msra.mxu0 0
        %1094 = vmatpush.bf16.xpose.msra.mxu0 0
        %1095 = vmatpush.bf16.xpose.msra.mxu0 0
        %1096 = vmatpush.bf16.xpose.msra.mxu0 0
        %1097 = vmatpush.bf16.xpose.msra.mxu0 0
        %1098 = vmatpush.bf16.xpose.msra.mxu0 %v1089
        %1099 = vmatmul.bf16.gmra.mxu0 %v1086
        %v1100 = vpop.f32.mrf.mxu0
        %v1101 = vadd.f32 0.0, %v1100
        %v1102 = vpop.f32.mrf.mxu0
        %v1103 = vadd.f32 0.0, %v1102
        %1104 = vdwg.mxu0
        %v1105 = vsel %vm1066, %v1101, -1e+30
        %v1106 = vsel %vm1067, %v1103, -1e+30
        %vm1107 = vcmask 130048
        %v1108 = vsel %vm1107, %v1105, -inf
        %1109 = vmax.xlane.f32.xlu0 %v1108
        %v1110 = vpop.xlane.xlu0 %1109
        %v1111 = vsel %vm1107, %v1106, -inf
        %1112 = vmax.xlane.f32.xlu0 %v1111
        %v1113 = vpop.xlane.xlu0 %1112
        %v1114 = vsub.f32 %v1105, %v1110
        %v1115 = vsub.f32 %v1106, %v1113
        %v1116 = vmul.f32 %v1114, 1.442695
        %v1117 = vpow.pop %v1116
        %v1118 = vmul.f32 %v1115, 1.442695
        %v1119 = vpow.pop %v1118
        %v1120 = vsel %vm1107, %v1117, 0.0
        %1121 = vadd.xlane.f32.xlu0 %v1120
        %v1122 = vpop.xlane.xlu0 %1121
        %v1123 = vsel %vm1107, %v1119, 0.0
        %1124 = vadd.xlane.f32.xlu0 %v1123
        %v1125 = vpop.xlane.xlu0 %1124
        %v1126 = vrcp.pop %v1122
        %v1127 = vrcp.pop %v1125
        %v1128 = vmul.f32 %v1117, %v1126
        %v1129 = vmul.f32 %v1119, %v1127
        %v1130 = vpack.c.bf16 %v1129, %v1128
        %v1133 = vunpack.c.l.b16 %v1072
        %v1134 = vunpack.c.l.b16 %v1073
        %v1135 = vpack.c.b16 %v1134, %v1133
        %v1138 = vsel %vm1107, %v1130, 0
        %1140 = vmatpush.bf16.msra.mxu0 0
        %1141 = vmatpush.bf16.msra.mxu0 0
        %1142 = vmatpush.bf16.msra.mxu0 0
        %1143 = vmatpush.bf16.msra.mxu0 0
        %1144 = vmatpush.bf16.msra.mxu0 0
        %1145 = vmatpush.bf16.msra.mxu0 0
        %1146 = vmatpush.bf16.msra.mxu0 0
        %1147 = vmatpush.bf16.msra.mxu0 %v1135
        %1148 = vmatmul.bf16.gmra.mxu0 %v1138
        %v1149 = vpop.f32.mrf.mxu0
        %v1150 = vadd.f32 0.0, %v1149
        %v1151 = vpop.f32.mrf.mxu0
        %v1152 = vadd.f32 0.0, %v1151
        %1153 = vdwg.mxu0
        %1154 = vst.msk [vmem:[#allocation2] sm:$0xff] %vm1084, %v1150
        %1155 = vst.msk [vmem:[#allocation2 + $0x8] sm:$0xff] %vm1084, %v1152
        %1156 = vrot.lane.b32.xlu0 %v1078, 96
        %v1157 = vpop.permute.xlu0 %1156
        %1158 = vrot.lane.b32.xlu0 %v1083, 96
        %v1159 = vpop.permute.xlu0 %1158
        %v1161 = vsel %vm1084, %v1157, 0
        %v1164 = vsel %vm1084, %v1159, 0
        %1166 = vmatpush.bf16.xpose.msra.mxu0 0
        %1167 = vmatpush.bf16.xpose.msra.mxu0 0
        %1168 = vmatpush.bf16.xpose.msra.mxu0 0
        %1169 = vmatpush.bf16.xpose.msra.mxu0 0
        %1170 = vmatpush.bf16.xpose.msra.mxu0 0
        %1171 = vmatpush.bf16.xpose.msra.mxu0 0
        %1172 = vmatpush.bf16.xpose.msra.mxu0 0
        %1173 = vmatpush.bf16.xpose.msra.mxu0 %v1164
        %1174 = vmatmul.bf16.gmra.mxu0 %v1161
        %v1175 = vpop.f32.mrf.mxu0
        %v1176 = vadd.f32 0.0, %v1175
        %v1177 = vpop.f32.mrf.mxu0
        %v1178 = vadd.f32 0.0, %v1177
        %1179 = vdwg.mxu0
        %v1180 = vsel %vm1066, %v1176, -1e+30
        %v1181 = vsel %vm1067, %v1178, -1e+30
        %v1182 = vsel %vm1107, %v1180, -inf
        %1183 = vmax.xlane.f32.xlu0 %v1182
        %v1184 = vpop.xlane.xlu0 %1183
        %v1185 = vsel %vm1107, %v1181, -inf
        %1186 = vmax.xlane.f32.xlu0 %v1185
        %v1187 = vpop.xlane.xlu0 %1186
        %v1188 = vsub.f32 %v1180, %v1184
        %v1189 = vsub.f32 %v1181, %v1187
        %v1190 = vmul.f32 %v1188, 1.442695
        %v1191 = vpow.pop %v1190
        %v1192 = vmul.f32 %v1189, 1.442695
        %v1193 = vpow.pop %v1192
        %v1194 = vsel %vm1107, %v1191, 0.0
        %1195 = vadd.xlane.f32.xlu0 %v1194
        %v1196 = vpop.xlane.xlu0 %1195
        %v1197 = vsel %vm1107, %v1193, 0.0
        %1198 = vadd.xlane.f32.xlu0 %v1197
        %v1199 = vpop.xlane.xlu0 %1198
        %v1200 = vrcp.pop %v1196
        %v1201 = vrcp.pop %v1199
        %v1202 = vmul.f32 %v1191, %v1200
        %v1203 = vmul.f32 %v1193, %v1201
        %v1204 = vpack.c.bf16 %v1203, %v1202
        %1205 = vrot.lane.b32.xlu0 %v1135, 96
        %v1206 = vpop.permute.xlu0 %1205
        %v1209 = vsel %vm1107, %v1204, 0
        %1211 = vmatpush.bf16.msra.mxu0 0
        %1212 = vmatpush.bf16.msra.mxu0 0
        %1213 = vmatpush.bf16.msra.mxu0 0
        %1214 = vmatpush.bf16.msra.mxu0 0
        %1215 = vmatpush.bf16.msra.mxu0 0
        %1216 = vmatpush.bf16.msra.mxu0 0
        %1217 = vmatpush.bf16.msra.mxu0 0
        %1218 = vmatpush.bf16.msra.mxu0 %v1206
        %1219 = vmatmul.bf16.gmra.mxu0 %v1209
        %v1220 = vpop.f32.mrf.mxu0
        %v1221 = vadd.f32 0.0, %v1220
        %v1222 = vpop.f32.mrf.mxu0
        %v1223 = vadd.f32 0.0, %v1222
        %1224 = vdwg.mxu0
        %1227 = vrot.lane.b32.xlu0 %v1221, 32
        %v1228 = vpop.permute.xlu0 %1227
        %1229 = vrot.lane.b32.xlu0 %v1223, 32
        %v1230 = vpop.permute.xlu0 %1229
        %vm1233 = vcmask 523520
        %1234 = vst.msk [vmem:[#allocation2] sm:$0xff] %vm1233, %v1228
        %1235 = vst.msk [vmem:[#allocation2 + $0x8] sm:$0xff] %vm1233, %v1230
        %1236 = vrot.lane.b32.xlu0 %v1078, 64
        %v1237 = vpop.permute.xlu0 %1236
        %1238 = vrot.lane.b32.xlu0 %v1083, 64
        %v1239 = vpop.permute.xlu0 %1238
        %v1241 = vsel %vm1084, %v1237, 0
        %v1244 = vsel %vm1084, %v1239, 0
        %1246 = vmatpush.bf16.xpose.msra.mxu0 0
        %1247 = vmatpush.bf16.xpose.msra.mxu0 0
        %1248 = vmatpush.bf16.xpose.msra.mxu0 0
        %1249 = vmatpush.bf16.xpose.msra.mxu0 0
        %1250 = vmatpush.bf16.xpose.msra.mxu0 0
        %1251 = vmatpush.bf16.xpose.msra.mxu0 0
        %1252 = vmatpush.bf16.xpose.msra.mxu0 0
        %1253 = vmatpush.bf16.xpose.msra.mxu0 %v1244
        %1254 = vmatmul.bf16.gmra.mxu0 %v1241
        %v1255 = vpop.f32.mrf.mxu0
        %v1256 = vadd.f32 0.0, %v1255
        %v1257 = vpop.f32.mrf.mxu0
        %v1258 = vadd.f32 0.0, %v1257
        %1259 = vdwg.mxu0
        %v1260 = vsel %vm1066, %v1256, -1e+30
        %v1261 = vsel %vm1067, %v1258, -1e+30
        %v1262 = vsel %vm1107, %v1260, -inf
        %1263 = vmax.xlane.f32.xlu0 %v1262
        %v1264 = vpop.xlane.xlu0 %1263
        %v1265 = vsel %vm1107, %v1261, -inf
        %1266 = vmax.xlane.f32.xlu0 %v1265
        %v1267 = vpop.xlane.xlu0 %1266
        %v1268 = vsub.f32 %v1260, %v1264
        %v1269 = vsub.f32 %v1261, %v1267
        %v1270 = vmul.f32 %v1268, 1.442695
        %v1271 = vpow.pop %v1270
        %v1272 = vmul.f32 %v1269, 1.442695
        %v1273 = vpow.pop %v1272
        %v1274 = vsel %vm1107, %v1271, 0.0
        %1275 = vadd.xlane.f32.xlu0 %v1274
        %v1276 = vpop.xlane.xlu0 %1275
        %v1277 = vsel %vm1107, %v1273, 0.0
        %1278 = vadd.xlane.f32.xlu0 %v1277
        %v1279 = vpop.xlane.xlu0 %1278
        %v1280 = vrcp.pop %v1276
        %v1281 = vrcp.pop %v1279
        %v1282 = vmul.f32 %v1271, %v1280
        %v1283 = vmul.f32 %v1273, %v1281
        %v1284 = vpack.c.bf16 %v1283, %v1282
        %1285 = vrot.lane.b32.xlu0 %v1135, 64
        %v1286 = vpop.permute.xlu0 %1285
        %v1289 = vsel %vm1107, %v1284, 0
        %1291 = vmatpush.bf16.msra.mxu0 0
        %1292 = vmatpush.bf16.msra.mxu0 0
        %1293 = vmatpush.bf16.msra.mxu0 0
        %1294 = vmatpush.bf16.msra.mxu0 0
        %1295 = vmatpush.bf16.msra.mxu0 0
        %1296 = vmatpush.bf16.msra.mxu0 0
        %1297 = vmatpush.bf16.msra.mxu0 0
        %1298 = vmatpush.bf16.msra.mxu0 %v1286
        %1299 = vmatmul.bf16.gmra.mxu0 %v1289
        %v1300 = vpop.f32.mrf.mxu0
        %v1301 = vadd.f32 0.0, %v1300
        %v1302 = vpop.f32.mrf.mxu0
        %v1303 = vadd.f32 0.0, %v1302
        %1304 = vdwg.mxu0
        %1307 = vrot.lane.b32.xlu0 %v1301, 64
        %v1308 = vpop.permute.xlu0 %1307
        %1309 = vrot.lane.b32.xlu0 %v1303, 64
        %v1310 = vpop.permute.xlu0 %1309
        %vm1313 = vcmask 785920
        %1314 = vst.msk [vmem:[#allocation2] sm:$0xff] %vm1313, %v1308
        %1315 = vst.msk [vmem:[#allocation2 + $0x8] sm:$0xff] %vm1313, %v1310
        %1316 = vrot.lane.b32.xlu0 %v1078, 32
        %v1317 = vpop.permute.xlu0 %1316
        %1318 = vrot.lane.b32.xlu0 %v1083, 32
        %v1319 = vpop.permute.xlu0 %1318
        %v1321 = vsel %vm1084, %v1317, 0
        %v1324 = vsel %vm1084, %v1319, 0
        %1326 = vmatpush.bf16.xpose.msra.mxu0 0
        %1327 = vmatpush.bf16.xpose.msra.mxu0 0
        %1328 = vmatpush.bf16.xpose.msra.mxu0 0
        %1329 = vmatpush.bf16.xpose.msra.mxu0 0
        %1330 = vmatpush.bf16.xpose.msra.mxu0 0
        %1331 = vmatpush.bf16.xpose.msra.mxu0 0
        %1332 = vmatpush.bf16.xpose.msra.mxu0 0
        %1333 = vmatpush.bf16.xpose.msra.mxu0 %v1324
        %1334 = vmatmul.bf16.gmra.mxu0 %v1321
        %v1335 = vpop.f32.mrf.mxu0
        %v1336 = vadd.f32 0.0, %v1335
        %v1337 = vpop.f32.mrf.mxu0
        %v1338 = vadd.f32 0.0, %v1337
        %1339 = vdwg.mxu0
        %v1340 = vsel %vm1066, %v1336, -1e+30
        %v1341 = vsel %vm1067, %v1338, -1e+30
        %v1342 = vsel %vm1107, %v1340, -inf
        %1343 = vmax.xlane.f32.xlu0 %v1342
        %v1344 = vpop.xlane.xlu0 %1343
        %v1345 = vsel %vm1107, %v1341, -inf
        %1346 = vmax.xlane.f32.xlu0 %v1345
        %v1347 = vpop.xlane.xlu0 %1346
        %v1348 = vsub.f32 %v1340, %v1344
        %v1349 = vsub.f32 %v1341, %v1347
        %v1350 = vmul.f32 %v1348, 1.442695
        %v1351 = vpow.pop %v1350
        %v1352 = vmul.f32 %v1349, 1.442695
        %v1353 = vpow.pop %v1352
        %v1354 = vsel %vm1107, %v1351, 0.0
        %1355 = vadd.xlane.f32.xlu0 %v1354
        %v1356 = vpop.xlane.xlu0 %1355
        %v1357 = vsel %vm1107, %v1353, 0.0
        %1358 = vadd.xlane.f32.xlu0 %v1357
        %v1359 = vpop.xlane.xlu0 %1358
        %v1360 = vrcp.pop %v1356
        %v1361 = vrcp.pop %v1359
        %v1362 = vmul.f32 %v1351, %v1360
        %v1363 = vmul.f32 %v1353, %v1361
        %v1364 = vpack.c.bf16 %v1363, %v1362
        %1365 = vrot.lane.b32.xlu0 %v1135, 32
        %v1366 = vpop.permute.xlu0 %1365
        %v1369 = vsel %vm1107, %v1364, 0
        %1371 = vmatpush.bf16.msra.mxu0 0
        %1372 = vmatpush.bf16.msra.mxu0 0
        %1373 = vmatpush.bf16.msra.mxu0 0
        %1374 = vmatpush.bf16.msra.mxu0 0
        %1375 = vmatpush.bf16.msra.mxu0 0
        %1376 = vmatpush.bf16.msra.mxu0 0
        %1377 = vmatpush.bf16.msra.mxu0 0
        %1378 = vmatpush.bf16.msra.mxu0 %v1366
        %1379 = vmatmul.bf16.gmra.mxu0 %v1369
        %v1380 = vpop.f32.mrf.mxu0
        %v1381 = vadd.f32 0.0, %v1380
        %v1382 = vpop.f32.mrf.mxu0
        %v1383 = vadd.f32 0.0, %v1382
        %1384 = vdwg.mxu0
        %1387 = vrot.lane.b32.xlu0 %v1381, 96
        %v1388 = vpop.permute.xlu0 %1387
        %1389 = vrot.lane.b32.xlu0 %v1383, 96
        %v1390 = vpop.permute.xlu0 %1389
        %vm1393 = vcmask 1048320
        %1394 = vst.msk [vmem:[#allocation2] sm:$0xff] %vm1393, %v1388
        %1395 = vst.msk [vmem:[#allocation2 + $0x8] sm:$0xff] %vm1393, %v1390
        %s1396 = sadd.s32 %s1062, 1
        %s1397 = sld [smem:[#allocation4 + %s1396]]
        %v1398 = vstv %s1397
        %vm1399 = vcmp.lt.s32.totalorder %v1059, %v1398
        %vm1400 = vmand %vm1060, %vm1399
        %vm1401 = vmand %vm1061, %vm1399
        %v1402 = vpack.c.bf16 %v983, %v983
        %v1403 = vpack.c.bf16 %v985, %v985
        %v1404 = vpack.c.bf16 %v1012, %v1012
        %v1405 = vpack.c.bf16 %v1014, %v1014
        %v1406 = vpack.c.bf16 %v1041, %v1041
        %v1407 = vpack.c.bf16 %v1043, %v1043
        %v1410 = vunpack.c.l.b16 %v1402
        %v1411 = vunpack.c.l.b16 %v1403
        %v1412 = vpack.c.b16 %v1411, %v1410
        %v1415 = vunpack.c.l.b16 %v1404
        %v1416 = vunpack.c.l.b16 %v1405
        %v1417 = vpack.c.b16 %v1416, %v1415
        %v1419 = vsel %vm1084, %v1412, 0
        %v1422 = vsel %vm1084, %v1417, 0
        %1424 = vmatpush.bf16.xpose.msra.mxu0 0
        %1425 = vmatpush.bf16.xpose.msra.mxu0 0
        %1426 = vmatpush.bf16.xpose.msra.mxu0 0
        %1427 = vmatpush.bf16.xpose.msra.mxu0 0
        %1428 = vmatpush.bf16.xpose.msra.mxu0 0
        %1429 = vmatpush.bf16.xpose.msra.mxu0 0
        %1430 = vmatpush.bf16.xpose.msra.mxu0 0
        %1431 = vmatpush.bf16.xpose.msra.mxu0 %v1422
        %1432 = vmatmul.bf16.gmra.mxu0 %v1419
        %v1433 = vpop.f32.mrf.mxu0
        %v1434 = vadd.f32 0.0, %v1433
        %v1435 = vpop.f32.mrf.mxu0
        %v1436 = vadd.f32 0.0, %v1435
        %1437 = vdwg.mxu0
        %v1438 = vsel %vm1400, %v1434, -1e+30
        %v1439 = vsel %vm1401, %v1436, -1e+30
        %v1440 = vsel %vm1107, %v1438, -inf
        %1441 = vmax.xlane.f32.xlu0 %v1440
        %v1442 = vpop.xlane.xlu0 %1441
        %v1443 = vsel %vm1107, %v1439, -inf
        %1444 = vmax.xlane.f32.xlu0 %v1443
        %v1445 = vpop.xlane.xlu0 %1444
        %v1446 = vsub.f32 %v1438, %v1442
        %v1447 = vsub.f32 %v1439, %v1445
        %v1448 = vmul.f32 %v1446, 1.442695
        %v1449 = vpow.pop %v1448
        %v1450 = vmul.f32 %v1447, 1.442695
        %v1451 = vpow.pop %v1450
        %v1452 = vsel %vm1107, %v1449, 0.0
        %1453 = vadd.xlane.f32.xlu0 %v1452
        %v1454 = vpop.xlane.xlu0 %1453
        %v1455 = vsel %vm1107, %v1451, 0.0
        %1456 = vadd.xlane.f32.xlu0 %v1455
        %v1457 = vpop.xlane.xlu0 %1456
        %v1458 = vrcp.pop %v1454
        %v1459 = vrcp.pop %v1457
        %v1460 = vmul.f32 %v1449, %v1458
        %v1461 = vmul.f32 %v1451, %v1459
        %v1462 = vpack.c.bf16 %v1461, %v1460
        %v1465 = vunpack.c.l.b16 %v1406
        %v1466 = vunpack.c.l.b16 %v1407
        %v1467 = vpack.c.b16 %v1466, %v1465
        %v1470 = vsel %vm1107, %v1462, 0
        %1472 = vmatpush.bf16.msra.mxu0 0
        %1473 = vmatpush.bf16.msra.mxu0 0
        %1474 = vmatpush.bf16.msra.mxu0 0
        %1475 = vmatpush.bf16.msra.mxu0 0
        %1476 = vmatpush.bf16.msra.mxu0 0
        %1477 = vmatpush.bf16.msra.mxu0 0
        %1478 = vmatpush.bf16.msra.mxu0 0
        %1479 = vmatpush.bf16.msra.mxu0 %v1467
        %1480 = vmatmul.bf16.gmra.mxu0 %v1470
        %v1481 = vpop.f32.mrf.mxu0
        %v1482 = vadd.f32 0.0, %v1481
        %v1483 = vpop.f32.mrf.mxu0
        %v1484 = vadd.f32 0.0, %v1483
        %1485 = vdwg.mxu0
        %1486 = vst.msk [vmem:[#allocation2 + $0x10] sm:$0xff] %vm1084, %v1482
        %1487 = vst.msk [vmem:[#allocation2 + $0x18] sm:$0xff] %vm1084, %v1484
        %1488 = vrot.lane.b32.xlu0 %v1412, 96
        %v1489 = vpop.permute.xlu0 %1488
        %1490 = vrot.lane.b32.xlu0 %v1417, 96
        %v1491 = vpop.permute.xlu0 %1490
        %v1493 = vsel %vm1084, %v1489, 0
        %v1496 = vsel %vm1084, %v1491, 0
        %1498 = vmatpush.bf16.xpose.msra.mxu0 0
        %1499 = vmatpush.bf16.xpose.msra.mxu0 0
        %1500 = vmatpush.bf16.xpose.msra.mxu0 0
        %1501 = vmatpush.bf16.xpose.msra.mxu0 0
        %1502 = vmatpush.bf16.xpose.msra.mxu0 0
        %1503 = vmatpush.bf16.xpose.msra.mxu0 0
        %1504 = vmatpush.bf16.xpose.msra.mxu0 0
        %1505 = vmatpush.bf16.xpose.msra.mxu0 %v1496
        %1506 = vmatmul.bf16.gmra.mxu0 %v1493
        %v1507 = vpop.f32.mrf.mxu0
        %v1508 = vadd.f32 0.0, %v1507
        %v1509 = vpop.f32.mrf.mxu0
        %v1510 = vadd.f32 0.0, %v1509
        %1511 = vdwg.mxu0
        %v1512 = vsel %vm1400, %v1508, -1e+30
        %v1513 = vsel %vm1401, %v1510, -1e+30
        %v1514 = vsel %vm1107, %v1512, -inf
        %1515 = vmax.xlane.f32.xlu0 %v1514
        %v1516 = vpop.xlane.xlu0 %1515
        %v1517 = vsel %vm1107, %v1513, -inf
        %1518 = vmax.xlane.f32.xlu0 %v1517
        %v1519 = vpop.xlane.xlu0 %1518
        %v1520 = vsub.f32 %v1512, %v1516
        %v1521 = vsub.f32 %v1513, %v1519
        %v1522 = vmul.f32 %v1520, 1.442695
        %v1523 = vpow.pop %v1522
        %v1524 = vmul.f32 %v1521, 1.442695
        %v1525 = vpow.pop %v1524
        %v1526 = vsel %vm1107, %v1523, 0.0
        %1527 = vadd.xlane.f32.xlu0 %v1526
        %v1528 = vpop.xlane.xlu0 %1527
        %v1529 = vsel %vm1107, %v1525, 0.0
        %1530 = vadd.xlane.f32.xlu0 %v1529
        %v1531 = vpop.xlane.xlu0 %1530
        %v1532 = vrcp.pop %v1528
        %v1533 = vrcp.pop %v1531
        %v1534 = vmul.f32 %v1523, %v1532
        %v1535 = vmul.f32 %v1525, %v1533
        %v1536 = vpack.c.bf16 %v1535, %v1534
        %1537 = vrot.lane.b32.xlu0 %v1467, 96
        %v1538 = vpop.permute.xlu0 %1537
        %v1541 = vsel %vm1107, %v1536, 0
        %1543 = vmatpush.bf16.msra.mxu0 0
        %1544 = vmatpush.bf16.msra.mxu0 0
        %1545 = vmatpush.bf16.msra.mxu0 0
        %1546 = vmatpush.bf16.msra.mxu0 0
        %1547 = vmatpush.bf16.msra.mxu0 0
        %1548 = vmatpush.bf16.msra.mxu0 0
        %1549 = vmatpush.bf16.msra.mxu0 0
        %1550 = vmatpush.bf16.msra.mxu0 %v1538
        %1551 = vmatmul.bf16.gmra.mxu0 %v1541
        %v1552 = vpop.f32.mrf.mxu0
        %v1553 = vadd.f32 0.0, %v1552
        %v1554 = vpop.f32.mrf.mxu0
        %v1555 = vadd.f32 0.0, %v1554
        %1556 = vdwg.mxu0
        %1559 = vrot.lane.b32.xlu0 %v1553, 32
        %v1560 = vpop.permute.xlu0 %1559
        %1561 = vrot.lane.b32.xlu0 %v1555, 32
        %v1562 = vpop.permute.xlu0 %1561
        %1565 = vst.msk [vmem:[#allocation2 + $0x10] sm:$0xff] %vm1233, %v1560
        %1566 = vst.msk [vmem:[#allocation2 + $0x18] sm:$0xff] %vm1233, %v1562
        %1567 = vrot.lane.b32.xlu0 %v1412, 64
        %v1568 = vpop.permute.xlu0 %1567
        %1569 = vrot.lane.b32.xlu0 %v1417, 64
        %v1570 = vpop.permute.xlu0 %1569
        %v1572 = vsel %vm1084, %v1568, 0
        %v1575 = vsel %vm1084, %v1570, 0
        %1577 = vmatpush.bf16.xpose.msra.mxu0 0
        %1578 = vmatpush.bf16.xpose.msra.mxu0 0
        %1579 = vmatpush.bf16.xpose.msra.mxu0 0
        %1580 = vmatpush.bf16.xpose.msra.mxu0 0
        %1581 = vmatpush.bf16.xpose.msra.mxu0 0
        %1582 = vmatpush.bf16.xpose.msra.mxu0 0
        %1583 = vmatpush.bf16.xpose.msra.mxu0 0
        %1584 = vmatpush.bf16.xpose.msra.mxu0 %v1575
        %1585 = vmatmul.bf16.gmra.mxu0 %v1572
        %v1586 = vpop.f32.mrf.mxu0
        %v1587 = vadd.f32 0.0, %v1586
        %v1588 = vpop.f32.mrf.mxu0
        %v1589 = vadd.f32 0.0, %v1588
        %1590 = vdwg.mxu0
        %v1591 = vsel %vm1400, %v1587, -1e+30
        %v1592 = vsel %vm1401, %v1589, -1e+30
        %v1593 = vsel %vm1107, %v1591, -inf
        %1594 = vmax.xlane.f32.xlu0 %v1593
        %v1595 = vpop.xlane.xlu0 %1594
        %v1596 = vsel %vm1107, %v1592, -inf
        %1597 = vmax.xlane.f32.xlu0 %v1596
        %v1598 = vpop.xlane.xlu0 %1597
        %v1599 = vsub.f32 %v1591, %v1595
        %v1600 = vsub.f32 %v1592, %v1598
        %v1601 = vmul.f32 %v1599, 1.442695
        %v1602 = vpow.pop %v1601
        %v1603 = vmul.f32 %v1600, 1.442695
        %v1604 = vpow.pop %v1603
        %v1605 = vsel %vm1107, %v1602, 0.0
        %1606 = vadd.xlane.f32.xlu0 %v1605
        %v1607 = vpop.xlane.xlu0 %1606
        %v1608 = vsel %vm1107, %v1604, 0.0
        %1609 = vadd.xlane.f32.xlu0 %v1608
        %v1610 = vpop.xlane.xlu0 %1609
        %v1611 = vrcp.pop %v1607
        %v1612 = vrcp.pop %v1610
        %v1613 = vmul.f32 %v1602, %v1611
        %v1614 = vmul.f32 %v1604, %v1612
        %v1615 = vpack.c.bf16 %v1614, %v1613
        %1616 = vrot.lane.b32.xlu0 %v1467, 64
        %v1617 = vpop.permute.xlu0 %1616
        %v1620 = vsel %vm1107, %v1615, 0
        %1622 = vmatpush.bf16.msra.mxu0 0
        %1623 = vmatpush.bf16.msra.mxu0 0
        %1624 = vmatpush.bf16.msra.mxu0 0
        %1625 = vmatpush.bf16.msra.mxu0 0
        %1626 = vmatpush.bf16.msra.mxu0 0
        %1627 = vmatpush.bf16.msra.mxu0 0
        %1628 = vmatpush.bf16.msra.mxu0 0
        %1629 = vmatpush.bf16.msra.mxu0 %v1617
        %1630 = vmatmul.bf16.gmra.mxu0 %v1620
        %v1631 = vpop.f32.mrf.mxu0
        %v1632 = vadd.f32 0.0, %v1631
        %v1633 = vpop.f32.mrf.mxu0
        %v1634 = vadd.f32 0.0, %v1633
        %1635 = vdwg.mxu0
        %1638 = vrot.lane.b32.xlu0 %v1632, 64
        %v1639 = vpop.permute.xlu0 %1638
        %1640 = vrot.lane.b32.xlu0 %v1634, 64
        %v1641 = vpop.permute.xlu0 %1640
        %1644 = vst.msk [vmem:[#allocation2 + $0x10] sm:$0xff] %vm1313, %v1639
        %1645 = vst.msk [vmem:[#allocation2 + $0x18] sm:$0xff] %vm1313, %v1641
        %1646 = vrot.lane.b32.xlu0 %v1412, 32
        %v1647 = vpop.permute.xlu0 %1646
        %1648 = vrot.lane.b32.xlu0 %v1417, 32
        %v1649 = vpop.permute.xlu0 %1648
        %v1651 = vsel %vm1084, %v1647, 0
        %v1654 = vsel %vm1084, %v1649, 0
        %1656 = vmatpush.bf16.xpose.msra.mxu0 0
        %1657 = vmatpush.bf16.xpose.msra.mxu0 0
        %1658 = vmatpush.bf16.xpose.msra.mxu0 0
        %1659 = vmatpush.bf16.xpose.msra.mxu0 0
        %1660 = vmatpush.bf16.xpose.msra.mxu0 0
        %1661 = vmatpush.bf16.xpose.msra.mxu0 0
        %1662 = vmatpush.bf16.xpose.msra.mxu0 0
        %1663 = vmatpush.bf16.xpose.msra.mxu0 %v1654
        %1664 = vmatmul.bf16.gmra.mxu0 %v1651
        %v1665 = vpop.f32.mrf.mxu0
        %v1666 = vadd.f32 0.0, %v1665
        %v1667 = vpop.f32.mrf.mxu0
        %v1668 = vadd.f32 0.0, %v1667
        %1669 = vdwg.mxu0
        %v1670 = vsel %vm1400, %v1666, -1e+30
        %v1671 = vsel %vm1401, %v1668, -1e+30
        %v1672 = vsel %vm1107, %v1670, -inf
        %1673 = vmax.xlane.f32.xlu0 %v1672
        %v1674 = vpop.xlane.xlu0 %1673
        %v1675 = vsel %vm1107, %v1671, -inf
        %1676 = vmax.xlane.f32.xlu0 %v1675
        %v1677 = vpop.xlane.xlu0 %1676
        %v1678 = vsub.f32 %v1670, %v1674
        %v1679 = vsub.f32 %v1671, %v1677
        %v1680 = vmul.f32 %v1678, 1.442695
        %v1681 = vpow.pop %v1680
        %v1682 = vmul.f32 %v1679, 1.442695
        %v1683 = vpow.pop %v1682
        %v1684 = vsel %vm1107, %v1681, 0.0
        %1685 = vadd.xlane.f32.xlu0 %v1684
        %v1686 = vpop.xlane.xlu0 %1685
        %v1687 = vsel %vm1107, %v1683, 0.0
        %1688 = vadd.xlane.f32.xlu0 %v1687
        %v1689 = vpop.xlane.xlu0 %1688
        %v1690 = vrcp.pop %v1686
        %v1691 = vrcp.pop %v1689
        %v1692 = vmul.f32 %v1681, %v1690
        %v1693 = vmul.f32 %v1683, %v1691
        %v1694 = vpack.c.bf16 %v1693, %v1692
        %1695 = vrot.lane.b32.xlu0 %v1467, 32
        %v1696 = vpop.permute.xlu0 %1695
        %v1699 = vsel %vm1107, %v1694, 0
        %1701 = vmatpush.bf16.msra.mxu0 0
        %1702 = vmatpush.bf16.msra.mxu0 0
        %1703 = vmatpush.bf16.msra.mxu0 0
        %1704 = vmatpush.bf16.msra.mxu0 0
        %1705 = vmatpush.bf16.msra.mxu0 0
        %1706 = vmatpush.bf16.msra.mxu0 0
        %1707 = vmatpush.bf16.msra.mxu0 0
        %1708 = vmatpush.bf16.msra.mxu0 %v1696
        %1709 = vmatmul.bf16.gmra.mxu0 %v1699
        %v1710 = vpop.f32.mrf.mxu0
        %v1711 = vadd.f32 0.0, %v1710
        %v1712 = vpop.f32.mrf.mxu0
        %v1713 = vadd.f32 0.0, %v1712
        %1714 = vdwg.mxu0
        %1717 = vrot.lane.b32.xlu0 %v1711, 96
        %v1718 = vpop.permute.xlu0 %1717
        %1719 = vrot.lane.b32.xlu0 %v1713, 96
        %v1720 = vpop.permute.xlu0 %1719
        %1723 = vst.msk [vmem:[#allocation2 + $0x10] sm:$0xff] %vm1393, %v1718
        %1724 = vst.msk [vmem:[#allocation2 + $0x18] sm:$0xff] %vm1393, %v1720
        %s1725 = sadd.s32 %s1062, 2
        %s1726 = sld [smem:[#allocation4 + %s1725]]
        %v1727 = vstv %s1726
        %vm1728 = vcmp.lt.s32.totalorder %v1059, %v1727
        %vm1729 = vmand %vm1060, %vm1728
        %vm1730 = vmand %vm1061, %vm1728
        %v1731 = vpack.c.bf16 %v988, %v988
        %v1732 = vpack.c.bf16 %v990, %v990
        %v1733 = vpack.c.bf16 %v1017, %v1017
        %v1734 = vpack.c.bf16 %v1019, %v1019
        %v1735 = vpack.c.bf16 %v1046, %v1046
        %v1736 = vpack.c.bf16 %v1048, %v1048
        %v1739 = vunpack.c.l.b16 %v1731
        %v1740 = vunpack.c.l.b16 %v1732
        %v1741 = vpack.c.b16 %v1740, %v1739
        %v1744 = vunpack.c.l.b16 %v1733
        %v1745 = vunpack.c.l.b16 %v1734
        %v1746 = vpack.c.b16 %v1745, %v1744
        %v1748 = vsel %vm1084, %v1741, 0
        %v1751 = vsel %vm1084, %v1746, 0
        %1753 = vmatpush.bf16.xpose.msra.mxu0 0
        %1754 = vmatpush.bf16.xpose.msra.mxu0 0
        %1755 = vmatpush.bf16.xpose.msra.mxu0 0
        %1756 = vmatpush.bf16.xpose.msra.mxu0 0
        %1757 = vmatpush.bf16.xpose.msra.mxu0 0
        %1758 = vmatpush.bf16.xpose.msra.mxu0 0
        %1759 = vmatpush.bf16.xpose.msra.mxu0 0
        %1760 = vmatpush.bf16.xpose.msra.mxu0 %v1751
        %1761 = vmatmul.bf16.gmra.mxu0 %v1748
        %v1762 = vpop.f32.mrf.mxu0
        %v1763 = vadd.f32 0.0, %v1762
        %v1764 = vpop.f32.mrf.mxu0
        %v1765 = vadd.f32 0.0, %v1764
        %1766 = vdwg.mxu0
        %v1767 = vsel %vm1729, %v1763, -1e+30
        %v1768 = vsel %vm1730, %v1765, -1e+30
        %v1769 = vsel %vm1107, %v1767, -inf
        %1770 = vmax.xlane.f32.xlu0 %v1769
        %v1771 = vpop.xlane.xlu0 %1770
        %v1772 = vsel %vm1107, %v1768, -inf
        %1773 = vmax.xlane.f32.xlu0 %v1772
        %v1774 = vpop.xlane.xlu0 %1773
        %v1775 = vsub.f32 %v1767, %v1771
        %v1776 = vsub.f32 %v1768, %v1774
        %v1777 = vmul.f32 %v1775, 1.442695
        %v1778 = vpow.pop %v1777
        %v1779 = vmul.f32 %v1776, 1.442695
        %v1780 = vpow.pop %v1779
        %v1781 = vsel %vm1107, %v1778, 0.0
        %1782 = vadd.xlane.f32.xlu0 %v1781
        %v1783 = vpop.xlane.xlu0 %1782
        %v1784 = vsel %vm1107, %v1780, 0.0
        %1785 = vadd.xlane.f32.xlu0 %v1784
        %v1786 = vpop.xlane.xlu0 %1785
        %v1787 = vrcp.pop %v1783
        %v1788 = vrcp.pop %v1786
        %v1789 = vmul.f32 %v1778, %v1787
        %v1790 = vmul.f32 %v1780, %v1788
        %v1791 = vpack.c.bf16 %v1790, %v1789
        %v1794 = vunpack.c.l.b16 %v1735
        %v1795 = vunpack.c.l.b16 %v1736
        %v1796 = vpack.c.b16 %v1795, %v1794
        %v1799 = vsel %vm1107, %v1791, 0
        %1801 = vmatpush.bf16.msra.mxu0 0
        %1802 = vmatpush.bf16.msra.mxu0 0
        %1803 = vmatpush.bf16.msra.mxu0 0
        %1804 = vmatpush.bf16.msra.mxu0 0
        %1805 = vmatpush.bf16.msra.mxu0 0
        %1806 = vmatpush.bf16.msra.mxu0 0
        %1807 = vmatpush.bf16.msra.mxu0 0
        %1808 = vmatpush.bf16.msra.mxu0 %v1796
        %1809 = vmatmul.bf16.gmra.mxu0 %v1799
        %v1810 = vpop.f32.mrf.mxu0
        %v1811 = vadd.f32 0.0, %v1810
        %v1812 = vpop.f32.mrf.mxu0
        %v1813 = vadd.f32 0.0, %v1812
        %1814 = vdwg.mxu0
        %1815 = vst.msk [vmem:[#allocation2 + $0x20] sm:$0xff] %vm1084, %v1811
        %1816 = vst.msk [vmem:[#allocation2 + $0x28] sm:$0xff] %vm1084, %v1813
        %1817 = vrot.lane.b32.xlu0 %v1741, 96
        %v1818 = vpop.permute.xlu0 %1817
        %1819 = vrot.lane.b32.xlu0 %v1746, 96
        %v1820 = vpop.permute.xlu0 %1819
        %v1822 = vsel %vm1084, %v1818, 0
        %v1825 = vsel %vm1084, %v1820, 0
        %1827 = vmatpush.bf16.xpose.msra.mxu0 0
        %1828 = vmatpush.bf16.xpose.msra.mxu0 0
        %1829 = vmatpush.bf16.xpose.msra.mxu0 0
        %1830 = vmatpush.bf16.xpose.msra.mxu0 0
        %1831 = vmatpush.bf16.xpose.msra.mxu0 0
        %1832 = vmatpush.bf16.xpose.msra.mxu0 0
        %1833 = vmatpush.bf16.xpose.msra.mxu0 0
        %1834 = vmatpush.bf16.xpose.msra.mxu0 %v1825
        %1835 = vmatmul.bf16.gmra.mxu0 %v1822
        %v1836 = vpop.f32.mrf.mxu0
        %v1837 = vadd.f32 0.0, %v1836
        %v1838 = vpop.f32.mrf.mxu0
        %v1839 = vadd.f32 0.0, %v1838
        %1840 = vdwg.mxu0
        %v1841 = vsel %vm1729, %v1837, -1e+30
        %v1842 = vsel %vm1730, %v1839, -1e+30
        %v1843 = vsel %vm1107, %v1841, -inf
        %1844 = vmax.xlane.f32.xlu0 %v1843
        %v1845 = vpop.xlane.xlu0 %1844
        %v1846 = vsel %vm1107, %v1842, -inf
        %1847 = vmax.xlane.f32.xlu0 %v1846
        %v1848 = vpop.xlane.xlu0 %1847
        %v1849 = vsub.f32 %v1841, %v1845
        %v1850 = vsub.f32 %v1842, %v1848
        %v1851 = vmul.f32 %v1849, 1.442695
        %v1852 = vpow.pop %v1851
        %v1853 = vmul.f32 %v1850, 1.442695
        %v1854 = vpow.pop %v1853
        %v1855 = vsel %vm1107, %v1852, 0.0
        %1856 = vadd.xlane.f32.xlu0 %v1855
        %v1857 = vpop.xlane.xlu0 %1856
        %v1858 = vsel %vm1107, %v1854, 0.0
        %1859 = vadd.xlane.f32.xlu0 %v1858
        %v1860 = vpop.xlane.xlu0 %1859
        %v1861 = vrcp.pop %v1857
        %v1862 = vrcp.pop %v1860
        %v1863 = vmul.f32 %v1852, %v1861
        %v1864 = vmul.f32 %v1854, %v1862
        %v1865 = vpack.c.bf16 %v1864, %v1863
        %1866 = vrot.lane.b32.xlu0 %v1796, 96
        %v1867 = vpop.permute.xlu0 %1866
        %v1870 = vsel %vm1107, %v1865, 0
        %1872 = vmatpush.bf16.msra.mxu0 0
        %1873 = vmatpush.bf16.msra.mxu0 0
        %1874 = vmatpush.bf16.msra.mxu0 0
        %1875 = vmatpush.bf16.msra.mxu0 0
        %1876 = vmatpush.bf16.msra.mxu0 0
        %1877 = vmatpush.bf16.msra.mxu0 0
        %1878 = vmatpush.bf16.msra.mxu0 0
        %1879 = vmatpush.bf16.msra.mxu0 %v1867
        %1880 = vmatmul.bf16.gmra.mxu0 %v1870
        %v1881 = vpop.f32.mrf.mxu0
        %v1882 = vadd.f32 0.0, %v1881
        %v1883 = vpop.f32.mrf.mxu0
        %v1884 = vadd.f32 0.0, %v1883
        %1885 = vdwg.mxu0
        %1888 = vrot.lane.b32.xlu0 %v1882, 32
        %v1889 = vpop.permute.xlu0 %1888
        %1890 = vrot.lane.b32.xlu0 %v1884, 32
        %v1891 = vpop.permute.xlu0 %1890
        %1894 = vst.msk [vmem:[#allocation2 + $0x20] sm:$0xff] %vm1233, %v1889
        %1895 = vst.msk [vmem:[#allocation2 + $0x28] sm:$0xff] %vm1233, %v1891
        %1896 = vrot.lane.b32.xlu0 %v1741, 64
        %v1897 = vpop.permute.xlu0 %1896
        %1898 = vrot.lane.b32.xlu0 %v1746, 64
        %v1899 = vpop.permute.xlu0 %1898
        %v1901 = vsel %vm1084, %v1897, 0
        %v1904 = vsel %vm1084, %v1899, 0
        %1906 = vmatpush.bf16.xpose.msra.mxu0 0
        %1907 = vmatpush.bf16.xpose.msra.mxu0 0
        %1908 = vmatpush.bf16.xpose.msra.mxu0 0
        %1909 = vmatpush.bf16.xpose.msra.mxu0 0
        %1910 = vmatpush.bf16.xpose.msra.mxu0 0
        %1911 = vmatpush.bf16.xpose.msra.mxu0 0
        %1912 = vmatpush.bf16.xpose.msra.mxu0 0
        %1913 = vmatpush.bf16.xpose.msra.mxu0 %v1904
        %1914 = vmatmul.bf16.gmra.mxu0 %v1901
        %v1915 = vpop.f32.mrf.mxu0
        %v1916 = vadd.f32 0.0, %v1915
        %v1917 = vpop.f32.mrf.mxu0
        %v1918 = vadd.f32 0.0, %v1917
        %1919 = vdwg.mxu0
        %v1920 = vsel %vm1729, %v1916, -1e+30
        %v1921 = vsel %vm1730, %v1918, -1e+30
        %v1922 = vsel %vm1107, %v1920, -inf
        %1923 = vmax.xlane.f32.xlu0 %v1922
        %v1924 = vpop.xlane.xlu0 %1923
        %v1925 = vsel %vm1107, %v1921, -inf
        %1926 = vmax.xlane.f32.xlu0 %v1925
        %v1927 = vpop.xlane.xlu0 %1926
        %v1928 = vsub.f32 %v1920, %v1924
        %v1929 = vsub.f32 %v1921, %v1927
        %v1930 = vmul.f32 %v1928, 1.442695
        %v1931 = vpow.pop %v1930
        %v1932 = vmul.f32 %v1929, 1.442695
        %v1933 = vpow.pop %v1932
        %v1934 = vsel %vm1107, %v1931, 0.0
        %1935 = vadd.xlane.f32.xlu0 %v1934
        %v1936 = vpop.xlane.xlu0 %1935
        %v1937 = vsel %vm1107, %v1933, 0.0
        %1938 = vadd.xlane.f32.xlu0 %v1937
        %v1939 = vpop.xlane.xlu0 %1938
        %v1940 = vrcp.pop %v1936
        %v1941 = vrcp.pop %v1939
        %v1942 = vmul.f32 %v1931, %v1940
        %v1943 = vmul.f32 %v1933, %v1941
        %v1944 = vpack.c.bf16 %v1943, %v1942
        %1945 = vrot.lane.b32.xlu0 %v1796, 64
        %v1946 = vpop.permute.xlu0 %1945
        %v1949 = vsel %vm1107, %v1944, 0
        %1951 = vmatpush.bf16.msra.mxu0 0
        %1952 = vmatpush.bf16.msra.mxu0 0
        %1953 = vmatpush.bf16.msra.mxu0 0
        %1954 = vmatpush.bf16.msra.mxu0 0
        %1955 = vmatpush.bf16.msra.mxu0 0
        %1956 = vmatpush.bf16.msra.mxu0 0
        %1957 = vmatpush.bf16.msra.mxu0 0
        %1958 = vmatpush.bf16.msra.mxu0 %v1946
        %1959 = vmatmul.bf16.gmra.mxu0 %v1949
        %v1960 = vpop.f32.mrf.mxu0
        %v1961 = vadd.f32 0.0, %v1960
        %v1962 = vpop.f32.mrf.mxu0
        %v1963 = vadd.f32 0.0, %v1962
        %1964 = vdwg.mxu0
        %1967 = vrot.lane.b32.xlu0 %v1961, 64
        %v1968 = vpop.permute.xlu0 %1967
        %1969 = vrot.lane.b32.xlu0 %v1963, 64
        %v1970 = vpop.permute.xlu0 %1969
        %1973 = vst.msk [vmem:[#allocation2 + $0x20] sm:$0xff] %vm1313, %v1968
        %1974 = vst.msk [vmem:[#allocation2 + $0x28] sm:$0xff] %vm1313, %v1970
        %1975 = vrot.lane.b32.xlu0 %v1741, 32
        %v1976 = vpop.permute.xlu0 %1975
        %1977 = vrot.lane.b32.xlu0 %v1746, 32
        %v1978 = vpop.permute.xlu0 %1977
        %v1980 = vsel %vm1084, %v1976, 0
        %v1983 = vsel %vm1084, %v1978, 0
        %1985 = vmatpush.bf16.xpose.msra.mxu0 0
        %1986 = vmatpush.bf16.xpose.msra.mxu0 0
        %1987 = vmatpush.bf16.xpose.msra.mxu0 0
        %1988 = vmatpush.bf16.xpose.msra.mxu0 0
        %1989 = vmatpush.bf16.xpose.msra.mxu0 0
        %1990 = vmatpush.bf16.xpose.msra.mxu0 0
        %1991 = vmatpush.bf16.xpose.msra.mxu0 0
        %1992 = vmatpush.bf16.xpose.msra.mxu0 %v1983
        %1993 = vmatmul.bf16.gmra.mxu0 %v1980
        %v1994 = vpop.f32.mrf.mxu0
        %v1995 = vadd.f32 0.0, %v1994
        %v1996 = vpop.f32.mrf.mxu0
        %v1997 = vadd.f32 0.0, %v1996
        %1998 = vdwg.mxu0
        %v1999 = vsel %vm1729, %v1995, -1e+30
        %v2000 = vsel %vm1730, %v1997, -1e+30
        %v2001 = vsel %vm1107, %v1999, -inf
        %2002 = vmax.xlane.f32.xlu0 %v2001
        %v2003 = vpop.xlane.xlu0 %2002
        %v2004 = vsel %vm1107, %v2000, -inf
        %2005 = vmax.xlane.f32.xlu0 %v2004
        %v2006 = vpop.xlane.xlu0 %2005
        %v2007 = vsub.f32 %v1999, %v2003
        %v2008 = vsub.f32 %v2000, %v2006
        %v2009 = vmul.f32 %v2007, 1.442695
        %v2010 = vpow.pop %v2009
        %v2011 = vmul.f32 %v2008, 1.442695
        %v2012 = vpow.pop %v2011
        %v2013 = vsel %vm1107, %v2010, 0.0
        %2014 = vadd.xlane.f32.xlu0 %v2013
        %v2015 = vpop.xlane.xlu0 %2014
        %v2016 = vsel %vm1107, %v2012, 0.0
        %2017 = vadd.xlane.f32.xlu0 %v2016
        %v2018 = vpop.xlane.xlu0 %2017
        %v2019 = vrcp.pop %v2015
        %v2020 = vrcp.pop %v2018
        %v2021 = vmul.f32 %v2010, %v2019
        %v2022 = vmul.f32 %v2012, %v2020
        %v2023 = vpack.c.bf16 %v2022, %v2021
        %2024 = vrot.lane.b32.xlu0 %v1796, 32
        %v2025 = vpop.permute.xlu0 %2024
        %v2028 = vsel %vm1107, %v2023, 0
        %2030 = vmatpush.bf16.msra.mxu0 0
        %2031 = vmatpush.bf16.msra.mxu0 0
        %2032 = vmatpush.bf16.msra.mxu0 0
        %2033 = vmatpush.bf16.msra.mxu0 0
        %2034 = vmatpush.bf16.msra.mxu0 0
        %2035 = vmatpush.bf16.msra.mxu0 0
        %2036 = vmatpush.bf16.msra.mxu0 0
        %2037 = vmatpush.bf16.msra.mxu0 %v2025
        %2038 = vmatmul.bf16.gmra.mxu0 %v2028
        %v2039 = vpop.f32.mrf.mxu0
        %v2040 = vadd.f32 0.0, %v2039
        %v2041 = vpop.f32.mrf.mxu0
        %v2042 = vadd.f32 0.0, %v2041
        %2043 = vdwg.mxu0
        %2046 = vrot.lane.b32.xlu0 %v2040, 96
        %v2047 = vpop.permute.xlu0 %2046
        %2048 = vrot.lane.b32.xlu0 %v2042, 96
        %v2049 = vpop.permute.xlu0 %2048
        %2052 = vst.msk [vmem:[#allocation2 + $0x20] sm:$0xff] %vm1393, %v2047
        %2053 = vst.msk [vmem:[#allocation2 + $0x28] sm:$0xff] %vm1393, %v2049
        %s2054 = sadd.s32 %s1062, 3
        %s2055 = sld [smem:[#allocation4 + %s2054]]
        %v2056 = vstv %s2055
        %vm2057 = vcmp.lt.s32.totalorder %v1059, %v2056
        %vm2058 = vmand %vm1060, %vm2057
        %vm2059 = vmand %vm1061, %vm2057
        %v2060 = vpack.c.bf16 %v993, %v993
        %v2061 = vpack.c.bf16 %v995, %v995
        %v2062 = vpack.c.bf16 %v1022, %v1022
        %v2063 = vpack.c.bf16 %v1024, %v1024
        %v2064 = vpack.c.bf16 %v1051, %v1051
        %v2065 = vpack.c.bf16 %v1053, %v1053
        %v2068 = vunpack.c.l.b16 %v2060
        %v2069 = vunpack.c.l.b16 %v2061
        %v2070 = vpack.c.b16 %v2069, %v2068
        %v2073 = vunpack.c.l.b16 %v2062
        %v2074 = vunpack.c.l.b16 %v2063
        %v2075 = vpack.c.b16 %v2074, %v2073
        %v2077 = vsel %vm1084, %v2070, 0
        %v2080 = vsel %vm1084, %v2075, 0
        %2082 = vmatpush.bf16.xpose.msra.mxu0 0
        %2083 = vmatpush.bf16.xpose.msra.mxu0 0
        %2084 = vmatpush.bf16.xpose.msra.mxu0 0
        %2085 = vmatpush.bf16.xpose.msra.mxu0 0
        %2086 = vmatpush.bf16.xpose.msra.mxu0 0
        %2087 = vmatpush.bf16.xpose.msra.mxu0 0
        %2088 = vmatpush.bf16.xpose.msra.mxu0 0
        %2089 = vmatpush.bf16.xpose.msra.mxu0 %v2080
        %2090 = vmatmul.bf16.gmra.mxu0 %v2077
        %v2091 = vpop.f32.mrf.mxu0
        %v2092 = vadd.f32 0.0, %v2091
        %v2093 = vpop.f32.mrf.mxu0
        %v2094 = vadd.f32 0.0, %v2093
        %2095 = vdwg.mxu0
        %v2096 = vsel %vm2058, %v2092, -1e+30
        %v2097 = vsel %vm2059, %v2094, -1e+30
        %v2098 = vsel %vm1107, %v2096, -inf
        %2099 = vmax.xlane.f32.xlu0 %v2098
        %v2100 = vpop.xlane.xlu0 %2099
        %v2101 = vsel %vm1107, %v2097, -inf
        %2102 = vmax.xlane.f32.xlu0 %v2101
        %v2103 = vpop.xlane.xlu0 %2102
        %v2104 = vsub.f32 %v2096, %v2100
        %v2105 = vsub.f32 %v2097, %v2103
        %v2106 = vmul.f32 %v2104, 1.442695
        %v2107 = vpow.pop %v2106
        %v2108 = vmul.f32 %v2105, 1.442695
        %v2109 = vpow.pop %v2108
        %v2110 = vsel %vm1107, %v2107, 0.0
        %2111 = vadd.xlane.f32.xlu0 %v2110
        %v2112 = vpop.xlane.xlu0 %2111
        %v2113 = vsel %vm1107, %v2109, 0.0
        %2114 = vadd.xlane.f32.xlu0 %v2113
        %v2115 = vpop.xlane.xlu0 %2114
        %v2116 = vrcp.pop %v2112
        %v2117 = vrcp.pop %v2115
        %v2118 = vmul.f32 %v2107, %v2116
        %v2119 = vmul.f32 %v2109, %v2117
        %v2120 = vpack.c.bf16 %v2119, %v2118
        %v2123 = vunpack.c.l.b16 %v2064
        %v2124 = vunpack.c.l.b16 %v2065
        %v2125 = vpack.c.b16 %v2124, %v2123
        %v2128 = vsel %vm1107, %v2120, 0
        %2130 = vmatpush.bf16.msra.mxu0 0
        %2131 = vmatpush.bf16.msra.mxu0 0
        %2132 = vmatpush.bf16.msra.mxu0 0
        %2133 = vmatpush.bf16.msra.mxu0 0
        %2134 = vmatpush.bf16.msra.mxu0 0
        %2135 = vmatpush.bf16.msra.mxu0 0
        %2136 = vmatpush.bf16.msra.mxu0 0
        %2137 = vmatpush.bf16.msra.mxu0 %v2125
        %2138 = vmatmul.bf16.gmra.mxu0 %v2128
        %v2139 = vpop.f32.mrf.mxu0
        %v2140 = vadd.f32 0.0, %v2139
        %v2141 = vpop.f32.mrf.mxu0
        %v2142 = vadd.f32 0.0, %v2141
        %2143 = vdwg.mxu0
        %2144 = vst.msk [vmem:[#allocation2 + $0x30] sm:$0xff] %vm1084, %v2140
        %2145 = vst.msk [vmem:[#allocation2 + $0x38] sm:$0xff] %vm1084, %v2142
        %2146 = vrot.lane.b32.xlu0 %v2070, 96
        %v2147 = vpop.permute.xlu0 %2146
        %2148 = vrot.lane.b32.xlu0 %v2075, 96
        %v2149 = vpop.permute.xlu0 %2148
        %v2151 = vsel %vm1084, %v2147, 0
        %v2154 = vsel %vm1084, %v2149, 0
        %2156 = vmatpush.bf16.xpose.msra.mxu0 0
        %2157 = vmatpush.bf16.xpose.msra.mxu0 0
        %2158 = vmatpush.bf16.xpose.msra.mxu0 0
        %2159 = vmatpush.bf16.xpose.msra.mxu0 0
        %2160 = vmatpush.bf16.xpose.msra.mxu0 0
        %2161 = vmatpush.bf16.xpose.msra.mxu0 0
        %2162 = vmatpush.bf16.xpose.msra.mxu0 0
        %2163 = vmatpush.bf16.xpose.msra.mxu0 %v2154
        %2164 = vmatmul.bf16.gmra.mxu0 %v2151
        %v2165 = vpop.f32.mrf.mxu0
        %v2166 = vadd.f32 0.0, %v2165
        %v2167 = vpop.f32.mrf.mxu0
        %v2168 = vadd.f32 0.0, %v2167
        %2169 = vdwg.mxu0
        %v2170 = vsel %vm2058, %v2166, -1e+30
        %v2171 = vsel %vm2059, %v2168, -1e+30
        %v2172 = vsel %vm1107, %v2170, -inf
        %2173 = vmax.xlane.f32.xlu0 %v2172
        %v2174 = vpop.xlane.xlu0 %2173
        %v2175 = vsel %vm1107, %v2171, -inf
        %2176 = vmax.xlane.f32.xlu0 %v2175
        %v2177 = vpop.xlane.xlu0 %2176
        %v2178 = vsub.f32 %v2170, %v2174
        %v2179 = vsub.f32 %v2171, %v2177
        %v2180 = vmul.f32 %v2178, 1.442695
        %v2181 = vpow.pop %v2180
        %v2182 = vmul.f32 %v2179, 1.442695
        %v2183 = vpow.pop %v2182
        %v2184 = vsel %vm1107, %v2181, 0.0
        %2185 = vadd.xlane.f32.xlu0 %v2184
        %v2186 = vpop.xlane.xlu0 %2185
        %v2187 = vsel %vm1107, %v2183, 0.0
        %2188 = vadd.xlane.f32.xlu0 %v2187
        %v2189 = vpop.xlane.xlu0 %2188
        %v2190 = vrcp.pop %v2186
        %v2191 = vrcp.pop %v2189
        %v2192 = vmul.f32 %v2181, %v2190
        %v2193 = vmul.f32 %v2183, %v2191
        %v2194 = vpack.c.bf16 %v2193, %v2192
        %2195 = vrot.lane.b32.xlu0 %v2125, 96
        %v2196 = vpop.permute.xlu0 %2195
        %v2199 = vsel %vm1107, %v2194, 0
        %2201 = vmatpush.bf16.msra.mxu0 0
        %2202 = vmatpush.bf16.msra.mxu0 0
        %2203 = vmatpush.bf16.msra.mxu0 0
        %2204 = vmatpush.bf16.msra.mxu0 0
        %2205 = vmatpush.bf16.msra.mxu0 0
        %2206 = vmatpush.bf16.msra.mxu0 0
        %2207 = vmatpush.bf16.msra.mxu0 0
        %2208 = vmatpush.bf16.msra.mxu0 %v2196
        %2209 = vmatmul.bf16.gmra.mxu0 %v2199
        %v2210 = vpop.f32.mrf.mxu0
        %v2211 = vadd.f32 0.0, %v2210
        %v2212 = vpop.f32.mrf.mxu0
        %v2213 = vadd.f32 0.0, %v2212
        %2214 = vdwg.mxu0
        %2217 = vrot.lane.b32.xlu0 %v2211, 32
        %v2218 = vpop.permute.xlu0 %2217
        %2219 = vrot.lane.b32.xlu0 %v2213, 32
        %v2220 = vpop.permute.xlu0 %2219
        %2223 = vst.msk [vmem:[#allocation2 + $0x30] sm:$0xff] %vm1233, %v2218
        %2224 = vst.msk [vmem:[#allocation2 + $0x38] sm:$0xff] %vm1233, %v2220
        %2225 = vrot.lane.b32.xlu0 %v2070, 64
        %v2226 = vpop.permute.xlu0 %2225
        %2227 = vrot.lane.b32.xlu0 %v2075, 64
        %v2228 = vpop.permute.xlu0 %2227
        %v2230 = vsel %vm1084, %v2226, 0
        %v2233 = vsel %vm1084, %v2228, 0
        %2235 = vmatpush.bf16.xpose.msra.mxu0 0
        %2236 = vmatpush.bf16.xpose.msra.mxu0 0
        %2237 = vmatpush.bf16.xpose.msra.mxu0 0
        %2238 = vmatpush.bf16.xpose.msra.mxu0 0
        %2239 = vmatpush.bf16.xpose.msra.mxu0 0
        %2240 = vmatpush.bf16.xpose.msra.mxu0 0
        %2241 = vmatpush.bf16.xpose.msra.mxu0 0
        %2242 = vmatpush.bf16.xpose.msra.mxu0 %v2233
        %2243 = vmatmul.bf16.gmra.mxu0 %v2230
        %v2244 = vpop.f32.mrf.mxu0
        %v2245 = vadd.f32 0.0, %v2244
        %v2246 = vpop.f32.mrf.mxu0
        %v2247 = vadd.f32 0.0, %v2246
        %2248 = vdwg.mxu0
        %v2249 = vsel %vm2058, %v2245, -1e+30
        %v2250 = vsel %vm2059, %v2247, -1e+30
        %v2251 = vsel %vm1107, %v2249, -inf
        %2252 = vmax.xlane.f32.xlu0 %v2251
        %v2253 = vpop.xlane.xlu0 %2252
        %v2254 = vsel %vm1107, %v2250, -inf
        %2255 = vmax.xlane.f32.xlu0 %v2254
        %v2256 = vpop.xlane.xlu0 %2255
        %v2257 = vsub.f32 %v2249, %v2253
        %v2258 = vsub.f32 %v2250, %v2256
        %v2259 = vmul.f32 %v2257, 1.442695
        %v2260 = vpow.pop %v2259
        %v2261 = vmul.f32 %v2258, 1.442695
        %v2262 = vpow.pop %v2261
        %v2263 = vsel %vm1107, %v2260, 0.0
        %2264 = vadd.xlane.f32.xlu0 %v2263
        %v2265 = vpop.xlane.xlu0 %2264
        %v2266 = vsel %vm1107, %v2262, 0.0
        %2267 = vadd.xlane.f32.xlu0 %v2266
        %v2268 = vpop.xlane.xlu0 %2267
        %v2269 = vrcp.pop %v2265
        %v2270 = vrcp.pop %v2268
        %v2271 = vmul.f32 %v2260, %v2269
        %v2272 = vmul.f32 %v2262, %v2270
        %v2273 = vpack.c.bf16 %v2272, %v2271
        %2274 = vrot.lane.b32.xlu0 %v2125, 64
        %v2275 = vpop.permute.xlu0 %2274
        %v2278 = vsel %vm1107, %v2273, 0
        %2280 = vmatpush.bf16.msra.mxu0 0
        %2281 = vmatpush.bf16.msra.mxu0 0
        %2282 = vmatpush.bf16.msra.mxu0 0
        %2283 = vmatpush.bf16.msra.mxu0 0
        %2284 = vmatpush.bf16.msra.mxu0 0
        %2285 = vmatpush.bf16.msra.mxu0 0
        %2286 = vmatpush.bf16.msra.mxu0 0
        %2287 = vmatpush.bf16.msra.mxu0 %v2275
        %2288 = vmatmul.bf16.gmra.mxu0 %v2278
        %v2289 = vpop.f32.mrf.mxu0
        %v2290 = vadd.f32 0.0, %v2289
        %v2291 = vpop.f32.mrf.mxu0
        %v2292 = vadd.f32 0.0, %v2291
        %2293 = vdwg.mxu0
        %2296 = vrot.lane.b32.xlu0 %v2290, 64
        %v2297 = vpop.permute.xlu0 %2296
        %2298 = vrot.lane.b32.xlu0 %v2292, 64
        %v2299 = vpop.permute.xlu0 %2298
        %2302 = vst.msk [vmem:[#allocation2 + $0x30] sm:$0xff] %vm1313, %v2297
        %2303 = vst.msk [vmem:[#allocation2 + $0x38] sm:$0xff] %vm1313, %v2299
        %2304 = vrot.lane.b32.xlu0 %v2070, 32
        %v2305 = vpop.permute.xlu0 %2304
        %2306 = vrot.lane.b32.xlu0 %v2075, 32
        %v2307 = vpop.permute.xlu0 %2306
        %v2309 = vsel %vm1084, %v2305, 0
        %v2312 = vsel %vm1084, %v2307, 0
        %2314 = vmatpush.bf16.xpose.msra.mxu0 0
        %2315 = vmatpush.bf16.xpose.msra.mxu0 0
        %2316 = vmatpush.bf16.xpose.msra.mxu0 0
        %2317 = vmatpush.bf16.xpose.msra.mxu0 0
        %2318 = vmatpush.bf16.xpose.msra.mxu0 0
        %2319 = vmatpush.bf16.xpose.msra.mxu0 0
        %2320 = vmatpush.bf16.xpose.msra.mxu0 0
        %2321 = vmatpush.bf16.xpose.msra.mxu0 %v2312
        %2322 = vmatmul.bf16.gmra.mxu0 %v2309
        %v2323 = vpop.f32.mrf.mxu0
        %v2324 = vadd.f32 0.0, %v2323
        %v2325 = vpop.f32.mrf.mxu0
        %v2326 = vadd.f32 0.0, %v2325
        %2327 = vdwg.mxu0
        %v2328 = vsel %vm2058, %v2324, -1e+30
        %v2329 = vsel %vm2059, %v2326, -1e+30
        %v2330 = vsel %vm1107, %v2328, -inf
        %2331 = vmax.xlane.f32.xlu0 %v2330
        %v2332 = vpop.xlane.xlu0 %2331
        %v2333 = vsel %vm1107, %v2329, -inf
        %2334 = vmax.xlane.f32.xlu0 %v2333
        %v2335 = vpop.xlane.xlu0 %2334
        %v2336 = vsub.f32 %v2328, %v2332
        %v2337 = vsub.f32 %v2329, %v2335
        %v2338 = vmul.f32 %v2336, 1.442695
        %v2339 = vpow.pop %v2338
        %v2340 = vmul.f32 %v2337, 1.442695
        %v2341 = vpow.pop %v2340
        %v2342 = vsel %vm1107, %v2339, 0.0
        %2343 = vadd.xlane.f32.xlu0 %v2342
        %v2344 = vpop.xlane.xlu0 %2343
        %v2345 = vsel %vm1107, %v2341, 0.0
        %2346 = vadd.xlane.f32.xlu0 %v2345
        %v2347 = vpop.xlane.xlu0 %2346
        %v2348 = vrcp.pop %v2344
        %v2349 = vrcp.pop %v2347
        %v2350 = vmul.f32 %v2339, %v2348
        %v2351 = vmul.f32 %v2341, %v2349
        %v2352 = vpack.c.bf16 %v2351, %v2350
        %2353 = vrot.lane.b32.xlu0 %v2125, 32
        %v2354 = vpop.permute.xlu0 %2353
        %v2357 = vsel %vm1107, %v2352, 0
        %2359 = vmatpush.bf16.msra.mxu0 0
        %2360 = vmatpush.bf16.msra.mxu0 0
        %2361 = vmatpush.bf16.msra.mxu0 0
        %2362 = vmatpush.bf16.msra.mxu0 0
        %2363 = vmatpush.bf16.msra.mxu0 0
        %2364 = vmatpush.bf16.msra.mxu0 0
        %2365 = vmatpush.bf16.msra.mxu0 0
        %2366 = vmatpush.bf16.msra.mxu0 %v2354
        %2367 = vmatmul.bf16.gmra.mxu0 %v2357
        %v2368 = vpop.f32.mrf.mxu0
        %v2369 = vadd.f32 0.0, %v2368
        %v2370 = vpop.f32.mrf.mxu0
        %v2371 = vadd.f32 0.0, %v2370
        %2372 = vdwg.mxu0
        %2375 = vrot.lane.b32.xlu0 %v2369, 96
        %v2376 = vpop.permute.xlu0 %2375
        %2377 = vrot.lane.b32.xlu0 %v2371, 96
        %v2378 = vpop.permute.xlu0 %2377
        %2381 = vst.msk [vmem:[#allocation2 + $0x30] sm:$0xff] %vm1393, %v2376
        %2382 = vst.msk [vmem:[#allocation2 + $0x38] sm:$0xff] %vm1393, %v2378
        %v2383 = vld [vmem:[#allocation2] sm:$0xff]
        %v2384 = vld [vmem:[#allocation2 + $0x8] sm:$0xff]
        %v2385 = vld [vmem:[#allocation2 + $0x10] sm:$0xff]
        %v2386 = vld [vmem:[#allocation2 + $0x18] sm:$0xff]
        %v2387 = vld [vmem:[#allocation2 + $0x20] sm:$0xff]
        %v2388 = vld [vmem:[#allocation2 + $0x28] sm:$0xff]
        %v2389 = vld [vmem:[#allocation2 + $0x30] sm:$0xff]
        %v2390 = vld [vmem:[#allocation2 + $0x38] sm:$0xff]
        %v2391 = vpack.c.bf16 %v2384, %v2383
        %v2392 = vpack.c.bf16 %v2386, %v2385
        %v2393 = vpack.c.bf16 %v2388, %v2387
        %v2394 = vpack.c.bf16 %v2390, %v2389
        %v2395 = vld [vmem:[#allocation13] sm:$0xf]
        %v2396 = vld [vmem:[#allocation13 + $0x4] sm:$0xf]
        %v2397 = vld [vmem:[#allocation13 + $0x8] sm:$0xf]
        %v2398 = vld [vmem:[#allocation13 + $0xc] sm:$0xf]
        %v2399 = vld [vmem:[#allocation13 + $0x10] sm:$0xf]
        %v2400 = vld [vmem:[#allocation13 + $0x14] sm:$0xf]
        %v2401 = vld [vmem:[#allocation13 + $0x18] sm:$0xf]
        %v2402 = vld [vmem:[#allocation13 + $0x1c] sm:$0xf]
        %v2403 = vld [vmem:[#allocation13 + $0x20] sm:$0xf]
        %v2404 = vld [vmem:[#allocation13 + $0x24] sm:$0xf]
        %v2405 = vld [vmem:[#allocation13 + $0x28] sm:$0xf]
        %v2406 = vld [vmem:[#allocation13 + $0x2c] sm:$0xf]
        %v2407 = vld [vmem:[#allocation13 + $0x30] sm:$0xf]
        %v2408 = vld [vmem:[#allocation13 + $0x34] sm:$0xf]
        %v2409 = vld [vmem:[#allocation13 + $0x38] sm:$0xf]
        %v2410 = vld [vmem:[#allocation13 + $0x3c] sm:$0xf]
        %v2411 = vld [vmem:[#allocation14] sm:$0x1]
        %v2413 = vperm.slane %v2411, 0
        %v2431 = vunpack.c.l.b16 %v2395
        %v2432 = vunpack.c.l.b16 %v2396
        %v2433 = vunpack.c.l.b16 %v2397
        %v2434 = vunpack.c.l.b16 %v2398
        %v2435 = vunpack.c.l.b16 %v2399
        %v2436 = vunpack.c.l.b16 %v2400
        %v2437 = vunpack.c.l.b16 %v2401
        %v2438 = vunpack.c.l.b16 %v2402
        %v2439 = vunpack.c.l.b16 %v2403
        %v2440 = vunpack.c.l.b16 %v2404
        %v2441 = vunpack.c.l.b16 %v2405
        %v2442 = vunpack.c.l.b16 %v2406
        %v2443 = vunpack.c.l.b16 %v2407
        %v2444 = vunpack.c.l.b16 %v2408
        %v2445 = vunpack.c.l.b16 %v2409
        %v2446 = vunpack.c.l.b16 %v2410
        %v2447 = vpack.c.b16 %v2432, %v2431
        %v2448 = vpack.c.b16 %v2434, %v2433
        %v2449 = vpack.c.b16 %v2436, %v2435
        %v2450 = vpack.c.b16 %v2438, %v2437
        %v2451 = vpack.c.b16 %v2440, %v2439
        %v2452 = vpack.c.b16 %v2442, %v2441
        %v2453 = vpack.c.b16 %v2444, %v2443
        %v2454 = vpack.c.b16 %v2446, %v2445
        %2463 = vmatpush.bf16.msra.mxu0 %v2454
        %2464 = vmatpush.bf16.msra.mxu0 %v2453
        %2465 = vmatpush.bf16.msra.mxu0 %v2452
        %2466 = vmatpush.bf16.msra.mxu0 %v2451
        %2467 = vmatpush.bf16.msra.mxu0 %v2450
        %2468 = vmatpush.bf16.msra.mxu0 %v2449
        %2469 = vmatpush.bf16.msra.mxu0 %v2448
        %2470 = vmatpush.bf16.msra.mxu0 %v2447
        %2471 = vmatmul.bf16.gmra.mxu0 %v2391
        %v2472 = vpop.f32.mrf.mxu0
        %v2473 = vadd.f32 %v2413, %v2472
        %v2474 = vpop.f32.mrf.mxu0
        %v2475 = vadd.f32 %v2413, %v2474
        %2476 = vmatmul.bf16.gmra.mxu0 %v2392
        %v2477 = vpop.f32.mrf.mxu0
        %v2478 = vadd.f32 %v2413, %v2477
        %v2479 = vpop.f32.mrf.mxu0
        %v2480 = vadd.f32 %v2413, %v2479
        %2481 = vmatmul.bf16.gmra.mxu0 %v2393
        %v2482 = vpop.f32.mrf.mxu0
        %v2483 = vadd.f32 %v2413, %v2482
        %v2484 = vpop.f32.mrf.mxu0
        %v2485 = vadd.f32 %v2413, %v2484
        %2486 = vmatmul.bf16.gmra.mxu0 %v2394
        %v2487 = vpop.f32.mrf.mxu0
        %v2488 = vadd.f32 %v2413, %v2487
        %v2489 = vpop.f32.mrf.mxu0
        %v2490 = vadd.f32 %v2413, %v2489
        %2491 = vdwg.mxu0
        %v2492 = vadd.f32 %v597, %v2473
        %v2493 = vadd.f32 %v598, %v2475
        %v2494 = vadd.f32 %v599, %v2478
        %v2495 = vadd.f32 %v600, %v2480
        %v2496 = vadd.f32 %v601, %v2483
        %v2497 = vadd.f32 %v602, %v2485
        %v2498 = vadd.f32 %v603, %v2488
        %v2499 = vadd.f32 %v604, %v2490
        %v2500 = vld [vmem:[#allocation16] sm:$0x1]
        %v2501 = vld [vmem:[%s9] sm:$0x1]
        %2502 = vadd.xlane.f32.xlu0 %v2492
        %v2503 = vpop.xlane.xlu0 %2502
        %2504 = vadd.xlane.f32.xlu0 %v2493
        %v2505 = vpop.xlane.xlu0 %2504
        %2506 = vadd.xlane.f32.xlu0 %v2494
        %v2507 = vpop.xlane.xlu0 %2506
        %2508 = vadd.xlane.f32.xlu0 %v2495
        %v2509 = vpop.xlane.xlu0 %2508
        %2510 = vadd.xlane.f32.xlu0 %v2496
        %v2511 = vpop.xlane.xlu0 %2510
        %2512 = vadd.xlane.f32.xlu0 %v2497
        %v2513 = vpop.xlane.xlu0 %2512
        %2514 = vadd.xlane.f32.xlu0 %v2498
        %v2515 = vpop.xlane.xlu0 %2514
        %2516 = vadd.xlane.f32.xlu0 %v2499
        %v2517 = vpop.xlane.xlu0 %2516
        %v2518 = vmul.f32 %v2503, %v629
        %v2519 = vmul.f32 %v2505, %v629
        %v2520 = vmul.f32 %v2507, %v629
        %v2521 = vmul.f32 %v2509, %v629
        %v2522 = vmul.f32 %v2511, %v629
        %v2523 = vmul.f32 %v2513, %v629
        %v2524 = vmul.f32 %v2515, %v629
        %v2525 = vmul.f32 %v2517, %v629
        %v2526 = vsub.f32 %v2492, %v2518
        %v2527 = vsub.f32 %v2493, %v2519
        %v2528 = vsub.f32 %v2494, %v2520
        %v2529 = vsub.f32 %v2495, %v2521
        %v2530 = vsub.f32 %v2496, %v2522
        %v2531 = vsub.f32 %v2497, %v2523
        %v2532 = vsub.f32 %v2498, %v2524
        %v2533 = vsub.f32 %v2499, %v2525
        %v2534 = vmul.f32 %v2526, %v2526
        %v2535 = vmul.f32 %v2527, %v2527
        %v2536 = vmul.f32 %v2528, %v2528
        %v2537 = vmul.f32 %v2529, %v2529
        %v2538 = vmul.f32 %v2530, %v2530
        %v2539 = vmul.f32 %v2531, %v2531
        %v2540 = vmul.f32 %v2532, %v2532
        %v2541 = vmul.f32 %v2533, %v2533
        %2542 = vadd.xlane.f32.xlu0 %v2534
        %v2543 = vpop.xlane.xlu0 %2542
        %2544 = vadd.xlane.f32.xlu0 %v2535
        %v2545 = vpop.xlane.xlu0 %2544
        %2546 = vadd.xlane.f32.xlu0 %v2536
        %v2547 = vpop.xlane.xlu0 %2546
        %2548 = vadd.xlane.f32.xlu0 %v2537
        %v2549 = vpop.xlane.xlu0 %2548
        %2550 = vadd.xlane.f32.xlu0 %v2538
        %v2551 = vpop.xlane.xlu0 %2550
        %2552 = vadd.xlane.f32.xlu0 %v2539
        %v2553 = vpop.xlane.xlu0 %2552
        %2554 = vadd.xlane.f32.xlu0 %v2540
        %v2555 = vpop.xlane.xlu0 %2554
        %2556 = vadd.xlane.f32.xlu0 %v2541
        %v2557 = vpop.xlane.xlu0 %2556
        %v2558 = vmul.f32 %v2543, %v629
        %v2559 = vmul.f32 %v2545, %v629
        %v2560 = vmul.f32 %v2547, %v629
        %v2561 = vmul.f32 %v2549, %v629
        %v2562 = vmul.f32 %v2551, %v629
        %v2563 = vmul.f32 %v2553, %v629
        %v2564 = vmul.f32 %v2555, %v629
        %v2565 = vmul.f32 %v2557, %v629
        %v2566 = vadd.f32 %v2558, 1e-05
        %v2567 = vadd.f32 %v2559, 1e-05
        %v2568 = vadd.f32 %v2560, 1e-05
        %v2569 = vadd.f32 %v2561, 1e-05
        %v2570 = vadd.f32 %v2562, 1e-05
        %v2571 = vadd.f32 %v2563, 1e-05
        %v2572 = vadd.f32 %v2564, 1e-05
        %v2573 = vadd.f32 %v2565, 1e-05
        %v2574 = vrsqrt.pop %v2566
        %v2575 = vmul.f32 %v2574, %v2566
        %v2576 = vmul.f32 %v2575, %v2574
        %v2577 = vmul.f32 0.5, %v2576
        %v2578 = vsub.f32 1.5, %v2577
        %v2579 = vmul.f32 %v2574, %v2578
        %vm2580 = vweird.f32 %v2566
        %vm2581 = vweird.f32 %v2574
        %vm2582 = vmor %vm2580, %vm2581
        %v2583 = vsel %vm2582, %v2574, %v2579
        %v2584 = vrsqrt.pop %v2567
        %v2585 = vmul.f32 %v2584, %v2567
        %v2586 = vmul.f32 %v2585, %v2584
        %v2587 = vmul.f32 0.5, %v2586
        %v2588 = vsub.f32 1.5, %v2587
        %v2589 = vmul.f32 %v2584, %v2588
        %vm2590 = vweird.f32 %v2567
        %vm2591 = vweird.f32 %v2584
        %vm2592 = vmor %vm2590, %vm2591
        %v2593 = vsel %vm2592, %v2584, %v2589
        %v2594 = vrsqrt.pop %v2568
        %v2595 = vmul.f32 %v2594, %v2568
        %v2596 = vmul.f32 %v2595, %v2594
        %v2597 = vmul.f32 0.5, %v2596
        %v2598 = vsub.f32 1.5, %v2597
        %v2599 = vmul.f32 %v2594, %v2598
        %vm2600 = vweird.f32 %v2568
        %vm2601 = vweird.f32 %v2594
        %vm2602 = vmor %vm2600, %vm2601
        %v2603 = vsel %vm2602, %v2594, %v2599
        %v2604 = vrsqrt.pop %v2569
        %v2605 = vmul.f32 %v2604, %v2569
        %v2606 = vmul.f32 %v2605, %v2604
        %v2607 = vmul.f32 0.5, %v2606
        %v2608 = vsub.f32 1.5, %v2607
        %v2609 = vmul.f32 %v2604, %v2608
        %vm2610 = vweird.f32 %v2569
        %vm2611 = vweird.f32 %v2604
        %vm2612 = vmor %vm2610, %vm2611
        %v2613 = vsel %vm2612, %v2604, %v2609
        %v2614 = vrsqrt.pop %v2570
        %v2615 = vmul.f32 %v2614, %v2570
        %v2616 = vmul.f32 %v2615, %v2614
        %v2617 = vmul.f32 0.5, %v2616
        %v2618 = vsub.f32 1.5, %v2617
        %v2619 = vmul.f32 %v2614, %v2618
        %vm2620 = vweird.f32 %v2570
        %vm2621 = vweird.f32 %v2614
        %vm2622 = vmor %vm2620, %vm2621
        %v2623 = vsel %vm2622, %v2614, %v2619
        %v2624 = vrsqrt.pop %v2571
        %v2625 = vmul.f32 %v2624, %v2571
        %v2626 = vmul.f32 %v2625, %v2624
        %v2627 = vmul.f32 0.5, %v2626
        %v2628 = vsub.f32 1.5, %v2627
        %v2629 = vmul.f32 %v2624, %v2628
        %vm2630 = vweird.f32 %v2571
        %vm2631 = vweird.f32 %v2624
        %vm2632 = vmor %vm2630, %vm2631
        %v2633 = vsel %vm2632, %v2624, %v2629
        %v2634 = vrsqrt.pop %v2572
        %v2635 = vmul.f32 %v2634, %v2572
        %v2636 = vmul.f32 %v2635, %v2634
        %v2637 = vmul.f32 0.5, %v2636
        %v2638 = vsub.f32 1.5, %v2637
        %v2639 = vmul.f32 %v2634, %v2638
        %vm2640 = vweird.f32 %v2572
        %vm2641 = vweird.f32 %v2634
        %vm2642 = vmor %vm2640, %vm2641
        %v2643 = vsel %vm2642, %v2634, %v2639
        %v2644 = vrsqrt.pop %v2573
        %v2645 = vmul.f32 %v2644, %v2573
        %v2646 = vmul.f32 %v2645, %v2644
        %v2647 = vmul.f32 0.5, %v2646
        %v2648 = vsub.f32 1.5, %v2647
        %v2649 = vmul.f32 %v2644, %v2648
        %vm2650 = vweird.f32 %v2573
        %vm2651 = vweird.f32 %v2644
        %vm2652 = vmor %vm2650, %vm2651
        %v2653 = vsel %vm2652, %v2644, %v2649
        %v2654 = vmul.f32 %v2526, %v2583
        %v2655 = vmul.f32 %v2527, %v2593
        %v2656 = vmul.f32 %v2528, %v2603
        %v2657 = vmul.f32 %v2529, %v2613
        %v2658 = vmul.f32 %v2530, %v2623
        %v2659 = vmul.f32 %v2531, %v2633
        %v2660 = vmul.f32 %v2532, %v2643
        %v2661 = vmul.f32 %v2533, %v2653
        %v2663 = vperm.slane %v2500, 0
        %v2665 = vmul.f32 %v2654, %v2663
        %v2666 = vmul.f32 %v2655, %v2663
        %v2667 = vmul.f32 %v2656, %v2663
        %v2668 = vmul.f32 %v2657, %v2663
        %v2669 = vmul.f32 %v2658, %v2663
        %v2670 = vmul.f32 %v2659, %v2663
        %v2671 = vmul.f32 %v2660, %v2663
        %v2672 = vmul.f32 %v2661, %v2663
        %v2674 = vperm.slane %v2501, 0
        %v2676 = vadd.f32 %v2665, %v2674
        %v2677 = vadd.f32 %v2666, %v2674
        %v2678 = vadd.f32 %v2667, %v2674
        %v2679 = vadd.f32 %v2668, %v2674
        %v2680 = vadd.f32 %v2669, %v2674
        %v2681 = vadd.f32 %v2670, %v2674
        %v2682 = vadd.f32 %v2671, %v2674
        %v2683 = vadd.f32 %v2672, %v2674
        %v2684 = vpack.c.bf16 %v2677, %v2676
        %v2685 = vpack.c.bf16 %v2679, %v2678
        %v2686 = vpack.c.bf16 %v2681, %v2680
        %v2687 = vpack.c.bf16 %v2683, %v2682
        %v2688 = vld [vmem:[#allocation17] sm:$0xff]
        %v2689 = vld [vmem:[#allocation17 + $0x8] sm:$0xff]
        %v2690 = vld [vmem:[#allocation17 + $0x10] sm:$0xff]
        %v2691 = vld [vmem:[#allocation17 + $0x18] sm:$0xff]
        %v2692 = vld [vmem:[#allocation17 + $0x20] sm:$0xff]
        %v2693 = vld [vmem:[#allocation17 + $0x28] sm:$0xff]
        %v2694 = vld [vmem:[#allocation17 + $0x30] sm:$0xff]
        %v2695 = vld [vmem:[#allocation17 + $0x38] sm:$0xff]
        %v2696 = vld [vmem:[#allocation17 + $0x40] sm:$0xff]
        %v2697 = vld [vmem:[#allocation17 + $0x48] sm:$0xff]
        %v2698 = vld [vmem:[#allocation17 + $0x50] sm:$0xff]
        %v2699 = vld [vmem:[#allocation17 + $0x58] sm:$0xff]
        %v2700 = vld [vmem:[#allocation17 + $0x60] sm:$0xff]
        %v2701 = vld [vmem:[#allocation17 + $0x68] sm:$0xff]
        %v2702 = vld [vmem:[#allocation17 + $0x70] sm:$0xff]
        %v2703 = vld [vmem:[#allocation17 + $0x78] sm:$0xff]
        %v2704 = vld [vmem:[#allocation17 + $0x80] sm:$0xff]
        %v2705 = vld [vmem:[#allocation17 + $0x88] sm:$0xff]
        %v2706 = vld [vmem:[#allocation17 + $0x90] sm:$0xff]
        %v2707 = vld [vmem:[#allocation17 + $0x98] sm:$0xff]
        %v2708 = vld [vmem:[#allocation17 + $0xa0] sm:$0xff]
        %v2709 = vld [vmem:[#allocation17 + $0xa8] sm:$0xff]
        %v2710 = vld [vmem:[#allocation17 + $0xb0] sm:$0xff]
        %v2711 = vld [vmem:[#allocation17 + $0xb8] sm:$0xff]
        %v2712 = vld [vmem:[#allocation17 + $0xc0] sm:$0xff]
        %v2713 = vld [vmem:[#allocation17 + $0xc8] sm:$0xff]
        %v2714 = vld [vmem:[#allocation17 + $0xd0] sm:$0xff]
        %v2715 = vld [vmem:[#allocation17 + $0xd8] sm:$0xff]
        %v2716 = vld [vmem:[#allocation17 + $0xe0] sm:$0xff]
        %v2717 = vld [vmem:[#allocation17 + $0xe8] sm:$0xff]
        %v2718 = vld [vmem:[#allocation17 + $0xf0] sm:$0xff]
        %v2719 = vld [vmem:[#allocation17 + $0xf8] sm:$0xff]
        %v2720 = vld [vmem:[%s11] sm:$0xf]
        %v2722 = vperm.slane %v2720, 0
        %v2723 = vperm.slane %v2720, 1
        %v2724 = vperm.slane %v2720, 2
        %v2725 = vperm.slane %v2720, 3
        %v2762 = vunpack.c.l.b16 %v2688
        %v2763 = vunpack.c.h.b16 %v2688
        %v2764 = vunpack.c.l.b16 %v2689
        %v2765 = vunpack.c.h.b16 %v2689
        %v2766 = vunpack.c.l.b16 %v2690
        %v2767 = vunpack.c.h.b16 %v2690
        %v2768 = vunpack.c.l.b16 %v2691
        %v2769 = vunpack.c.h.b16 %v2691
        %v2770 = vunpack.c.l.b16 %v2692
        %v2771 = vunpack.c.h.b16 %v2692
        %v2772 = vunpack.c.l.b16 %v2693
        %v2773 = vunpack.c.h.b16 %v2693
        %v2774 = vunpack.c.l.b16 %v2694
        %v2775 = vunpack.c.h.b16 %v2694
        %v2776 = vunpack.c.l.b16 %v2695
        %v2777 = vunpack.c.h.b16 %v2695
        %v2778 = vunpack.c.l.b16 %v2696
        %v2779 = vunpack.c.h.b16 %v2696
        %v2780 = vunpack.c.l.b16 %v2697
        %v2781 = vunpack.c.h.b16 %v2697
        %v2782 = vunpack.c.l.b16 %v2698
        %v2783 = vunpack.c.h.b16 %v2698
        %v2784 = vunpack.c.l.b16 %v2699
        %v2785 = vunpack.c.h.b16 %v2699
        %v2786 = vunpack.c.l.b16 %v2700
        %v2787 = vunpack.c.h.b16 %v2700
        %v2788 = vunpack.c.l.b16 %v2701
        %v2789 = vunpack.c.h.b16 %v2701
        %v2790 = vunpack.c.l.b16 %v2702
        %v2791 = vunpack.c.h.b16 %v2702
        %v2792 = vunpack.c.l.b16 %v2703
        %v2793 = vunpack.c.h.b16 %v2703
        %v2794 = vunpack.c.l.b16 %v2704
        %v2795 = vunpack.c.h.b16 %v2704
        %v2796 = vunpack.c.l.b16 %v2705
        %v2797 = vunpack.c.h.b16 %v2705
        %v2798 = vunpack.c.l.b16 %v2706
        %v2799 = vunpack.c.h.b16 %v2706
        %v2800 = vunpack.c.l.b16 %v2707
        %v2801 = vunpack.c.h.b16 %v2707
        %v2802 = vunpack.c.l.b16 %v2708
        %v2803 = vunpack.c.h.b16 %v2708
        %v2804 = vunpack.c.l.b16 %v2709
        %v2805 = vunpack.c.h.b16 %v2709
        %v2806 = vunpack.c.l.b16 %v2710
        %v2807 = vunpack.c.h.b16 %v2710
        %v2808 = vunpack.c.l.b16 %v2711
        %v2809 = vunpack.c.h.b16 %v2711
        %v2810 = vunpack.c.l.b16 %v2712
        %v2811 = vunpack.c.h.b16 %v2712
        %v2812 = vunpack.c.l.b16 %v2713
        %v2813 = vunpack.c.h.b16 %v2713
        %v2814 = vunpack.c.l.b16 %v2714
        %v2815 = vunpack.c.h.b16 %v2714
        %v2816 = vunpack.c.l.b16 %v2715
        %v2817 = vunpack.c.h.b16 %v2715
        %v2818 = vunpack.c.l.b16 %v2716
        %v2819 = vunpack.c.h.b16 %v2716
        %v2820 = vunpack.c.l.b16 %v2717
        %v2821 = vunpack.c.h.b16 %v2717
        %v2822 = vunpack.c.l.b16 %v2718
        %v2823 = vunpack.c.h.b16 %v2718
        %v2824 = vunpack.c.l.b16 %v2719
        %v2825 = vunpack.c.h.b16 %v2719
        %v2826 = vpack.c.b16 %v2766, %v2762
        %v2827 = vpack.c.b16 %v2767, %v2763
        %v2828 = vpack.c.b16 %v2768, %v2764
        %v2829 = vpack.c.b16 %v2769, %v2765
        %v2830 = vpack.c.b16 %v2774, %v2770
        %v2831 = vpack.c.b16 %v2775, %v2771
        %v2832 = vpack.c.b16 %v2776, %v2772
        %v2833 = vpack.c.b16 %v2777, %v2773
        %v2834 = vpack.c.b16 %v2782, %v2778
        %v2835 = vpack.c.b16 %v2783, %v2779
        %v2836 = vpack.c.b16 %v2784, %v2780
        %v2837 = vpack.c.b16 %v2785, %v2781
        %v2838 = vpack.c.b16 %v2790, %v2786
        %v2839 = vpack.c.b16 %v2791, %v2787
        %v2840 = vpack.c.b16 %v2792, %v2788
        %v2841 = vpack.c.b16 %v2793, %v2789
        %v2842 = vpack.c.b16 %v2798, %v2794
        %v2843 = vpack.c.b16 %v2799, %v2795
        %v2844 = vpack.c.b16 %v2800, %v2796
        %v2845 = vpack.c.b16 %v2801, %v2797
        %v2846 = vpack.c.b16 %v2806, %v2802
        %v2847 = vpack.c.b16 %v2807, %v2803
        %v2848 = vpack.c.b16 %v2808, %v2804
        %v2849 = vpack.c.b16 %v2809, %v2805
        %v2850 = vpack.c.b16 %v2814, %v2810
        %v2851 = vpack.c.b16 %v2815, %v2811
        %v2852 = vpack.c.b16 %v2816, %v2812
        %v2853 = vpack.c.b16 %v2817, %v2813
        %v2854 = vpack.c.b16 %v2822, %v2818
        %v2855 = vpack.c.b16 %v2823, %v2819
        %v2856 = vpack.c.b16 %v2824, %v2820
        %v2857 = vpack.c.b16 %v2825, %v2821
        %2890 = vmatpush.bf16.msra.mxu0 %v2854
        %2891 = vmatpush.bf16.msra.mxu0 %v2850
        %2892 = vmatpush.bf16.msra.mxu0 %v2846
        %2893 = vmatpush.bf16.msra.mxu0 %v2842
        %2894 = vmatpush.bf16.msra.mxu0 %v2838
        %2895 = vmatpush.bf16.msra.mxu0 %v2834
        %2896 = vmatpush.bf16.msra.mxu0 %v2830
        %2897 = vmatpush.bf16.msra.mxu0 %v2826
        %2898 = vmatmul.bf16.gmra.mxu0 %v2684
        %v2899 = vpop.f32.mrf.mxu0
        %v2900 = vadd.f32 %v2722, %v2899
        %v2901 = vpop.f32.mrf.mxu0
        %v2902 = vadd.f32 %v2722, %v2901
        %2903 = vmatmul.bf16.gmra.mxu0 %v2685
        %v2904 = vpop.f32.mrf.mxu0
        %v2905 = vadd.f32 %v2722, %v2904
        %v2906 = vpop.f32.mrf.mxu0
        %v2907 = vadd.f32 %v2722, %v2906
        %2908 = vmatmul.bf16.gmra.mxu0 %v2686
        %v2909 = vpop.f32.mrf.mxu0
        %v2910 = vadd.f32 %v2722, %v2909
        %v2911 = vpop.f32.mrf.mxu0
        %v2912 = vadd.f32 %v2722, %v2911
        %2913 = vmatmul.bf16.gmra.mxu0 %v2687
        %v2914 = vpop.f32.mrf.mxu0
        %v2915 = vadd.f32 %v2722, %v2914
        %v2916 = vpop.f32.mrf.mxu0
        %v2917 = vadd.f32 %v2722, %v2916
        %2918 = vdwg.mxu0
        %2919 = vmatpush.bf16.msra.mxu0 %v2855
        %2920 = vmatpush.bf16.msra.mxu0 %v2851
        %2921 = vmatpush.bf16.msra.mxu0 %v2847
        %2922 = vmatpush.bf16.msra.mxu0 %v2843
        %2923 = vmatpush.bf16.msra.mxu0 %v2839
        %2924 = vmatpush.bf16.msra.mxu0 %v2835
        %2925 = vmatpush.bf16.msra.mxu0 %v2831
        %2926 = vmatpush.bf16.msra.mxu0 %v2827
        %2927 = vmatmul.bf16.gmra.mxu0 %v2684
        %v2928 = vpop.f32.mrf.mxu0
        %v2929 = vadd.f32 %v2723, %v2928
        %v2930 = vpop.f32.mrf.mxu0
        %v2931 = vadd.f32 %v2723, %v2930
        %2932 = vmatmul.bf16.gmra.mxu0 %v2685
        %v2933 = vpop.f32.mrf.mxu0
        %v2934 = vadd.f32 %v2723, %v2933
        %v2935 = vpop.f32.mrf.mxu0
        %v2936 = vadd.f32 %v2723, %v2935
        %2937 = vmatmul.bf16.gmra.mxu0 %v2686
        %v2938 = vpop.f32.mrf.mxu0
        %v2939 = vadd.f32 %v2723, %v2938
        %v2940 = vpop.f32.mrf.mxu0
        %v2941 = vadd.f32 %v2723, %v2940
        %2942 = vmatmul.bf16.gmra.mxu0 %v2687
        %v2943 = vpop.f32.mrf.mxu0
        %v2944 = vadd.f32 %v2723, %v2943
        %v2945 = vpop.f32.mrf.mxu0
        %v2946 = vadd.f32 %v2723, %v2945
        %2947 = vdwg.mxu0
        %2948 = vmatpush.bf16.msra.mxu0 %v2856
        %2949 = vmatpush.bf16.msra.mxu0 %v2852
        %2950 = vmatpush.bf16.msra.mxu0 %v2848
        %2951 = vmatpush.bf16.msra.mxu0 %v2844
        %2952 = vmatpush.bf16.msra.mxu0 %v2840
        %2953 = vmatpush.bf16.msra.mxu0 %v2836
        %2954 = vmatpush.bf16.msra.mxu0 %v2832
        %2955 = vmatpush.bf16.msra.mxu0 %v2828
        %2956 = vmatmul.bf16.gmra.mxu0 %v2684
        %v2957 = vpop.f32.mrf.mxu0
        %v2958 = vadd.f32 %v2724, %v2957
        %v2959 = vpop.f32.mrf.mxu0
        %v2960 = vadd.f32 %v2724, %v2959
        %2961 = vmatmul.bf16.gmra.mxu0 %v2685
        %v2962 = vpop.f32.mrf.mxu0
        %v2963 = vadd.f32 %v2724, %v2962
        %v2964 = vpop.f32.mrf.mxu0
        %v2965 = vadd.f32 %v2724, %v2964
        %2966 = vmatmul.bf16.gmra.mxu0 %v2686
        %v2967 = vpop.f32.mrf.mxu0
        %v2968 = vadd.f32 %v2724, %v2967
        %v2969 = vpop.f32.mrf.mxu0
        %v2970 = vadd.f32 %v2724, %v2969
        %2971 = vmatmul.bf16.gmra.mxu0 %v2687
        %v2972 = vpop.f32.mrf.mxu0
        %v2973 = vadd.f32 %v2724, %v2972
        %v2974 = vpop.f32.mrf.mxu0
        %v2975 = vadd.f32 %v2724, %v2974
        %2976 = vdwg.mxu0
        %2977 = vmatpush.bf16.msra.mxu0 %v2857
        %2978 = vmatpush.bf16.msra.mxu0 %v2853
        %2979 = vmatpush.bf16.msra.mxu0 %v2849
        %2980 = vmatpush.bf16.msra.mxu0 %v2845
        %2981 = vmatpush.bf16.msra.mxu0 %v2841
        %2982 = vmatpush.bf16.msra.mxu0 %v2837
        %2983 = vmatpush.bf16.msra.mxu0 %v2833
        %2984 = vmatpush.bf16.msra.mxu0 %v2829
        %2985 = vmatmul.bf16.gmra.mxu0 %v2684
        %v2986 = vpop.f32.mrf.mxu0
        %v2987 = vadd.f32 %v2725, %v2986
        %v2988 = vpop.f32.mrf.mxu0
        %v2989 = vadd.f32 %v2725, %v2988
        %2990 = vmatmul.bf16.gmra.mxu0 %v2685
        %v2991 = vpop.f32.mrf.mxu0
        %v2992 = vadd.f32 %v2725, %v2991
        %v2993 = vpop.f32.mrf.mxu0
        %v2994 = vadd.f32 %v2725, %v2993
        %2995 = vmatmul.bf16.gmra.mxu0 %v2686
        %v2996 = vpop.f32.mrf.mxu0
        %v2997 = vadd.f32 %v2725, %v2996
        %v2998 = vpop.f32.mrf.mxu0
        %v2999 = vadd.f32 %v2725, %v2998
        %3000 = vmatmul.bf16.gmra.mxu0 %v2687
        %v3001 = vpop.f32.mrf.mxu0
        %v3002 = vadd.f32 %v2725, %v3001
        %v3003 = vpop.f32.mrf.mxu0
        %v3004 = vadd.f32 %v2725, %v3003
        %3005 = vdwg.mxu0
        %vm3006 = vcmp.gt.f32.partialorder %v2900, 0.0
        %vm3007 = vcmp.gt.f32.partialorder %v2929, 0.0
        %vm3008 = vcmp.gt.f32.partialorder %v2958, 0.0
        %vm3009 = vcmp.gt.f32.partialorder %v2987, 0.0
        %vm3010 = vcmp.gt.f32.partialorder %v2902, 0.0
        %vm3011 = vcmp.gt.f32.partialorder %v2931, 0.0
        %vm3012 = vcmp.gt.f32.partialorder %v2960, 0.0
        %vm3013 = vcmp.gt.f32.partialorder %v2989, 0.0
        %vm3014 = vcmp.gt.f32.partialorder %v2905, 0.0
        %vm3015 = vcmp.gt.f32.partialorder %v2934, 0.0
        %vm3016 = vcmp.gt.f32.partialorder %v2963, 0.0
        %vm3017 = vcmp.gt.f32.partialorder %v2992, 0.0
        %vm3018 = vcmp.gt.f32.partialorder %v2907, 0.0
        %vm3019 = vcmp.gt.f32.partialorder %v2936, 0.0
        %vm3020 = vcmp.gt.f32.partialorder %v2965, 0.0
        %vm3021 = vcmp.gt.f32.partialorder %v2994, 0.0
        %vm3022 = vcmp.gt.f32.partialorder %v2910, 0.0
        %vm3023 = vcmp.gt.f32.partialorder %v2939, 0.0
        %vm3024 = vcmp.gt.f32.partialorder %v2968, 0.0
        %vm3025 = vcmp.gt.f32.partialorder %v2997, 0.0
        %vm3026 = vcmp.gt.f32.partialorder %v2912, 0.0
        %vm3027 = vcmp.gt.f32.partialorder %v2941, 0.0
        %vm3028 = vcmp.gt.f32.partialorder %v2970, 0.0
        %vm3029 = vcmp.gt.f32.partialorder %v2999, 0.0
        %vm3030 = vcmp.gt.f32.partialorder %v2915, 0.0
        %vm3031 = vcmp.gt.f32.partialorder %v2944, 0.0
        %vm3032 = vcmp.gt.f32.partialorder %v2973, 0.0
        %vm3033 = vcmp.gt.f32.partialorder %v3002, 0.0
        %vm3034 = vcmp.gt.f32.partialorder %v2917, 0.0
        %vm3035 = vcmp.gt.f32.partialorder %v2946, 0.0
        %vm3036 = vcmp.gt.f32.partialorder %v2975, 0.0
        %vm3037 = vcmp.gt.f32.partialorder %v3004, 0.0
        %v3038 = vmin.f32 %v2900, 0.0
        %v3039 = vmin.f32 %v2929, 0.0
        %v3040 = vmin.f32 %v2958, 0.0
        %v3041 = vmin.f32 %v2987, 0.0
        %v3042 = vmin.f32 %v2902, 0.0
        %v3043 = vmin.f32 %v2931, 0.0
        %v3044 = vmin.f32 %v2960, 0.0
        %v3045 = vmin.f32 %v2989, 0.0
        %v3046 = vmin.f32 %v2905, 0.0
        %v3047 = vmin.f32 %v2934, 0.0
        %v3048 = vmin.f32 %v2963, 0.0
        %v3049 = vmin.f32 %v2992, 0.0
        %v3050 = vmin.f32 %v2907, 0.0
        %v3051 = vmin.f32 %v2936, 0.0
        %v3052 = vmin.f32 %v2965, 0.0
        %v3053 = vmin.f32 %v2994, 0.0
        %v3054 = vmin.f32 %v2910, 0.0
        %v3055 = vmin.f32 %v2939, 0.0
        %v3056 = vmin.f32 %v2968, 0.0
        %v3057 = vmin.f32 %v2997, 0.0
        %v3058 = vmin.f32 %v2912, 0.0
        %v3059 = vmin.f32 %v2941, 0.0
        %v3060 = vmin.f32 %v2970, 0.0
        %v3061 = vmin.f32 %v2999, 0.0
        %v3062 = vmin.f32 %v2915, 0.0
        %v3063 = vmin.f32 %v2944, 0.0
        %v3064 = vmin.f32 %v2973, 0.0
        %v3065 = vmin.f32 %v3002, 0.0
        %v3066 = vmin.f32 %v2917, 0.0
        %v3067 = vmin.f32 %v2946, 0.0
        %v3068 = vmin.f32 %v2975, 0.0
        %v3069 = vmin.f32 %v3004, 0.0
        %v3070 = vmul.f32 %v3038, 1.442695
        %v3071 = vpow.pop %v3070
        %v3072 = vmul.f32 %v3039, 1.442695
        %v3073 = vpow.pop %v3072
        %v3074 = vmul.f32 %v3040, 1.442695
        %v3075 = vpow.pop %v3074
        %v3076 = vmul.f32 %v3041, 1.442695
        %v3077 = vpow.pop %v3076
        %v3078 = vmul.f32 %v3042, 1.442695
        %v3079 = vpow.pop %v3078
        %v3080 = vmul.f32 %v3043, 1.442695
        %v3081 = vpow.pop %v3080
        %v3082 = vmul.f32 %v3044, 1.442695
        %v3083 = vpow.pop %v3082
        %v3084 = vmul.f32 %v3045, 1.442695
        %v3085 = vpow.pop %v3084
        %v3086 = vmul.f32 %v3046, 1.442695
        %v3087 = vpow.pop %v3086
        %v3088 = vmul.f32 %v3047, 1.442695
        %v3089 = vpow.pop %v3088
        %v3090 = vmul.f32 %v3048, 1.442695
        %v3091 = vpow.pop %v3090
        %v3092 = vmul.f32 %v3049, 1.442695
        %v3093 = vpow.pop %v3092
        %v3094 = vmul.f32 %v3050, 1.442695
        %v3095 = vpow.pop %v3094
        %v3096 = vmul.f32 %v3051, 1.442695
        %v3097 = vpow.pop %v3096
        %v3098 = vmul.f32 %v3052, 1.442695
        %v3099 = vpow.pop %v3098
        %v3100 = vmul.f32 %v3053, 1.442695
        %v3101 = vpow.pop %v3100
        %v3102 = vmul.f32 %v3054, 1.442695
        %v3103 = vpow.pop %v3102
        %v3104 = vmul.f32 %v3055, 1.442695
        %v3105 = vpow.pop %v3104
        %v3106 = vmul.f32 %v3056, 1.442695
        %v3107 = vpow.pop %v3106
        %v3108 = vmul.f32 %v3057, 1.442695
        %v3109 = vpow.pop %v3108
        %v3110 = vmul.f32 %v3058, 1.442695
        %v3111 = vpow.pop %v3110
        %v3112 = vmul.f32 %v3059, 1.442695
        %v3113 = vpow.pop %v3112
        %v3114 = vmul.f32 %v3060, 1.442695
        %v3115 = vpow.pop %v3114
        %v3116 = vmul.f32 %v3061, 1.442695
        %v3117 = vpow.pop %v3116
        %v3118 = vmul.f32 %v3062, 1.442695
        %v3119 = vpow.pop %v3118
        %v3120 = vmul.f32 %v3063, 1.442695
        %v3121 = vpow.pop %v3120
        %v3122 = vmul.f32 %v3064, 1.442695
        %v3123 = vpow.pop %v3122
        %v3124 = vmul.f32 %v3065, 1.442695
        %v3125 = vpow.pop %v3124
        %v3126 = vmul.f32 %v3066, 1.442695
        %v3127 = vpow.pop %v3126
        %v3128 = vmul.f32 %v3067, 1.442695
        %v3129 = vpow.pop %v3128
        %v3130 = vmul.f32 %v3068, 1.442695
        %v3131 = vpow.pop %v3130
        %v3132 = vmul.f32 %v3069, 1.442695
        %v3133 = vpow.pop %v3132
        %v3134 = vsub.f32 %v3071, 1.0
        %v3135 = vsub.f32 %v3073, 1.0
        %v3136 = vsub.f32 %v3075, 1.0
        %v3137 = vsub.f32 %v3077, 1.0
        %v3138 = vsub.f32 %v3079, 1.0
        %v3139 = vsub.f32 %v3081, 1.0
        %v3140 = vsub.f32 %v3083, 1.0
        %v3141 = vsub.f32 %v3085, 1.0
        %v3142 = vsub.f32 %v3087, 1.0
        %v3143 = vsub.f32 %v3089, 1.0
        %v3144 = vsub.f32 %v3091, 1.0
        %v3145 = vsub.f32 %v3093, 1.0
        %v3146 = vsub.f32 %v3095, 1.0
        %v3147 = vsub.f32 %v3097, 1.0
        %v3148 = vsub.f32 %v3099, 1.0
        %v3149 = vsub.f32 %v3101, 1.0
        %v3150 = vsub.f32 %v3103, 1.0
        %v3151 = vsub.f32 %v3105, 1.0
        %v3152 = vsub.f32 %v3107, 1.0
        %v3153 = vsub.f32 %v3109, 1.0
        %v3154 = vsub.f32 %v3111, 1.0
        %v3155 = vsub.f32 %v3113, 1.0
        %v3156 = vsub.f32 %v3115, 1.0
        %v3157 = vsub.f32 %v3117, 1.0
        %v3158 = vsub.f32 %v3119, 1.0
        %v3159 = vsub.f32 %v3121, 1.0
        %v3160 = vsub.f32 %v3123, 1.0
        %v3161 = vsub.f32 %v3125, 1.0
        %v3162 = vsub.f32 %v3127, 1.0
        %v3163 = vsub.f32 %v3129, 1.0
        %v3164 = vsub.f32 %v3131, 1.0
        %v3165 = vsub.f32 %v3133, 1.0
        %v3166 = vsel %vm3006, %v2900, %v3134
        %v3167 = vsel %vm3007, %v2929, %v3135
        %v3168 = vsel %vm3008, %v2958, %v3136
        %v3169 = vsel %vm3009, %v2987, %v3137
        %v3170 = vsel %vm3010, %v2902, %v3138
        %v3171 = vsel %vm3011, %v2931, %v3139
        %v3172 = vsel %vm3012, %v2960, %v3140
        %v3173 = vsel %vm3013, %v2989, %v3141
        %v3174 = vsel %vm3014, %v2905, %v3142
        %v3175 = vsel %vm3015, %v2934, %v3143
        %v3176 = vsel %vm3016, %v2963, %v3144
        %v3177 = vsel %vm3017, %v2992, %v3145
        %v3178 = vsel %vm3018, %v2907, %v3146
        %v3179 = vsel %vm3019, %v2936, %v3147
        %v3180 = vsel %vm3020, %v2965, %v3148
        %v3181 = vsel %vm3021, %v2994, %v3149
        %v3182 = vsel %vm3022, %v2910, %v3150
        %v3183 = vsel %vm3023, %v2939, %v3151
        %v3184 = vsel %vm3024, %v2968, %v3152
        %v3185 = vsel %vm3025, %v2997, %v3153
        %v3186 = vsel %vm3026, %v2912, %v3154
        %v3187 = vsel %vm3027, %v2941, %v3155
        %v3188 = vsel %vm3028, %v2970, %v3156
        %v3189 = vsel %vm3029, %v2999, %v3157
        %v3190 = vsel %vm3030, %v2915, %v3158
        %v3191 = vsel %vm3031, %v2944, %v3159
        %v3192 = vsel %vm3032, %v2973, %v3160
        %v3193 = vsel %vm3033, %v3002, %v3161
        %v3194 = vsel %vm3034, %v2917, %v3162
        %v3195 = vsel %vm3035, %v2946, %v3163
        %v3196 = vsel %vm3036, %v2975, %v3164
        %v3197 = vsel %vm3037, %v3004, %v3165
        %v3198 = vpack.c.bf16 %v3170, %v3166
        %v3199 = vpack.c.bf16 %v3171, %v3167
        %v3200 = vpack.c.bf16 %v3172, %v3168
        %v3201 = vpack.c.bf16 %v3173, %v3169
        %v3202 = vpack.c.bf16 %v3178, %v3174
        %v3203 = vpack.c.bf16 %v3179, %v3175
        %v3204 = vpack.c.bf16 %v3180, %v3176
        %v3205 = vpack.c.bf16 %v3181, %v3177
        %v3206 = vpack.c.bf16 %v3186, %v3182
        %v3207 = vpack.c.bf16 %v3187, %v3183
        %v3208 = vpack.c.bf16 %v3188, %v3184
        %v3209 = vpack.c.bf16 %v3189, %v3185
        %v3210 = vpack.c.bf16 %v3194, %v3190
        %v3211 = vpack.c.bf16 %v3195, %v3191
        %v3212 = vpack.c.bf16 %v3196, %v3192
        %v3213 = vpack.c.bf16 %v3197, %v3193
        %v3214 = vld [vmem:[#allocation19] sm:$0xf]
        %v3215 = vld [vmem:[#allocation19 + $0x4] sm:$0xf]
        %v3216 = vld [vmem:[#allocation19 + $0x8] sm:$0xf]
        %v3217 = vld [vmem:[#allocation19 + $0xc] sm:$0xf]
        %v3218 = vld [vmem:[#allocation19 + $0x10] sm:$0xf]
        %v3219 = vld [vmem:[#allocation19 + $0x14] sm:$0xf]
        %v3220 = vld [vmem:[#allocation19 + $0x18] sm:$0xf]
        %v3221 = vld [vmem:[#allocation19 + $0x1c] sm:$0xf]
        %v3222 = vld [vmem:[#allocation19 + $0x20] sm:$0xf]
        %v3223 = vld [vmem:[#allocation19 + $0x24] sm:$0xf]
        %v3224 = vld [vmem:[#allocation19 + $0x28] sm:$0xf]
        %v3225 = vld [vmem:[#allocation19 + $0x2c] sm:$0xf]
        %v3226 = vld [vmem:[#allocation19 + $0x30] sm:$0xf]
        %v3227 = vld [vmem:[#allocation19 + $0x34] sm:$0xf]
        %v3228 = vld [vmem:[#allocation19 + $0x38] sm:$0xf]
        %v3229 = vld [vmem:[#allocation19 + $0x3c] sm:$0xf]
        %v3230 = vld [vmem:[#allocation19 + $0x40] sm:$0xf]
        %v3231 = vld [vmem:[#allocation19 + $0x44] sm:$0xf]
        %v3232 = vld [vmem:[#allocation19 + $0x48] sm:$0xf]
        %v3233 = vld [vmem:[#allocation19 + $0x4c] sm:$0xf]
        %v3234 = vld [vmem:[#allocation19 + $0x50] sm:$0xf]
        %v3235 = vld [vmem:[#allocation19 + $0x54] sm:$0xf]
        %v3236 = vld [vmem:[#allocation19 + $0x58] sm:$0xf]
        %v3237 = vld [vmem:[#allocation19 + $0x5c] sm:$0xf]
        %v3238 = vld [vmem:[#allocation19 + $0x60] sm:$0xf]
        %v3239 = vld [vmem:[#allocation19 + $0x64] sm:$0xf]
        %v3240 = vld [vmem:[#allocation19 + $0x68] sm:$0xf]
        %v3241 = vld [vmem:[#allocation19 + $0x6c] sm:$0xf]
        %v3242 = vld [vmem:[#allocation19 + $0x70] sm:$0xf]
        %v3243 = vld [vmem:[#allocation19 + $0x74] sm:$0xf]
        %v3244 = vld [vmem:[#allocation19 + $0x78] sm:$0xf]
        %v3245 = vld [vmem:[#allocation19 + $0x7c] sm:$0xf]
        %v3246 = vld [vmem:[#allocation19 + $0x80] sm:$0xf]
        %v3247 = vld [vmem:[#allocation19 + $0x84] sm:$0xf]
        %v3248 = vld [vmem:[#allocation19 + $0x88] sm:$0xf]
        %v3249 = vld [vmem:[#allocation19 + $0x8c] sm:$0xf]
        %v3250 = vld [vmem:[#allocation19 + $0x90] sm:$0xf]
        %v3251 = vld [vmem:[#allocation19 + $0x94] sm:$0xf]
        %v3252 = vld [vmem:[#allocation19 + $0x98] sm:$0xf]
        %v3253 = vld [vmem:[#allocation19 + $0x9c] sm:$0xf]
        %v3254 = vld [vmem:[#allocation19 + $0xa0] sm:$0xf]
        %v3255 = vld [vmem:[#allocation19 + $0xa4] sm:$0xf]
        %v3256 = vld [vmem:[#allocation19 + $0xa8] sm:$0xf]
        %v3257 = vld [vmem:[#allocation19 + $0xac] sm:$0xf]
        %v3258 = vld [vmem:[#allocation19 + $0xb0] sm:$0xf]
        %v3259 = vld [vmem:[#allocation19 + $0xb4] sm:$0xf]
        %v3260 = vld [vmem:[#allocation19 + $0xb8] sm:$0xf]
        %v3261 = vld [vmem:[#allocation19 + $0xbc] sm:$0xf]
        %v3262 = vld [vmem:[#allocation19 + $0xc0] sm:$0xf]
        %v3263 = vld [vmem:[#allocation19 + $0xc4] sm:$0xf]
        %v3264 = vld [vmem:[#allocation19 + $0xc8] sm:$0xf]
        %v3265 = vld [vmem:[#allocation19 + $0xcc] sm:$0xf]
        %v3266 = vld [vmem:[#allocation19 + $0xd0] sm:$0xf]
        %v3267 = vld [vmem:[#allocation19 + $0xd4] sm:$0xf]
        %v3268 = vld [vmem:[#allocation19 + $0xd8] sm:$0xf]
        %v3269 = vld [vmem:[#allocation19 + $0xdc] sm:$0xf]
        %v3270 = vld [vmem:[#allocation19 + $0xe0] sm:$0xf]
        %v3271 = vld [vmem:[#allocation19 + $0xe4] sm:$0xf]
        %v3272 = vld [vmem:[#allocation19 + $0xe8] sm:$0xf]
        %v3273 = vld [vmem:[#allocation19 + $0xec] sm:$0xf]
        %v3274 = vld [vmem:[#allocation19 + $0xf0] sm:$0xf]
        %v3275 = vld [vmem:[#allocation19 + $0xf4] sm:$0xf]
        %v3276 = vld [vmem:[#allocation19 + $0xf8] sm:$0xf]
        %v3277 = vld [vmem:[#allocation19 + $0xfc] sm:$0xf]
        %v3278 = vld [vmem:[%s13] sm:$0x1]
        %v3280 = vperm.slane %v3278, 0
        %v3346 = vunpack.c.l.b16 %v3214
        %v3347 = vunpack.c.l.b16 %v3215
        %v3348 = vunpack.c.l.b16 %v3216
        %v3349 = vunpack.c.l.b16 %v3217
        %v3350 = vunpack.c.l.b16 %v3218
        %v3351 = vunpack.c.l.b16 %v3219
        %v3352 = vunpack.c.l.b16 %v3220
        %v3353 = vunpack.c.l.b16 %v3221
        %v3354 = vunpack.c.l.b16 %v3222
        %v3355 = vunpack.c.l.b16 %v3223
        %v3356 = vunpack.c.l.b16 %v3224
        %v3357 = vunpack.c.l.b16 %v3225
        %v3358 = vunpack.c.l.b16 %v3226
        %v3359 = vunpack.c.l.b16 %v3227
        %v3360 = vunpack.c.l.b16 %v3228
        %v3361 = vunpack.c.l.b16 %v3229
        %v3362 = vunpack.c.l.b16 %v3230
        %v3363 = vunpack.c.l.b16 %v3231
        %v3364 = vunpack.c.l.b16 %v3232
        %v3365 = vunpack.c.l.b16 %v3233
        %v3366 = vunpack.c.l.b16 %v3234
        %v3367 = vunpack.c.l.b16 %v3235
        %v3368 = vunpack.c.l.b16 %v3236
        %v3369 = vunpack.c.l.b16 %v3237
        %v3370 = vunpack.c.l.b16 %v3238
        %v3371 = vunpack.c.l.b16 %v3239
        %v3372 = vunpack.c.l.b16 %v3240
        %v3373 = vunpack.c.l.b16 %v3241
        %v3374 = vunpack.c.l.b16 %v3242
        %v3375 = vunpack.c.l.b16 %v3243
        %v3376 = vunpack.c.l.b16 %v3244
        %v3377 = vunpack.c.l.b16 %v3245
        %v3378 = vunpack.c.l.b16 %v3246
        %v3379 = vunpack.c.l.b16 %v3247
        %v3380 = vunpack.c.l.b16 %v3248
        %v3381 = vunpack.c.l.b16 %v3249
        %v3382 = vunpack.c.l.b16 %v3250
        %v3383 = vunpack.c.l.b16 %v3251
        %v3384 = vunpack.c.l.b16 %v3252
        %v3385 = vunpack.c.l.b16 %v3253
        %v3386 = vunpack.c.l.b16 %v3254
        %v3387 = vunpack.c.l.b16 %v3255
        %v3388 = vunpack.c.l.b16 %v3256
        %v3389 = vunpack.c.l.b16 %v3257
        %v3390 = vunpack.c.l.b16 %v3258
        %v3391 = vunpack.c.l.b16 %v3259
        %v3392 = vunpack.c.l.b16 %v3260
        %v3393 = vunpack.c.l.b16 %v3261
        %v3394 = vunpack.c.l.b16 %v3262
        %v3395 = vunpack.c.l.b16 %v3263
        %v3396 = vunpack.c.l.b16 %v3264
        %v3397 = vunpack.c.l.b16 %v3265
        %v3398 = vunpack.c.l.b16 %v3266
        %v3399 = vunpack.c.l.b16 %v3267
        %v3400 = vunpack.c.l.b16 %v3268
        %v3401 = vunpack.c.l.b16 %v3269
        %v3402 = vunpack.c.l.b16 %v3270
        %v3403 = vunpack.c.l.b16 %v3271
        %v3404 = vunpack.c.l.b16 %v3272
        %v3405 = vunpack.c.l.b16 %v3273
        %v3406 = vunpack.c.l.b16 %v3274
        %v3407 = vunpack.c.l.b16 %v3275
        %v3408 = vunpack.c.l.b16 %v3276
        %v3409 = vunpack.c.l.b16 %v3277
        %v3410 = vpack.c.b16 %v3347, %v3346
        %v3411 = vpack.c.b16 %v3349, %v3348
        %v3412 = vpack.c.b16 %v3351, %v3350
        %v3413 = vpack.c.b16 %v3353, %v3352
        %v3414 = vpack.c.b16 %v3355, %v3354
        %v3415 = vpack.c.b16 %v3357, %v3356
        %v3416 = vpack.c.b16 %v3359, %v3358
        %v3417 = vpack.c.b16 %v3361, %v3360
        %v3418 = vpack.c.b16 %v3363, %v3362
        %v3419 = vpack.c.b16 %v3365, %v3364
        %v3420 = vpack.c.b16 %v3367, %v3366
        %v3421 = vpack.c.b16 %v3369, %v3368
        %v3422 = vpack.c.b16 %v3371, %v3370
        %v3423 = vpack.c.b16 %v3373, %v3372
        %v3424 = vpack.c.b16 %v3375, %v3374
        %v3425 = vpack.c.b16 %v3377, %v3376
        %v3426 = vpack.c.b16 %v3379, %v3378
        %v3427 = vpack.c.b16 %v3381, %v3380
        %v3428 = vpack.c.b16 %v3383, %v3382
        %v3429 = vpack.c.b16 %v3385, %v3384
        %v3430 = vpack.c.b16 %v3387, %v3386
        %v3431 = vpack.c.b16 %v3389, %v3388
        %v3432 = vpack.c.b16 %v3391, %v3390
        %v3433 = vpack.c.b16 %v3393, %v3392
        %v3434 = vpack.c.b16 %v3395, %v3394
        %v3435 = vpack.c.b16 %v3397, %v3396
        %v3436 = vpack.c.b16 %v3399, %v3398
        %v3437 = vpack.c.b16 %v3401, %v3400
        %v3438 = vpack.c.b16 %v3403, %v3402
        %v3439 = vpack.c.b16 %v3405, %v3404
        %v3440 = vpack.c.b16 %v3407, %v3406
        %v3441 = vpack.c.b16 %v3409, %v3408
        %3474 = vmatpush.bf16.msra.mxu0 %v3417
        %3475 = vmatpush.bf16.msra.mxu0 %v3416
        %3476 = vmatpush.bf16.msra.mxu0 %v3415
        %3477 = vmatpush.bf16.msra.mxu0 %v3414
        %3478 = vmatpush.bf16.msra.mxu0 %v3413
        %3479 = vmatpush.bf16.msra.mxu0 %v3412
        %3480 = vmatpush.bf16.msra.mxu0 %v3411
        %3481 = vmatpush.bf16.msra.mxu0 %v3410
        %3482 = vmatmul.bf16.gmra.mxu0 %v3198
        %v3483 = vpop.f32.mrf.mxu0
        %v3484 = vadd.f32 %v3280, %v3483
        %v3485 = vpop.f32.mrf.mxu0
        %v3486 = vadd.f32 %v3280, %v3485
        %3487 = vmatmul.bf16.gmra.mxu0 %v3202
        %v3488 = vpop.f32.mrf.mxu0
        %v3489 = vadd.f32 %v3280, %v3488
        %v3490 = vpop.f32.mrf.mxu0
        %v3491 = vadd.f32 %v3280, %v3490
        %3492 = vmatmul.bf16.gmra.mxu0 %v3206
        %v3493 = vpop.f32.mrf.mxu0
        %v3494 = vadd.f32 %v3280, %v3493
        %v3495 = vpop.f32.mrf.mxu0
        %v3496 = vadd.f32 %v3280, %v3495
        %3497 = vmatmul.bf16.gmra.mxu0 %v3210
        %v3498 = vpop.f32.mrf.mxu0
        %v3499 = vadd.f32 %v3280, %v3498
        %v3500 = vpop.f32.mrf.mxu0
        %v3501 = vadd.f32 %v3280, %v3500
        %3502 = vdwg.mxu0
        %3503 = vmatpush.bf16.msra.mxu0 %v3425
        %3504 = vmatpush.bf16.msra.mxu0 %v3424
        %3505 = vmatpush.bf16.msra.mxu0 %v3423
        %3506 = vmatpush.bf16.msra.mxu0 %v3422
        %3507 = vmatpush.bf16.msra.mxu0 %v3421
        %3508 = vmatpush.bf16.msra.mxu0 %v3420
        %3509 = vmatpush.bf16.msra.mxu0 %v3419
        %3510 = vmatpush.bf16.msra.mxu0 %v3418
        %3511 = vmatmul.bf16.gmra.mxu0 %v3199
        %v3512 = vpop.f32.mrf.mxu0
        %v3513 = vadd.f32 %v3484, %v3512
        %v3514 = vpop.f32.mrf.mxu0
        %v3515 = vadd.f32 %v3486, %v3514
        %3516 = vmatmul.bf16.gmra.mxu0 %v3203
        %v3517 = vpop.f32.mrf.mxu0
        %v3518 = vadd.f32 %v3489, %v3517
        %v3519 = vpop.f32.mrf.mxu0
        %v3520 = vadd.f32 %v3491, %v3519
        %3521 = vmatmul.bf16.gmra.mxu0 %v3207
        %v3522 = vpop.f32.mrf.mxu0
        %v3523 = vadd.f32 %v3494, %v3522
        %v3524 = vpop.f32.mrf.mxu0
        %v3525 = vadd.f32 %v3496, %v3524
        %3526 = vmatmul.bf16.gmra.mxu0 %v3211
        %v3527 = vpop.f32.mrf.mxu0
        %v3528 = vadd.f32 %v3499, %v3527
        %v3529 = vpop.f32.mrf.mxu0
        %v3530 = vadd.f32 %v3501, %v3529
        %3531 = vdwg.mxu0
        %3532 = vmatpush.bf16.msra.mxu0 %v3433
        %3533 = vmatpush.bf16.msra.mxu0 %v3432
        %3534 = vmatpush.bf16.msra.mxu0 %v3431
        %3535 = vmatpush.bf16.msra.mxu0 %v3430
        %3536 = vmatpush.bf16.msra.mxu0 %v3429
        %3537 = vmatpush.bf16.msra.mxu0 %v3428
        %3538 = vmatpush.bf16.msra.mxu0 %v3427
        %3539 = vmatpush.bf16.msra.mxu0 %v3426
        %3540 = vmatmul.bf16.gmra.mxu0 %v3200
        %v3541 = vpop.f32.mrf.mxu0
        %v3542 = vadd.f32 %v3513, %v3541
        %v3543 = vpop.f32.mrf.mxu0
        %v3544 = vadd.f32 %v3515, %v3543
        %3545 = vmatmul.bf16.gmra.mxu0 %v3204
        %v3546 = vpop.f32.mrf.mxu0
        %v3547 = vadd.f32 %v3518, %v3546
        %v3548 = vpop.f32.mrf.mxu0
        %v3549 = vadd.f32 %v3520, %v3548
        %3550 = vmatmul.bf16.gmra.mxu0 %v3208
        %v3551 = vpop.f32.mrf.mxu0
        %v3552 = vadd.f32 %v3523, %v3551
        %v3553 = vpop.f32.mrf.mxu0
        %v3554 = vadd.f32 %v3525, %v3553
        %3555 = vmatmul.bf16.gmra.mxu0 %v3212
        %v3556 = vpop.f32.mrf.mxu0
        %v3557 = vadd.f32 %v3528, %v3556
        %v3558 = vpop.f32.mrf.mxu0
        %v3559 = vadd.f32 %v3530, %v3558
        %3560 = vdwg.mxu0
        %3561 = vmatpush.bf16.msra.mxu0 %v3441
        %3562 = vmatpush.bf16.msra.mxu0 %v3440
        %3563 = vmatpush.bf16.msra.mxu0 %v3439
        %3564 = vmatpush.bf16.msra.mxu0 %v3438
        %3565 = vmatpush.bf16.msra.mxu0 %v3437
        %3566 = vmatpush.bf16.msra.mxu0 %v3436
        %3567 = vmatpush.bf16.msra.mxu0 %v3435
        %3568 = vmatpush.bf16.msra.mxu0 %v3434
        %3569 = vmatmul.bf16.gmra.mxu0 %v3201
        %v3570 = vpop.f32.mrf.mxu0
        %v3571 = vadd.f32 %v3542, %v3570
        %v3572 = vpop.f32.mrf.mxu0
        %v3573 = vadd.f32 %v3544, %v3572
        %3574 = vmatmul.bf16.gmra.mxu0 %v3205
        %v3575 = vpop.f32.mrf.mxu0
        %v3576 = vadd.f32 %v3547, %v3575
        %v3577 = vpop.f32.mrf.mxu0
        %v3578 = vadd.f32 %v3549, %v3577
        %3579 = vmatmul.bf16.gmra.mxu0 %v3209
        %v3580 = vpop.f32.mrf.mxu0
        %v3581 = vadd.f32 %v3552, %v3580
        %v3582 = vpop.f32.mrf.mxu0
        %v3583 = vadd.f32 %v3554, %v3582
        %3584 = vmatmul.bf16.gmra.mxu0 %v3213
        %v3585 = vpop.f32.mrf.mxu0
        %v3586 = vadd.f32 %v3557, %v3585
        %v3587 = vpop.f32.mrf.mxu0
        %v3588 = vadd.f32 %v3559, %v3587
        %3589 = vdwg.mxu0
        %v3590 = vadd.f32 %v2492, %v3571
        %v3591 = vadd.f32 %v2493, %v3573
        %v3592 = vadd.f32 %v2494, %v3576
        %v3593 = vadd.f32 %v2495, %v3578
        %v3594 = vadd.f32 %v2496, %v3581
        %v3595 = vadd.f32 %v2497, %v3583
        %v3596 = vadd.f32 %v2498, %v3586
        %v3597 = vadd.f32 %v2499, %v3588
        %3598 = vst [vmem:[%s593] sm:$0xff] %v3590
        %3599 = vst [vmem:[%s593 + $0x8] sm:$0xff] %v3591
        %3600 = vst [vmem:[%s593 + $0x10] sm:$0xff] %v3592
        %3601 = vst [vmem:[%s593 + $0x18] sm:$0xff] %v3593
        %3602 = vst [vmem:[%s593 + $0x20] sm:$0xff] %v3594
        %3603 = vst [vmem:[%s593 + $0x28] sm:$0xff] %v3595
        %3604 = vst [vmem:[%s593 + $0x30] sm:$0xff] %v3596
        %3605 = vst [vmem:[%s593 + $0x38] sm:$0xff] %v3597
        %s3606 = sand.u32 %s329, 1
        %s3607 = scalar_lea.sflag [#allocation7], %s3606
        %s3608 = sand.u32 %s329, 1
        %s3609 = smul.addr %s3608, 64
        %s3610 = scalar_lea.vmem [#allocation20], %s3609
        // Predicated region
        $region109: #{tpu_custom_call.1} parent=71 // pred_check
          %p3611 = pneg %p339
        $region110: #{tpu_custom_call.1} parent=71 // pred_check_branch
          %3613 = sbr.rel (%p3611) target = $region112
        $region111: #{tpu_custom_call.1} parent=71 // pred_region
          %s3614 = smul.u32 8, %s43
          %3616 = vsyncadd %s3607, 0
          %s3617 = smul.addr %s3614, 8
          %s3618 = scalar_lea.hbm %s14, %s3617
          %s3619 = sshll.u32 %s3610, 4
          %s3620 = int_to_ptr.vmem [resolvable:$true] %s3619
          %s3621 = sshll.u32 %s3618, 4
          %s3622 = int_to_ptr.hbm [resolvable:$true] %s3621
          %3627 = dma.vmem_to_hbm [thread:$0]  %s3620, 1024, %s3622, %s3607, 128, 128, 8
        $region112: #{tpu_custom_call.1} parent=71 // pred_fallthru
          _
      $region72: #{tpu_custom_call.1} parent=5 // pred_fallthru
        _
      %p3628 = scmp.le.s32.totalorder 2, %s38
      // Predicated region
      $region113: #{tpu_custom_call.1} parent=5 // pred_check
        %p3629 = pneg %p3628
      $region114: #{tpu_custom_call.1} parent=5 // pred_check_branch
        %3631 = sbr.rel (%p3629) target = $region116
      $region115: #{tpu_custom_call.1} parent=5 // pred_region
        %s3632 = ssub.s32 %s38, 2
        // Predicated region
        $region117: #{tpu_custom_call.1} parent=115 // pred_check
          %p3633 = pneg %p345
        $region118: #{tpu_custom_call.1} parent=115 // pred_check_branch
          %3635 = sbr.rel (%p3633) target = $region120
        $region119: #{tpu_custom_call.1} parent=115 // pred_region
          %s3636 = sand.u32 %s330, 1
          %s3637 = scalar_lea.sflag [#allocation7], %s3636
          %s3638 = sand.u32 %s330, 1
          %s3639 = smul.addr %s3638, 64
          %s3640 = scalar_lea.vmem [#allocation20], %s3639
          %3642 = dma.done %s3637, 1024
        $region120: #{tpu_custom_call.1} parent=115 // pred_fallthru
          _
      $region116: #{tpu_custom_call.1} parent=5 // pred_fallthru
        _
    $region6: #{tpu_custom_call.1} parent=1 // loop_footer
      %s42 = sadd.s32 1, %s38
    $region7: #{tpu_custom_call.1} parent=1 // loop_footer_branch
      %37 = sbr.rel target = $region3
    $region8: #{tpu_custom_call.1} parent=1 // loop_exit
      _
    %3643 = vsyncpa [#allocation6], 1
    %s3644 = scalar_lea.sflag [#allocation6], 1
    %3645 = vsyncpa %s3644, 1
    %3646 = vsyncpa [#allocation9], 1
    %3647 = vsyncpa [#allocation12], 1
    %3648 = vsyncpa [#allocation15], 1
    %3649 = vsyncpa [#allocation18], 1
    %3650 = vsyncpa [#allocation7], 1
    %s3651 = scalar_lea.sflag [#allocation7], 1
    %3652 = vsyncpa %s3651, 1

</llo_original>
